<compile_context>
chip_gen: v6e
topology: v6e:2x2x1
jax: 0.10.0
libtpu: 0.0.40
codegen_flags: <defaults>
</compile_context>

<pallas_src>
import jax
import jax.numpy as jnp
from jax.experimental import pallas as pl
from jax.experimental.pallas import tpu as pltpu

LANE = 128


def _upsample1d_kernel(x_ref, w_ref, b_ref, lh_ref, rh_ref, even_ref, odd_ref):
    # x_ref:   (Bt, C, Lt)    input tile (sequence padded to multiple of 128)
    # w_ref:   (4, C, C)      [W1^T, W2^T, W3^T, W0^T], f32
    # b_ref:   (C, 1)         bias, f32
    # lh_ref:  (1, Bt, C, 1)  x[:, :, tile_start - 1]  (0 at sequence start)
    # rh_ref:  (1, Bt, C, 1)  x[:, :, tile_end]        (0 at sequence end)
    # even_ref/odd_ref: (Bt, C, Lt)  outputs at positions 2j / 2j+1
    bt, c, lt = x_ref.shape
    w1t = w_ref[0]
    w2t = w_ref[1]
    w3t = w_ref[2]
    w0t = w_ref[3]
    bias = b_ref[...]  # (C, 1) -> broadcasts along lanes
    lane = jax.lax.broadcasted_iota(jnp.int32, (c, lt), 1)
    hi = jax.lax.Precision.HIGHEST

    for i in range(bt):  # static unroll, Bt <= 8
        xb = x_ref[i].astype(jnp.float32)            # (C, Lt)
        lcol = lh_ref[0, i].astype(jnp.float32)      # (C, 1)
        rcol = rh_ref[0, i].astype(jnp.float32)      # (C, 1)
        # x shifted one step right/left along the sequence (lane) axis;
        # boundary lane filled from the halo column (cheap XLU roll + select).
        x_prev = jnp.where(lane == 0, lcol, pltpu.roll(xb, shift=1, axis=1))
        x_next = jnp.where(lane == lt - 1, rcol,
                           pltpu.roll(xb, shift=lt - 1, axis=1))
        ev = (jnp.dot(w1t, xb, precision=hi, preferred_element_type=jnp.float32)
              + jnp.dot(w3t, x_prev, precision=hi,
                        preferred_element_type=jnp.float32)
              + bias)
        od = (jnp.dot(w2t, xb, precision=hi, preferred_element_type=jnp.float32)
              + jnp.dot(w0t, x_next, precision=hi,
                        preferred_element_type=jnp.float32)
              + bias)
        even_ref[i] = ev.astype(even_ref.dtype)
        odd_ref[i] = od.astype(odd_ref.dtype)


def upsample1d(x, weight, bias):
    """Forward of Upsample1d: ConvTranspose1d(dim, dim, 4, 2, 1).

    x: (B, C, L); weight: (C_in, C_out, 4) (torch layout); bias: (C_out,).
    Returns (B, C, 2*L).
    """
    B, C, L = x.shape
    assert weight.shape == (C, C, 4) and bias.shape == (C,)

    # ---- tile sizing: lane-dense, ~1-2 MiB blocks, bounded VMEM ----
    Lp = ((L + LANE - 1) // LANE) * LANE          # pad sequence to 128-multiple
    n128 = Lp // LANE
    MAX_BLOCK = 2 * 1024 * 1024                   # per-batch-row x block bytes
    TARGET = 1 * 1024 * 1024
    d = 1
    for cand in range(1, n128 + 1):               # largest divisor that fits
        if n128 % cand == 0 and C * LANE * cand * 4 <= MAX_BLOCK:
            d = cand
    Lt = LANE * d
    nL = Lp // Lt
    blk = C * Lt * 4
    Bt = 1
    if blk < TARGET:                              # fold batch rows into block
        want = min(8, max(1, TARGET // blk))
        for cand in range(1, B + 1):
            if B % cand == 0 and cand <= want:
                Bt = cand
    grid = (B // Bt, nL)

    # ---- padded input + per-tile halo columns (tiny) ----
    xp = x if Lp == L else jnp.pad(x, ((0, 0), (0, 0), (0, Lp - L)))
    zcol = jnp.zeros((B, C, 1), dtype=xp.dtype)
    if nL > 1:
        lcols = xp[:, :, Lt - 1::Lt][:, :, : nL - 1]     # x[:, :, s*Lt - 1]
        left = jnp.concatenate([zcol, lcols], axis=2)    # (B, C, nL)
        rcols = xp[:, :, Lt::Lt]                         # x[:, :, (s+1)*Lt]
        right = jnp.concatenate([rcols, zcol], axis=2)   # (B, C, nL)
    else:
        left = zcol
        right = zcol
    left = jnp.moveaxis(left, 2, 0)[..., None]           # (nL, B, C, 1)
    right = jnp.moveaxis(right, 2, 0)[..., None]         # (nL, B, C, 1)

    # ---- weights: (4, C_out, C_in) = [W1^T, W2^T, W3^T, W0^T] ----
    w = weight.astype(jnp.float32)
    wT = jnp.stack([w[:, :, 1].T, w[:, :, 2].T, w[:, :, 3].T, w[:, :, 0].T],
                   axis=0)
    b2 = bias.astype(jnp.float32).reshape(C, 1)

    blk_bytes = Bt * C * Lt * 4
    w_bytes = 4 * C * C * 4
    vmem_est = 6 * blk_bytes + 2 * w_bytes + 8 * Bt * C * 4 + 2 * C * 4 + (4 << 20)
    vmem_limit = min(max(32 << 20, vmem_est), 64 << 20)

    even, odd = pl.pallas_call(
        _upsample1d_kernel,
        out_shape=[
            jax.ShapeDtypeStruct((B, C, Lp), x.dtype),
            jax.ShapeDtypeStruct((B, C, Lp), x.dtype),
        ],
        grid_spec=pltpu.PrefetchScalarGridSpec(
            num_scalar_prefetch=0,
            grid=grid,
            in_specs=[
                pl.BlockSpec((Bt, C, Lt), lambda b, l: (b, 0, l)),   # x
                pl.BlockSpec((4, C, C), lambda b, l: (0, 0, 0)),     # weights
                pl.BlockSpec((C, 1), lambda b, l: (0, 0)),           # bias
                pl.BlockSpec((1, Bt, C, 1), lambda b, l: (l, b, 0, 0)),  # left halo
                pl.BlockSpec((1, Bt, C, 1), lambda b, l: (l, b, 0, 0)),  # right halo
            ],
            out_specs=[
                pl.BlockSpec((Bt, C, Lt), lambda b, l: (b, 0, l)),
                pl.BlockSpec((Bt, C, Lt), lambda b, l: (b, 0, l)),
            ],
        ),
        compiler_params=pltpu.CompilerParams(
            dimension_semantics=("parallel", "parallel"),
            vmem_limit_bytes=vmem_limit,
        ),
    )(xp, wT, b2, left, right)

    # Riffle the two phases back into the sequence axis and crop the pad.
    # TODO(synk): fold this stride-2 lane interleave into the kernel once a
    # strided lane store is reliably supported; today it is one small XLA
    # fusion over the output.
    out = jnp.stack([even, odd], axis=-1).reshape(B, C, 2 * Lp)
    return out[:, :, : 2 * L]


if __name__ == "__main__":
    key = jax.random.PRNGKey(0)
    kx, kw, kb = jax.random.split(key, 3)
    B, C, L = 2, 8, 16
    x = jax.random.normal(kx, (B, C, L), dtype=jnp.float32)
    # ConvTranspose1d(dim, dim, 4, 2, 1) parameters (torch layout (C_in, C_out, K)).
    scale = 1.0 / (C * 4) ** 0.5
    weight = scale * jax.random.normal(kw, (C, C, 4), dtype=jnp.float32)
    bias = scale * jax.random.normal(kb, (C,), dtype=jnp.float32)

    out = upsample1d(x, weight, bias)
    jax.block_until_ready(out)
    assert out.shape == (B, C, 2 * L)

    # Independent reference: literal transposed-conv scatter definition,
    # full output length (L-1)*2 + 4, then crop `padding` from each side.
    ref_full = jnp.zeros((B, C, 2 * L + 2), dtype=jnp.float32)
    for i in range(L):
        contrib = jnp.einsum("bc,cok->bok", x[:, :, i], weight)  # (B, C_out, 4)
        ref_full = ref_full.at[:, :, 2 * i: 2 * i + 4].add(contrib)
    ref = ref_full[:, :, 1: 2 * L + 1] + bias[None, :, None]

    max_err = float(jnp.max(jnp.abs(out - ref)))
    assert jnp.allclose(out, ref, atol=1e-3, rtol=1e-3), max_err

    print("KERNEL_OK")
</pallas_src>

<mosaic_0001>
module attributes {stable_mosaic.version = 11 : i64} {
  func.func @_upsample1d_kernel(%arg0: i32, %arg1: i32, %arg2: memref<2x8x128xf32, #tpu.memory_space<vmem>>, %arg3: memref<4x8x8xf32, #tpu.memory_space<vmem>>, %arg4: memref<8x1xf32, #tpu.memory_space<vmem>>, %arg5: memref<1x2x8x1xf32, #tpu.memory_space<vmem>>, %arg6: memref<1x2x8x1xf32, #tpu.memory_space<vmem>>, %arg7: memref<2x8x128xf32, #tpu.memory_space<vmem>>, %arg8: memref<2x8x128xf32, #tpu.memory_space<vmem>>) attributes {dimension_semantics = [#tpu.dimension_semantics<parallel>, #tpu.dimension_semantics<parallel>], iteration_bounds = array<i64: 1, 1>, scalar_prefetch = 0 : i64, scratch_operands = 0 : i64, tpu.core_type = #tpu.core_type<tc>, window_params = [{transform_indices = @transform_0, window_bounds = array<i64: 2, 8, 128>}, {pipeline_mode = #tpu.pipeline_mode<synchronous>, transform_indices = @transform_1, window_bounds = array<i64: 4, 8, 8>}, {pipeline_mode = #tpu.pipeline_mode<synchronous>, transform_indices = @transform_2, window_bounds = array<i64: 8, 1>}, {transform_indices = @transform_3, window_bounds = array<i64: 1, 2, 8, 1>}, {transform_indices = @transform_4, window_bounds = array<i64: 1, 2, 8, 1>}, {transform_indices = @transform_5, window_bounds = array<i64: 2, 8, 128>}, {transform_indices = @transform_6, window_bounds = array<i64: 2, 8, 128>}]} {
    %c0 = arith.constant 0 : index
    %c0_0 = arith.constant 0 : index
    %c0_1 = arith.constant 0 : index
    %0 = vector.load %arg3[%c0, %c0_0, %c0_1] : memref<4x8x8xf32, #tpu.memory_space<vmem>>, vector<1x8x8xf32>
    %1 = vector.shape_cast %0 : vector<1x8x8xf32> to vector<8x8xf32>
    %c1 = arith.constant 1 : index
    %c0_2 = arith.constant 0 : index
    %c0_3 = arith.constant 0 : index
    %2 = vector.load %arg3[%c1, %c0_2, %c0_3] : memref<4x8x8xf32, #tpu.memory_space<vmem>>, vector<1x8x8xf32>
    %3 = vector.shape_cast %2 : vector<1x8x8xf32> to vector<8x8xf32>
    %c2 = arith.constant 2 : index
    %c0_4 = arith.constant 0 : index
    %c0_5 = arith.constant 0 : index
    %4 = vector.load %arg3[%c2, %c0_4, %c0_5] : memref<4x8x8xf32, #tpu.memory_space<vmem>>, vector<1x8x8xf32>
    %5 = vector.shape_cast %4 : vector<1x8x8xf32> to vector<8x8xf32>
    %c3 = arith.constant 3 : index
    %c0_6 = arith.constant 0 : index
    %c0_7 = arith.constant 0 : index
    %6 = vector.load %arg3[%c3, %c0_6, %c0_7] : memref<4x8x8xf32, #tpu.memory_space<vmem>>, vector<1x8x8xf32>
    %7 = vector.shape_cast %6 : vector<1x8x8xf32> to vector<8x8xf32>
    %c0_8 = arith.constant 0 : index
    %c0_9 = arith.constant 0 : index
    %8 = vector.load %arg4[%c0_8, %c0_9] : memref<8x1xf32, #tpu.memory_space<vmem>>, vector<8x1xf32>
    %9 = tpu.iota {dimensions = array<i32: 1>} : vector<8x128xi32>
    %c0_10 = arith.constant 0 : index
    %c0_11 = arith.constant 0 : index
    %c0_12 = arith.constant 0 : index
    %10 = vector.load %arg2[%c0_10, %c0_11, %c0_12] : memref<2x8x128xf32, #tpu.memory_space<vmem>>, vector<1x8x128xf32>
    %11 = vector.shape_cast %10 : vector<1x8x128xf32> to vector<8x128xf32>
    %c0_13 = arith.constant 0 : index
    %c0_14 = arith.constant 0 : index
    %c0_15 = arith.constant 0 : index
    %c0_16 = arith.constant 0 : index
    %12 = vector.load %arg5[%c0_13, %c0_14, %c0_15, %c0_16] : memref<1x2x8x1xf32, #tpu.memory_space<vmem>>, vector<1x1x8x1xf32>
    %13 = vector.shape_cast %12 : vector<1x1x8x1xf32> to vector<8x1xf32>
    %c0_17 = arith.constant 0 : index
    %c0_18 = arith.constant 0 : index
    %c0_19 = arith.constant 0 : index
    %c0_20 = arith.constant 0 : index
    %14 = vector.load %arg6[%c0_17, %c0_18, %c0_19, %c0_20] : memref<1x2x8x1xf32, #tpu.memory_space<vmem>>, vector<1x1x8x1xf32>
    %15 = vector.shape_cast %14 : vector<1x1x8x1xf32> to vector<8x1xf32>
    %c0_i32 = arith.constant 0 : i32
    %16 = vector.broadcast %c0_i32 : i32 to vector<8x128xi32>
    %17 = arith.cmpi eq, %9, %16 : vector<8x128xi32>
    %c1_i32 = arith.constant 1 : i32
    %18 = tpu.dynamic_rotate %11 by %c1_i32 dim 1 : vector<8x128xf32>, i32 -> vector<8x128xf32>
    %19 = vector.shape_cast %13 : vector<8x1xf32> to vector<8x1xf32>
    %20 = vector.broadcast %19 : vector<8x1xf32> to vector<8x128xf32>
    %21 = arith.select %17, %20, %18 : vector<8x128xi1>, vector<8x128xf32>
    %c127_i32 = arith.constant 127 : i32
    %22 = vector.broadcast %c127_i32 : i32 to vector<8x128xi32>
    %23 = arith.cmpi eq, %9, %22 : vector<8x128xi32>
    %c127_i32_21 = arith.constant 127 : i32
    %24 = tpu.dynamic_rotate %11 by %c127_i32_21 dim 1 : vector<8x128xf32>, i32 -> vector<8x128xf32>
    %25 = vector.shape_cast %15 : vector<8x1xf32> to vector<8x1xf32>
    %26 = vector.broadcast %25 : vector<8x1xf32> to vector<8x128xf32>
    %27 = arith.select %23, %26, %24 : vector<8x128xi1>, vector<8x128xf32>
    %cst = arith.constant dense<0.000000e+00> : vector<8x128xf32>
    %28 = tpu.matmul %1, %11, %cst {dimension_numbers = #tpu.dot_dimension_numbers<[1], [0], [0], [1], [0, 0, 1, 1], [], []>, precision = #tpu.contract_precision<fp32>} : vector<8x8xf32>, vector<8x128xf32>, vector<8x128xf32> -> vector<8x128xf32>
    %cst_22 = arith.constant dense<0.000000e+00> : vector<8x128xf32>
    %29 = tpu.matmul %5, %21, %cst_22 {dimension_numbers = #tpu.dot_dimension_numbers<[1], [0], [0], [1], [0, 0, 1, 1], [], []>, precision = #tpu.contract_precision<fp32>} : vector<8x8xf32>, vector<8x128xf32>, vector<8x128xf32> -> vector<8x128xf32>
    %30 = arith.addf %28, %29 : vector<8x128xf32>
    %31 = vector.broadcast %8 : vector<8x1xf32> to vector<8x128xf32>
    %32 = arith.addf %30, %31 : vector<8x128xf32>
    %cst_23 = arith.constant dense<0.000000e+00> : vector<8x128xf32>
    %33 = tpu.matmul %3, %11, %cst_23 {dimension_numbers = #tpu.dot_dimension_numbers<[1], [0], [0], [1], [0, 0, 1, 1], [], []>, precision = #tpu.contract_precision<fp32>} : vector<8x8xf32>, vector<8x128xf32>, vector<8x128xf32> -> vector<8x128xf32>
    %cst_24 = arith.constant dense<0.000000e+00> : vector<8x128xf32>
    %34 = tpu.matmul %7, %27, %cst_24 {dimension_numbers = #tpu.dot_dimension_numbers<[1], [0], [0], [1], [0, 0, 1, 1], [], []>, precision = #tpu.contract_precision<fp32>} : vector<8x8xf32>, vector<8x128xf32>, vector<8x128xf32> -> vector<8x128xf32>
    %35 = arith.addf %33, %34 : vector<8x128xf32>
    %36 = vector.broadcast %8 : vector<8x1xf32> to vector<8x128xf32>
    %37 = arith.addf %35, %36 : vector<8x128xf32>
    %c0_25 = arith.constant 0 : index
    %c0_26 = arith.constant 0 : index
    %c0_27 = arith.constant 0 : index
    %38 = vector.load %arg7[%c0_25, %c0_26, %c0_27] : memref<2x8x128xf32, #tpu.memory_space<vmem>>, vector<1x8x128xf32>
    %39 = vector.shape_cast %38 : vector<1x8x128xf32> to vector<8x128xf32>
    %40 = vector.shape_cast %32 : vector<8x128xf32> to vector<1x8x128xf32>
    tpu.vector_store %arg7[%c0_25, %c0_26, %c0_27], %40 {strides = array<i32>} : memref<2x8x128xf32, #tpu.memory_space<vmem>>, vector<1x8x128xf32>,
    %c0_28 = arith.constant 0 : index
    %c0_29 = arith.constant 0 : index
    %c0_30 = arith.constant 0 : index
    %41 = vector.load %arg8[%c0_28, %c0_29, %c0_30] : memref<2x8x128xf32, #tpu.memory_space<vmem>>, vector<1x8x128xf32>
    %42 = vector.shape_cast %41 : vector<1x8x128xf32> to vector<8x128xf32>
    %43 = vector.shape_cast %37 : vector<8x128xf32> to vector<1x8x128xf32>
    tpu.vector_store %arg8[%c0_28, %c0_29, %c0_30], %43 {strides = array<i32>} : memref<2x8x128xf32, #tpu.memory_space<vmem>>, vector<1x8x128xf32>,
    %c1_31 = arith.constant 1 : index
    %c0_32 = arith.constant 0 : index
    %c0_33 = arith.constant 0 : index
    %44 = vector.load %arg2[%c1_31, %c0_32, %c0_33] : memref<2x8x128xf32, #tpu.memory_space<vmem>>, vector<1x8x128xf32>
    %45 = vector.shape_cast %44 : vector<1x8x128xf32> to vector<8x128xf32>
    %c0_34 = arith.constant 0 : index
    %c1_35 = arith.constant 1 : index
    %c0_36 = arith.constant 0 : index
    %c0_37 = arith.constant 0 : index
    %46 = vector.load %arg5[%c0_34, %c1_35, %c0_36, %c0_37] : memref<1x2x8x1xf32, #tpu.memory_space<vmem>>, vector<1x1x8x1xf32>
    %47 = vector.shape_cast %46 : vector<1x1x8x1xf32> to vector<8x1xf32>
    %c0_38 = arith.constant 0 : index
    %c1_39 = arith.constant 1 : index
    %c0_40 = arith.constant 0 : index
    %c0_41 = arith.constant 0 : index
    %48 = vector.load %arg6[%c0_38, %c1_39, %c0_40, %c0_41] : memref<1x2x8x1xf32, #tpu.memory_space<vmem>>, vector<1x1x8x1xf32>
    %49 = vector.shape_cast %48 : vector<1x1x8x1xf32> to vector<8x1xf32>
    %c0_i32_42 = arith.constant 0 : i32
    %50 = vector.broadcast %c0_i32_42 : i32 to vector<8x128xi32>
    %51 = arith.cmpi eq, %9, %50 : vector<8x128xi32>
    %c1_i32_43 = arith.constant 1 : i32
    %52 = tpu.dynamic_rotate %45 by %c1_i32_43 dim 1 : vector<8x128xf32>, i32 -> vector<8x128xf32>
    %53 = vector.shape_cast %47 : vector<8x1xf32> to vector<8x1xf32>
    %54 = vector.broadcast %53 : vector<8x1xf32> to vector<8x128xf32>
    %55 = arith.select %51, %54, %52 : vector<8x128xi1>, vector<8x128xf32>
    %c127_i32_44 = arith.constant 127 : i32
    %56 = vector.broadcast %c127_i32_44 : i32 to vector<8x128xi32>
    %57 = arith.cmpi eq, %9, %56 : vector<8x128xi32>
    %c127_i32_45 = arith.constant 127 : i32
    %58 = tpu.dynamic_rotate %45 by %c127_i32_45 dim 1 : vector<8x128xf32>, i32 -> vector<8x128xf32>
    %59 = vector.shape_cast %49 : vector<8x1xf32> to vector<8x1xf32>
    %60 = vector.broadcast %59 : vector<8x1xf32> to vector<8x128xf32>
    %61 = arith.select %57, %60, %58 : vector<8x128xi1>, vector<8x128xf32>
    %cst_46 = arith.constant dense<0.000000e+00> : vector<8x128xf32>
    %62 = tpu.matmul %1, %45, %cst_46 {dimension_numbers = #tpu.dot_dimension_numbers<[1], [0], [0], [1], [0, 0, 1, 1], [], []>, precision = #tpu.contract_precision<fp32>} : vector<8x8xf32>, vector<8x128xf32>, vector<8x128xf32> -> vector<8x128xf32>
    %cst_47 = arith.constant dense<0.000000e+00> : vector<8x128xf32>
    %63 = tpu.matmul %5, %55, %cst_47 {dimension_numbers = #tpu.dot_dimension_numbers<[1], [0], [0], [1], [0, 0, 1, 1], [], []>, precision = #tpu.contract_precision<fp32>} : vector<8x8xf32>, vector<8x128xf32>, vector<8x128xf32> -> vector<8x128xf32>
    %64 = arith.addf %62, %63 : vector<8x128xf32>
    %65 = vector.broadcast %8 : vector<8x1xf32> to vector<8x128xf32>
    %66 = arith.addf %64, %65 : vector<8x128xf32>
    %cst_48 = arith.constant dense<0.000000e+00> : vector<8x128xf32>
    %67 = tpu.matmul %3, %45, %cst_48 {dimension_numbers = #tpu.dot_dimension_numbers<[1], [0], [0], [1], [0, 0, 1, 1], [], []>, precision = #tpu.contract_precision<fp32>} : vector<8x8xf32>, vector<8x128xf32>, vector<8x128xf32> -> vector<8x128xf32>
    %cst_49 = arith.constant dense<0.000000e+00> : vector<8x128xf32>
    %68 = tpu.matmul %7, %61, %cst_49 {dimension_numbers = #tpu.dot_dimension_numbers<[1], [0], [0], [1], [0, 0, 1, 1], [], []>, precision = #tpu.contract_precision<fp32>} : vector<8x8xf32>, vector<8x128xf32>, vector<8x128xf32> -> vector<8x128xf32>
    %69 = arith.addf %67, %68 : vector<8x128xf32>
    %70 = vector.broadcast %8 : vector<8x1xf32> to vector<8x128xf32>
    %71 = arith.addf %69, %70 : vector<8x128xf32>
    %c1_50 = arith.constant 1 : index
    %c0_51 = arith.constant 0 : index
    %c0_52 = arith.constant 0 : index
    %72 = vector.load %arg7[%c1_50, %c0_51, %c0_52] : memref<2x8x128xf32, #tpu.memory_space<vmem>>, vector<1x8x128xf32>
    %73 = vector.shape_cast %72 : vector<1x8x128xf32> to vector<8x128xf32>
    %74 = vector.shape_cast %66 : vector<8x128xf32> to vector<1x8x128xf32>
    tpu.vector_store %arg7[%c1_50, %c0_51, %c0_52], %74 {strides = array<i32>} : memref<2x8x128xf32, #tpu.memory_space<vmem>>, vector<1x8x128xf32>,
    %c1_53 = arith.constant 1 : index
    %c0_54 = arith.constant 0 : index
    %c0_55 = arith.constant 0 : index
    %75 = vector.load %arg8[%c1_53, %c0_54, %c0_55] : memref<2x8x128xf32, #tpu.memory_space<vmem>>, vector<1x8x128xf32>
    %76 = vector.shape_cast %75 : vector<1x8x128xf32> to vector<8x128xf32>
    %77 = vector.shape_cast %71 : vector<8x128xf32> to vector<1x8x128xf32>
    tpu.vector_store %arg8[%c1_53, %c0_54, %c0_55], %77 {strides = array<i32>} : memref<2x8x128xf32, #tpu.memory_space<vmem>>, vector<1x8x128xf32>,
    return
  }
  func.func @transform_0(%arg0: i32, %arg1: i32) -> (i32, i32, i32) {
    %c0_i32 = arith.constant 0 : i32
    %c0_i32_0 = arith.constant 0 : i32
    return %arg0, %c0_i32, %arg1 : i32, i32, i32
  }
  func.func @transform_1(%arg0: i32, %arg1: i32) -> (i32, i32, i32) {
    %c0_i32 = arith.constant 0 : i32
    %c0_i32_0 = arith.constant 0 : i32
    %c0_i32_1 = arith.constant 0 : i32
    %c0_i32_2 = arith.constant 0 : i32
    return %c0_i32, %c0_i32_0, %c0_i32_1 : i32, i32, i32
  }
  func.func @transform_2(%arg0: i32, %arg1: i32) -> (i32, i32) {
    %c0_i32 = arith.constant 0 : i32
    %c0_i32_0 = arith.constant 0 : i32
    %c0_i32_1 = arith.constant 0 : i32
    return %c0_i32, %c0_i32_0 : i32, i32
  }
  func.func @transform_3(%arg0: i32, %arg1: i32) -> (i32, i32, i32, i32) {
    %c0_i32 = arith.constant 0 : i32
    %c0_i32_0 = arith.constant 0 : i32
    %c0_i32_1 = arith.constant 0 : i32
    return %arg1, %arg0, %c0_i32, %c0_i32_0 : i32, i32, i32, i32
  }
  func.func @transform_4(%arg0: i32, %arg1: i32) -> (i32, i32, i32, i32) {
    %c0_i32 = arith.constant 0 : i32
    %c0_i32_0 = arith.constant 0 : i32
    %c0_i32_1 = arith.constant 0 : i32
    return %arg1, %arg0, %c0_i32, %c0_i32_0 : i32, i32, i32, i32
  }
  func.func @transform_5(%arg0: i32, %arg1: i32) -> (i32, i32, i32) {
    %c0_i32 = arith.constant 0 : i32
    %c0_i32_0 = arith.constant 0 : i32
    return %arg0, %c0_i32, %arg1 : i32, i32, i32
  }
  func.func @transform_6(%arg0: i32, %arg1: i32) -> (i32, i32, i32) {
    %c0_i32 = arith.constant 0 : i32
    %c0_i32_0 = arith.constant 0 : i32
    return %arg0, %c0_i32, %arg1 : i32, i32, i32
  }
}

</mosaic_0001>

<llo_original>
// kernel: tpu_custom_call.1
$region0: #{tpu_custom_call.1}
  #allocation0 [shape = 'u32[]', space=smem, size = 0x4, offset = 0x4, fixed_abs, tag = 'smem constant byte address 0x4 - core index']
  #allocation1 [shape = 'u32[144,128]{1,0:T(1,128)}', space=vmem, size = 0x12000, scoped, tag = 'internal scratch']
  %s0 = inlined_call_operand.hbm [shape: f32[2,8,128], index: 0, kind: input, shape index: {}]
  %s1 = inlined_call_operand.vmem [shape: f32[4,8,8], index: 1, kind: input, shape index: {}]
  %s2 = inlined_call_operand.vmem [shape: f32[8,1], index: 2, kind: input, shape index: {}]
  %s3 = inlined_call_operand.vmem [shape: f32[1,2,8,1], index: 3, kind: input, shape index: {}]
  %s4 = inlined_call_operand.vmem [shape: f32[1,2,8,1], index: 4, kind: input, shape index: {}]
  %s5 = inlined_call_operand.hbm [shape: f32[2,8,128], index: 5, kind: output, shape index: {0}]
  %s6 = inlined_call_operand.hbm [shape: f32[2,8,128], index: 6, kind: output, shape index: {1}]
  %7 = xla_tuple %s5, %s6
  %s8 = sld [smem:[#allocation0]]
  $region42: #{tpu_custom_call.1} parent=0
    _
  %s10 = ssub.s32 1, %s8
  %s11 = scalar_select 0, %s10, %s8
  $region1: #{tpu_custom_call.1} parent=0
    #allocation2 [shape = 'u8[8192]{0}', space=vmem, size = 0x2000, scoped, tag = 'input window, operand 0, single buffered']
    #allocation3 [shape = 's32[1]{0}', space=sflag, size = 0x4, scoped, tag = 'scoped memory for tpu_custom_call.1']
    #allocation4 [shape = 's32[1]{0}', space=sflag, size = 0x4, scoped, tag = 'scoped memory for tpu_custom_call.1']
    #allocation5 [shape = 'u8[8192]{0}', space=vmem, size = 0x2000, scoped, tag = 'output window, operand 0, single buffered']
    #allocation6 [shape = 'u8[8192]{0}', space=vmem, size = 0x2000, scoped, tag = 'output window, operand 1, single buffered']
    #allocation7 [shape = 's32[1]{0}', space=sflag, size = 0x4, scoped, tag = 'scoped memory for tpu_custom_call.1']
    %12 = vsyncpa [#allocation3], 0
    %13 = vsyncpa [#allocation4], 0
    %14 = vsyncpa [#allocation7], 0
    // Predicated region
    $region2: #{tpu_custom_call.1} parent=1 // pred_check
      _
    $region3: #{tpu_custom_call.1} parent=1 // pred_check_branch
      %16 = sbr.rel (0) target = $region5
    $region4: #{tpu_custom_call.1} parent=1 // pred_region
      %s18 = ssub.s32 256, 256
      %19 = vsyncadd [#allocation3], %s18
      %s20 = sshll.u32 [#allocation2], 4
      %s21 = int_to_ptr.vmem [resolvable:$true] %s20
      %26 = dma.hbm_to_vmem [thread:$0]  %s0, 256, %s21, [#allocation3], 128, 128, 8
    $region5: #{tpu_custom_call.1} parent=1 // pred_fallthru
      _
    // Predicated region
    $region6: #{tpu_custom_call.1} parent=1 // pred_check
      _
    $region7: #{tpu_custom_call.1} parent=1 // pred_check_branch
      %28 = sbr.rel (0) target = $region9
    $region8: #{tpu_custom_call.1} parent=1 // pred_region
      _
    $region9: #{tpu_custom_call.1} parent=1 // pred_fallthru
      _
    // Predicated region
    $region10: #{tpu_custom_call.1} parent=1 // pred_check
      _
    $region11: #{tpu_custom_call.1} parent=1 // pred_check_branch
      %30 = sbr.rel (0) target = $region13
    $region12: #{tpu_custom_call.1} parent=1 // pred_region
      _
    $region13: #{tpu_custom_call.1} parent=1 // pred_fallthru
      _
    // Predicated region
    $region14: #{tpu_custom_call.1} parent=1 // pred_check
      _
    $region15: #{tpu_custom_call.1} parent=1 // pred_check_branch
      %32 = sbr.rel (0) target = $region17
    $region16: #{tpu_custom_call.1} parent=1 // pred_region
      _
    $region17: #{tpu_custom_call.1} parent=1 // pred_fallthru
      _
    // Predicated region
    $region18: #{tpu_custom_call.1} parent=1 // pred_check
      _
    $region19: #{tpu_custom_call.1} parent=1 // pred_check_branch
      %34 = sbr.rel (0) target = $region21
    $region20: #{tpu_custom_call.1} parent=1 // pred_region
      _
    $region21: #{tpu_custom_call.1} parent=1 // pred_fallthru
      _
    // Predicated region
    $region22: #{tpu_custom_call.1} parent=1 // pred_check
      _
    $region23: #{tpu_custom_call.1} parent=1 // pred_check_branch
      %36 = sbr.rel (0) target = $region25
    $region24: #{tpu_custom_call.1} parent=1 // pred_region
      %37 = dma.done [#allocation3], 256
    $region25: #{tpu_custom_call.1} parent=1 // pred_fallthru
      _
    %v38 = vld [vmem:[%s1] sm:$0xff]
    %s39 = scalar_lea.vmem %s1, 8
    %v40 = vld [vmem:[%s39] sm:$0xff]
    %s41 = scalar_lea.vmem %s1, 16
    %v42 = vld [vmem:[%s41] sm:$0xff]
    %s43 = scalar_lea.vmem %s1, 24
    %v44 = vld [vmem:[%s43] sm:$0xff]
    %v45 = vld [vmem:[%s2] sm:$0xff]
    %v46 = vlaneseq
    %v47 = vand.u32 %v46, 127
    %v48 = vld [vmem:[#allocation2] sm:$0xff]
    %v49 = vld [vmem:[%s3] sm:$0xff]
    %v50 = vld [vmem:[%s4] sm:$0xff]
    %vm51 = vcmp.eq.s32.totalorder %v47, 0
    %52 = vrot.lane.b32.xlu0 %v48, 1
    %v53 = vpop.permute.xlu0 %52
    %55 = vset.pattern.permute.xlu0 0
    %56 = vperm.xlu0 %55, %v49
    %v57 = vpop.permute.xlu0 %56
    %v59 = vsel %vm51, %v57, %v53
    %vm60 = vcmp.eq.s32.totalorder %v47, 127
    %61 = vrot.lane.b32.xlu0 %v48, 127
    %v62 = vpop.permute.xlu0 %61
    %64 = vset.pattern.permute.xlu0 0
    %65 = vperm.xlu0 %64, %v50
    %v66 = vpop.permute.xlu0 %65
    %v68 = vsel %vm60, %v66, %v62
    %vm69 = vcmask 64512
    %v71 = vsel %vm69, %v42, 0
    %73 = vmatprep.subr.mxu0 0.0
    %74 = vmatpush1.msra.mxu0 0.0
    %75 = vmatprep.subr.mxu0 0.0
    %76 = vmatpush1.msra.mxu0 0.0
    %77 = vmatprep.subr.mxu0 0.0
    %78 = vmatpush1.msra.mxu0 0.0
    %79 = vmatprep.subr.mxu0 0.0
    %80 = vmatpush1.msra.mxu0 0.0
    %81 = vmatprep.subr.mxu0 0.0
    %82 = vmatpush1.msra.mxu0 0.0
    %83 = vmatprep.subr.mxu0 0.0
    %84 = vmatpush1.msra.mxu0 0.0
    %85 = vmatprep.subr.mxu0 0.0
    %86 = vmatpush1.msra.mxu0 0.0
    %87 = vmatprep.subr.mxu0 0.0
    %88 = vmatpush1.msra.mxu0 0.0
    %89 = vmatprep.subr.mxu0 0.0
    %90 = vmatpush1.msra.mxu0 0.0
    %91 = vmatprep.subr.mxu0 0.0
    %92 = vmatpush1.msra.mxu0 0.0
    %93 = vmatprep.subr.mxu0 0.0
    %94 = vmatpush1.msra.mxu0 0.0
    %95 = vmatprep.subr.mxu0 0.0
    %96 = vmatpush1.msra.mxu0 0.0
    %97 = vmatprep.subr.mxu0 0.0
    %98 = vmatpush1.msra.mxu0 0.0
    %99 = vmatprep.subr.mxu0 0.0
    %100 = vmatpush1.msra.mxu0 0.0
    %101 = vmatprep.subr.mxu0 0.0
    %102 = vmatpush1.msra.mxu0 0.0
    %103 = vmatprep.subr.mxu0 0.0
    %v104 = vand.u32 %v59, 4294901760
    %105 = vmatpush1.msra.mxu0 %v104
    %106 = vmatprep.subr.mxu0 0.0
    %107 = vmatpush2.msra.mxu0 0.0
    %108 = vmatprep.subr.mxu0 0.0
    %109 = vmatpush2.msra.mxu0 0.0
    %110 = vmatprep.subr.mxu0 0.0
    %111 = vmatpush2.msra.mxu0 0.0
    %112 = vmatprep.subr.mxu0 0.0
    %113 = vmatpush2.msra.mxu0 0.0
    %114 = vmatprep.subr.mxu0 0.0
    %115 = vmatpush2.msra.mxu0 0.0
    %116 = vmatprep.subr.mxu0 0.0
    %117 = vmatpush2.msra.mxu0 0.0
    %118 = vmatprep.subr.mxu0 0.0
    %119 = vmatpush2.msra.mxu0 0.0
    %120 = vmatprep.subr.mxu0 0.0
    %121 = vmatpush2.msra.mxu0 0.0
    %122 = vmatprep.subr.mxu0 0.0
    %123 = vmatpush2.msra.mxu0 0.0
    %124 = vmatprep.subr.mxu0 0.0
    %125 = vmatpush2.msra.mxu0 0.0
    %126 = vmatprep.subr.mxu0 0.0
    %127 = vmatpush2.msra.mxu0 0.0
    %128 = vmatprep.subr.mxu0 0.0
    %129 = vmatpush2.msra.mxu0 0.0
    %130 = vmatprep.subr.mxu0 0.0
    %131 = vmatpush2.msra.mxu0 0.0
    %132 = vmatprep.subr.mxu0 0.0
    %133 = vmatpush2.msra.mxu0 0.0
    %134 = vmatprep.subr.mxu0 0.0
    %135 = vmatpush2.msra.mxu0 0.0
    %136 = vmatprep.subr.mxu0 0.0
    %137 = vmatpush2.msra.mxu0 0.0
    %138 = vmatprep.mubr.f32.mxu0 0.0
    %v139 = vand.u32 %v71, 4294901760
    %v140 = vsub.f32 %v71, %v139
    %v141 = vand.u32 %v140, 4294901760
    %v142 = vsub.f32 %v140, %v141
    %v143 = vand.u32 %v142, 4294901760
    %144 = vmatmul.mubr.f32.gmra.mxu0 %v143
    %v145 = vpop.f32.mrf.mxu0
    %v146 = vadd.f32 0.0, %v145
    %v147 = vpop.f32.mrf.mxu0
    %148 = vdwg.mxu0
    %149 = vmatprep.subr.mxu0 0.0
    %150 = vmatpush1.msra.mxu0 0.0
    %151 = vmatprep.subr.mxu0 0.0
    %152 = vmatpush1.msra.mxu0 0.0
    %153 = vmatprep.subr.mxu0 0.0
    %154 = vmatpush1.msra.mxu0 0.0
    %155 = vmatprep.subr.mxu0 0.0
    %156 = vmatpush1.msra.mxu0 0.0
    %157 = vmatprep.subr.mxu0 0.0
    %158 = vmatpush1.msra.mxu0 0.0
    %159 = vmatprep.subr.mxu0 0.0
    %160 = vmatpush1.msra.mxu0 0.0
    %161 = vmatprep.subr.mxu0 0.0
    %162 = vmatpush1.msra.mxu0 0.0
    %163 = vmatprep.subr.mxu0 0.0
    %164 = vmatpush1.msra.mxu0 0.0
    %165 = vmatprep.subr.mxu0 0.0
    %166 = vmatpush1.msra.mxu0 0.0
    %167 = vmatprep.subr.mxu0 0.0
    %168 = vmatpush1.msra.mxu0 0.0
    %169 = vmatprep.subr.mxu0 0.0
    %170 = vmatpush1.msra.mxu0 0.0
    %171 = vmatprep.subr.mxu0 0.0
    %172 = vmatpush1.msra.mxu0 0.0
    %173 = vmatprep.subr.mxu0 0.0
    %174 = vmatpush1.msra.mxu0 0.0
    %175 = vmatprep.subr.mxu0 0.0
    %176 = vmatpush1.msra.mxu0 0.0
    %177 = vmatprep.subr.mxu0 0.0
    %178 = vmatpush1.msra.mxu0 0.0
    %179 = vmatprep.subr.mxu0 0.0
    %v180 = vand.u32 %v59, 4294901760
    %v181 = vsub.f32 %v59, %v180
    %v182 = vand.u32 %v181, 4294901760
    %v183 = vsub.f32 %v181, %v182
    %v184 = vand.u32 %v183, 4294901760
    %185 = vmatpush1.msra.mxu0 %v184
    %186 = vmatprep.subr.mxu0 0.0
    %187 = vmatpush2.msra.mxu0 0.0
    %188 = vmatprep.subr.mxu0 0.0
    %189 = vmatpush2.msra.mxu0 0.0
    %190 = vmatprep.subr.mxu0 0.0
    %191 = vmatpush2.msra.mxu0 0.0
    %192 = vmatprep.subr.mxu0 0.0
    %193 = vmatpush2.msra.mxu0 0.0
    %194 = vmatprep.subr.mxu0 0.0
    %195 = vmatpush2.msra.mxu0 0.0
    %196 = vmatprep.subr.mxu0 0.0
    %197 = vmatpush2.msra.mxu0 0.0
    %198 = vmatprep.subr.mxu0 0.0
    %199 = vmatpush2.msra.mxu0 0.0
    %200 = vmatprep.subr.mxu0 0.0
    %201 = vmatpush2.msra.mxu0 0.0
    %202 = vmatprep.subr.mxu0 0.0
    %203 = vmatpush2.msra.mxu0 0.0
    %204 = vmatprep.subr.mxu0 0.0
    %205 = vmatpush2.msra.mxu0 0.0
    %206 = vmatprep.subr.mxu0 0.0
    %207 = vmatpush2.msra.mxu0 0.0
    %208 = vmatprep.subr.mxu0 0.0
    %209 = vmatpush2.msra.mxu0 0.0
    %210 = vmatprep.subr.mxu0 0.0
    %211 = vmatpush2.msra.mxu0 0.0
    %212 = vmatprep.subr.mxu0 0.0
    %213 = vmatpush2.msra.mxu0 0.0
    %214 = vmatprep.subr.mxu0 0.0
    %215 = vmatpush2.msra.mxu0 0.0
    %216 = vmatprep.subr.mxu0 0.0
    %217 = vmatpush2.msra.mxu0 0.0
    %218 = vmatprep.mubr.f32.mxu0 0.0
    %v219 = vand.u32 %v71, 4294901760
    %220 = vmatmul.mubr.f32.gmra.mxu0 %v219
    %v221 = vpop.f32.mrf.mxu0
    %v222 = vadd.f32 %v146, %v221
    %v223 = vpop.f32.mrf.mxu0
    %224 = vdwg.mxu0
    %225 = vmatprep.subr.mxu0 0.0
    %226 = vmatpush1.msra.mxu0 0.0
    %227 = vmatprep.subr.mxu0 0.0
    %228 = vmatpush1.msra.mxu0 0.0
    %229 = vmatprep.subr.mxu0 0.0
    %230 = vmatpush1.msra.mxu0 0.0
    %231 = vmatprep.subr.mxu0 0.0
    %232 = vmatpush1.msra.mxu0 0.0
    %233 = vmatprep.subr.mxu0 0.0
    %234 = vmatpush1.msra.mxu0 0.0
    %235 = vmatprep.subr.mxu0 0.0
    %236 = vmatpush1.msra.mxu0 0.0
    %237 = vmatprep.subr.mxu0 0.0
    %238 = vmatpush1.msra.mxu0 0.0
    %239 = vmatprep.subr.mxu0 0.0
    %240 = vmatpush1.msra.mxu0 0.0
    %241 = vmatprep.subr.mxu0 0.0
    %242 = vmatpush1.msra.mxu0 0.0
    %243 = vmatprep.subr.mxu0 0.0
    %244 = vmatpush1.msra.mxu0 0.0
    %245 = vmatprep.subr.mxu0 0.0
    %246 = vmatpush1.msra.mxu0 0.0
    %247 = vmatprep.subr.mxu0 0.0
    %248 = vmatpush1.msra.mxu0 0.0
    %249 = vmatprep.subr.mxu0 0.0
    %250 = vmatpush1.msra.mxu0 0.0
    %251 = vmatprep.subr.mxu0 0.0
    %252 = vmatpush1.msra.mxu0 0.0
    %253 = vmatprep.subr.mxu0 0.0
    %254 = vmatpush1.msra.mxu0 0.0
    %255 = vmatprep.subr.mxu0 0.0
    %v256 = vand.u32 %v59, 4294901760
    %v257 = vsub.f32 %v59, %v256
    %258 = vmatpush1.msra.mxu0 %v257
    %259 = vmatprep.subr.mxu0 0.0
    %260 = vmatpush2.msra.mxu0 0.0
    %261 = vmatprep.subr.mxu0 0.0
    %262 = vmatpush2.msra.mxu0 0.0
    %263 = vmatprep.subr.mxu0 0.0
    %264 = vmatpush2.msra.mxu0 0.0
    %265 = vmatprep.subr.mxu0 0.0
    %266 = vmatpush2.msra.mxu0 0.0
    %267 = vmatprep.subr.mxu0 0.0
    %268 = vmatpush2.msra.mxu0 0.0
    %269 = vmatprep.subr.mxu0 0.0
    %270 = vmatpush2.msra.mxu0 0.0
    %271 = vmatprep.subr.mxu0 0.0
    %272 = vmatpush2.msra.mxu0 0.0
    %273 = vmatprep.subr.mxu0 0.0
    %274 = vmatpush2.msra.mxu0 0.0
    %275 = vmatprep.subr.mxu0 0.0
    %276 = vmatpush2.msra.mxu0 0.0
    %277 = vmatprep.subr.mxu0 0.0
    %278 = vmatpush2.msra.mxu0 0.0
    %279 = vmatprep.subr.mxu0 0.0
    %280 = vmatpush2.msra.mxu0 0.0
    %281 = vmatprep.subr.mxu0 0.0
    %282 = vmatpush2.msra.mxu0 0.0
    %283 = vmatprep.subr.mxu0 0.0
    %284 = vmatpush2.msra.mxu0 0.0
    %285 = vmatprep.subr.mxu0 0.0
    %286 = vmatpush2.msra.mxu0 0.0
    %287 = vmatprep.subr.mxu0 0.0
    %288 = vmatpush2.msra.mxu0 0.0
    %289 = vmatprep.subr.mxu0 0.0
    %290 = vmatpush2.msra.mxu0 0.0
    %291 = vmatprep.mubr.f32.mxu0 0.0
    %v292 = vand.u32 %v71, 4294901760
    %v293 = vsub.f32 %v71, %v292
    %294 = vmatmul.mubr.f32.gmra.mxu0 %v293
    %v295 = vpop.f32.mrf.mxu0
    %v296 = vadd.f32 %v222, %v295
    %v297 = vpop.f32.mrf.mxu0
    %298 = vdwg.mxu0
    %299 = vmatprep.subr.mxu0 0.0
    %300 = vmatpush1.msra.mxu0 0.0
    %301 = vmatprep.subr.mxu0 0.0
    %302 = vmatpush1.msra.mxu0 0.0
    %303 = vmatprep.subr.mxu0 0.0
    %304 = vmatpush1.msra.mxu0 0.0
    %305 = vmatprep.subr.mxu0 0.0
    %306 = vmatpush1.msra.mxu0 0.0
    %307 = vmatprep.subr.mxu0 0.0
    %308 = vmatpush1.msra.mxu0 0.0
    %309 = vmatprep.subr.mxu0 0.0
    %310 = vmatpush1.msra.mxu0 0.0
    %311 = vmatprep.subr.mxu0 0.0
    %312 = vmatpush1.msra.mxu0 0.0
    %313 = vmatprep.subr.mxu0 0.0
    %314 = vmatpush1.msra.mxu0 0.0
    %315 = vmatprep.subr.mxu0 0.0
    %316 = vmatpush1.msra.mxu0 0.0
    %317 = vmatprep.subr.mxu0 0.0
    %318 = vmatpush1.msra.mxu0 0.0
    %319 = vmatprep.subr.mxu0 0.0
    %320 = vmatpush1.msra.mxu0 0.0
    %321 = vmatprep.subr.mxu0 0.0
    %322 = vmatpush1.msra.mxu0 0.0
    %323 = vmatprep.subr.mxu0 0.0
    %324 = vmatpush1.msra.mxu0 0.0
    %325 = vmatprep.subr.mxu0 0.0
    %326 = vmatpush1.msra.mxu0 0.0
    %327 = vmatprep.subr.mxu0 0.0
    %328 = vmatpush1.msra.mxu0 0.0
    %329 = vmatprep.subr.mxu0 0.0
    %v330 = vand.u32 %v59, 4294901760
    %331 = vmatpush1.msra.mxu0 %v330
    %332 = vmatprep.subr.mxu0 0.0
    %333 = vmatpush2.msra.mxu0 0.0
    %334 = vmatprep.subr.mxu0 0.0
    %335 = vmatpush2.msra.mxu0 0.0
    %336 = vmatprep.subr.mxu0 0.0
    %337 = vmatpush2.msra.mxu0 0.0
    %338 = vmatprep.subr.mxu0 0.0
    %339 = vmatpush2.msra.mxu0 0.0
    %340 = vmatprep.subr.mxu0 0.0
    %341 = vmatpush2.msra.mxu0 0.0
    %342 = vmatprep.subr.mxu0 0.0
    %343 = vmatpush2.msra.mxu0 0.0
    %344 = vmatprep.subr.mxu0 0.0
    %345 = vmatpush2.msra.mxu0 0.0
    %346 = vmatprep.subr.mxu0 0.0
    %347 = vmatpush2.msra.mxu0 0.0
    %348 = vmatprep.subr.mxu0 0.0
    %349 = vmatpush2.msra.mxu0 0.0
    %350 = vmatprep.subr.mxu0 0.0
    %351 = vmatpush2.msra.mxu0 0.0
    %352 = vmatprep.subr.mxu0 0.0
    %353 = vmatpush2.msra.mxu0 0.0
    %354 = vmatprep.subr.mxu0 0.0
    %355 = vmatpush2.msra.mxu0 0.0
    %356 = vmatprep.subr.mxu0 0.0
    %357 = vmatpush2.msra.mxu0 0.0
    %358 = vmatprep.subr.mxu0 0.0
    %359 = vmatpush2.msra.mxu0 0.0
    %360 = vmatprep.subr.mxu0 0.0
    %361 = vmatpush2.msra.mxu0 0.0
    %362 = vmatprep.subr.mxu0 0.0
    %363 = vmatpush2.msra.mxu0 0.0
    %364 = vmatprep.mubr.f32.mxu0 0.0
    %v365 = vand.u32 %v71, 4294901760
    %v366 = vsub.f32 %v71, %v365
    %v367 = vand.u32 %v366, 4294901760
    %368 = vmatmul.mubr.f32.gmra.mxu0 %v367
    %v369 = vpop.f32.mrf.mxu0
    %v370 = vadd.f32 %v296, %v369
    %v371 = vpop.f32.mrf.mxu0
    %372 = vdwg.mxu0
    %373 = vmatprep.subr.mxu0 0.0
    %374 = vmatpush1.msra.mxu0 0.0
    %375 = vmatprep.subr.mxu0 0.0
    %376 = vmatpush1.msra.mxu0 0.0
    %377 = vmatprep.subr.mxu0 0.0
    %378 = vmatpush1.msra.mxu0 0.0
    %379 = vmatprep.subr.mxu0 0.0
    %380 = vmatpush1.msra.mxu0 0.0
    %381 = vmatprep.subr.mxu0 0.0
    %382 = vmatpush1.msra.mxu0 0.0
    %383 = vmatprep.subr.mxu0 0.0
    %384 = vmatpush1.msra.mxu0 0.0
    %385 = vmatprep.subr.mxu0 0.0
    %386 = vmatpush1.msra.mxu0 0.0
    %387 = vmatprep.subr.mxu0 0.0
    %388 = vmatpush1.msra.mxu0 0.0
    %389 = vmatprep.subr.mxu0 0.0
    %390 = vmatpush1.msra.mxu0 0.0
    %391 = vmatprep.subr.mxu0 0.0
    %392 = vmatpush1.msra.mxu0 0.0
    %393 = vmatprep.subr.mxu0 0.0
    %394 = vmatpush1.msra.mxu0 0.0
    %395 = vmatprep.subr.mxu0 0.0
    %396 = vmatpush1.msra.mxu0 0.0
    %397 = vmatprep.subr.mxu0 0.0
    %398 = vmatpush1.msra.mxu0 0.0
    %399 = vmatprep.subr.mxu0 0.0
    %400 = vmatpush1.msra.mxu0 0.0
    %401 = vmatprep.subr.mxu0 0.0
    %402 = vmatpush1.msra.mxu0 0.0
    %403 = vmatprep.subr.mxu0 0.0
    %v404 = vand.u32 %v59, 4294901760
    %v405 = vsub.f32 %v59, %v404
    %v406 = vand.u32 %v405, 4294901760
    %407 = vmatpush1.msra.mxu0 %v406
    %408 = vmatprep.subr.mxu0 0.0
    %409 = vmatpush2.msra.mxu0 0.0
    %410 = vmatprep.subr.mxu0 0.0
    %411 = vmatpush2.msra.mxu0 0.0
    %412 = vmatprep.subr.mxu0 0.0
    %413 = vmatpush2.msra.mxu0 0.0
    %414 = vmatprep.subr.mxu0 0.0
    %415 = vmatpush2.msra.mxu0 0.0
    %416 = vmatprep.subr.mxu0 0.0
    %417 = vmatpush2.msra.mxu0 0.0
    %418 = vmatprep.subr.mxu0 0.0
    %419 = vmatpush2.msra.mxu0 0.0
    %420 = vmatprep.subr.mxu0 0.0
    %421 = vmatpush2.msra.mxu0 0.0
    %422 = vmatprep.subr.mxu0 0.0
    %423 = vmatpush2.msra.mxu0 0.0
    %424 = vmatprep.subr.mxu0 0.0
    %425 = vmatpush2.msra.mxu0 0.0
    %426 = vmatprep.subr.mxu0 0.0
    %427 = vmatpush2.msra.mxu0 0.0
    %428 = vmatprep.subr.mxu0 0.0
    %429 = vmatpush2.msra.mxu0 0.0
    %430 = vmatprep.subr.mxu0 0.0
    %431 = vmatpush2.msra.mxu0 0.0
    %432 = vmatprep.subr.mxu0 0.0
    %433 = vmatpush2.msra.mxu0 0.0
    %434 = vmatprep.subr.mxu0 0.0
    %435 = vmatpush2.msra.mxu0 0.0
    %436 = vmatprep.subr.mxu0 0.0
    %437 = vmatpush2.msra.mxu0 0.0
    %438 = vmatprep.subr.mxu0 0.0
    %439 = vmatpush2.msra.mxu0 0.0
    %440 = vmatprep.mubr.f32.mxu0 0.0
    %v441 = vand.u32 %v71, 4294901760
    %442 = vmatmul.mubr.f32.gmra.mxu0 %v441
    %v443 = vpop.f32.mrf.mxu0
    %v444 = vadd.f32 %v370, %v443
    %v445 = vpop.f32.mrf.mxu0
    %446 = vdwg.mxu0
    %447 = vmatprep.subr.mxu0 0.0
    %448 = vmatpush1.msra.mxu0 0.0
    %449 = vmatprep.subr.mxu0 0.0
    %450 = vmatpush1.msra.mxu0 0.0
    %451 = vmatprep.subr.mxu0 0.0
    %452 = vmatpush1.msra.mxu0 0.0
    %453 = vmatprep.subr.mxu0 0.0
    %454 = vmatpush1.msra.mxu0 0.0
    %455 = vmatprep.subr.mxu0 0.0
    %456 = vmatpush1.msra.mxu0 0.0
    %457 = vmatprep.subr.mxu0 0.0
    %458 = vmatpush1.msra.mxu0 0.0
    %459 = vmatprep.subr.mxu0 0.0
    %460 = vmatpush1.msra.mxu0 0.0
    %461 = vmatprep.subr.mxu0 0.0
    %462 = vmatpush1.msra.mxu0 0.0
    %463 = vmatprep.subr.mxu0 0.0
    %464 = vmatpush1.msra.mxu0 0.0
    %465 = vmatprep.subr.mxu0 0.0
    %466 = vmatpush1.msra.mxu0 0.0
    %467 = vmatprep.subr.mxu0 0.0
    %468 = vmatpush1.msra.mxu0 0.0
    %469 = vmatprep.subr.mxu0 0.0
    %470 = vmatpush1.msra.mxu0 0.0
    %471 = vmatprep.subr.mxu0 0.0
    %472 = vmatpush1.msra.mxu0 0.0
    %473 = vmatprep.subr.mxu0 0.0
    %474 = vmatpush1.msra.mxu0 0.0
    %475 = vmatprep.subr.mxu0 0.0
    %476 = vmatpush1.msra.mxu0 0.0
    %477 = vmatprep.subr.mxu0 0.0
    %v478 = vand.u32 %v59, 4294901760
    %479 = vmatpush1.msra.mxu0 %v478
    %480 = vmatprep.subr.mxu0 0.0
    %481 = vmatpush2.msra.mxu0 0.0
    %482 = vmatprep.subr.mxu0 0.0
    %483 = vmatpush2.msra.mxu0 0.0
    %484 = vmatprep.subr.mxu0 0.0
    %485 = vmatpush2.msra.mxu0 0.0
    %486 = vmatprep.subr.mxu0 0.0
    %487 = vmatpush2.msra.mxu0 0.0
    %488 = vmatprep.subr.mxu0 0.0
    %489 = vmatpush2.msra.mxu0 0.0
    %490 = vmatprep.subr.mxu0 0.0
    %491 = vmatpush2.msra.mxu0 0.0
    %492 = vmatprep.subr.mxu0 0.0
    %493 = vmatpush2.msra.mxu0 0.0
    %494 = vmatprep.subr.mxu0 0.0
    %495 = vmatpush2.msra.mxu0 0.0
    %496 = vmatprep.subr.mxu0 0.0
    %497 = vmatpush2.msra.mxu0 0.0
    %498 = vmatprep.subr.mxu0 0.0
    %499 = vmatpush2.msra.mxu0 0.0
    %500 = vmatprep.subr.mxu0 0.0
    %501 = vmatpush2.msra.mxu0 0.0
    %502 = vmatprep.subr.mxu0 0.0
    %503 = vmatpush2.msra.mxu0 0.0
    %504 = vmatprep.subr.mxu0 0.0
    %505 = vmatpush2.msra.mxu0 0.0
    %506 = vmatprep.subr.mxu0 0.0
    %507 = vmatpush2.msra.mxu0 0.0
    %508 = vmatprep.subr.mxu0 0.0
    %509 = vmatpush2.msra.mxu0 0.0
    %510 = vmatprep.subr.mxu0 0.0
    %511 = vmatpush2.msra.mxu0 0.0
    %512 = vmatprep.mubr.f32.mxu0 0.0
    %v513 = vand.u32 %v71, 4294901760
    %514 = vmatmul.mubr.f32.gmra.mxu0 %v513
    %v515 = vpop.f32.mrf.mxu0
    %v516 = vadd.f32 %v444, %v515
    %v517 = vpop.f32.mrf.mxu0
    %518 = vdwg.mxu0
    %v520 = vsel %vm69, %v38, 0
    %522 = vmatprep.subr.mxu0 0.0
    %523 = vmatpush1.msra.mxu0 0.0
    %524 = vmatprep.subr.mxu0 0.0
    %525 = vmatpush1.msra.mxu0 0.0
    %526 = vmatprep.subr.mxu0 0.0
    %527 = vmatpush1.msra.mxu0 0.0
    %528 = vmatprep.subr.mxu0 0.0
    %529 = vmatpush1.msra.mxu0 0.0
    %530 = vmatprep.subr.mxu0 0.0
    %531 = vmatpush1.msra.mxu0 0.0
    %532 = vmatprep.subr.mxu0 0.0
    %533 = vmatpush1.msra.mxu0 0.0
    %534 = vmatprep.subr.mxu0 0.0
    %535 = vmatpush1.msra.mxu0 0.0
    %536 = vmatprep.subr.mxu0 0.0
    %537 = vmatpush1.msra.mxu0 0.0
    %538 = vmatprep.subr.mxu0 0.0
    %539 = vmatpush1.msra.mxu0 0.0
    %540 = vmatprep.subr.mxu0 0.0
    %541 = vmatpush1.msra.mxu0 0.0
    %542 = vmatprep.subr.mxu0 0.0
    %543 = vmatpush1.msra.mxu0 0.0
    %544 = vmatprep.subr.mxu0 0.0
    %545 = vmatpush1.msra.mxu0 0.0
    %546 = vmatprep.subr.mxu0 0.0
    %547 = vmatpush1.msra.mxu0 0.0
    %548 = vmatprep.subr.mxu0 0.0
    %549 = vmatpush1.msra.mxu0 0.0
    %550 = vmatprep.subr.mxu0 0.0
    %551 = vmatpush1.msra.mxu0 0.0
    %552 = vmatprep.subr.mxu0 0.0
    %v553 = vand.u32 %v48, 4294901760
    %554 = vmatpush1.msra.mxu0 %v553
    %555 = vmatprep.subr.mxu0 0.0
    %556 = vmatpush2.msra.mxu0 0.0
    %557 = vmatprep.subr.mxu0 0.0
    %558 = vmatpush2.msra.mxu0 0.0
    %559 = vmatprep.subr.mxu0 0.0
    %560 = vmatpush2.msra.mxu0 0.0
    %561 = vmatprep.subr.mxu0 0.0
    %562 = vmatpush2.msra.mxu0 0.0
    %563 = vmatprep.subr.mxu0 0.0
    %564 = vmatpush2.msra.mxu0 0.0
    %565 = vmatprep.subr.mxu0 0.0
    %566 = vmatpush2.msra.mxu0 0.0
    %567 = vmatprep.subr.mxu0 0.0
    %568 = vmatpush2.msra.mxu0 0.0
    %569 = vmatprep.subr.mxu0 0.0
    %570 = vmatpush2.msra.mxu0 0.0
    %571 = vmatprep.subr.mxu0 0.0
    %572 = vmatpush2.msra.mxu0 0.0
    %573 = vmatprep.subr.mxu0 0.0
    %574 = vmatpush2.msra.mxu0 0.0
    %575 = vmatprep.subr.mxu0 0.0
    %576 = vmatpush2.msra.mxu0 0.0
    %577 = vmatprep.subr.mxu0 0.0
    %578 = vmatpush2.msra.mxu0 0.0
    %579 = vmatprep.subr.mxu0 0.0
    %580 = vmatpush2.msra.mxu0 0.0
    %581 = vmatprep.subr.mxu0 0.0
    %582 = vmatpush2.msra.mxu0 0.0
    %583 = vmatprep.subr.mxu0 0.0
    %584 = vmatpush2.msra.mxu0 0.0
    %585 = vmatprep.subr.mxu0 0.0
    %586 = vmatpush2.msra.mxu0 0.0
    %587 = vmatprep.mubr.f32.mxu0 0.0
    %v588 = vand.u32 %v520, 4294901760
    %v589 = vsub.f32 %v520, %v588
    %v590 = vand.u32 %v589, 4294901760
    %v591 = vsub.f32 %v589, %v590
    %v592 = vand.u32 %v591, 4294901760
    %593 = vmatmul.mubr.f32.gmra.mxu0 %v592
    %v594 = vpop.f32.mrf.mxu0
    %v595 = vadd.f32 %v516, %v594
    %v596 = vpop.f32.mrf.mxu0
    %597 = vdwg.mxu0
    %598 = vmatprep.subr.mxu0 0.0
    %599 = vmatpush1.msra.mxu0 0.0
    %600 = vmatprep.subr.mxu0 0.0
    %601 = vmatpush1.msra.mxu0 0.0
    %602 = vmatprep.subr.mxu0 0.0
    %603 = vmatpush1.msra.mxu0 0.0
    %604 = vmatprep.subr.mxu0 0.0
    %605 = vmatpush1.msra.mxu0 0.0
    %606 = vmatprep.subr.mxu0 0.0
    %607 = vmatpush1.msra.mxu0 0.0
    %608 = vmatprep.subr.mxu0 0.0
    %609 = vmatpush1.msra.mxu0 0.0
    %610 = vmatprep.subr.mxu0 0.0
    %611 = vmatpush1.msra.mxu0 0.0
    %612 = vmatprep.subr.mxu0 0.0
    %613 = vmatpush1.msra.mxu0 0.0
    %614 = vmatprep.subr.mxu0 0.0
    %615 = vmatpush1.msra.mxu0 0.0
    %616 = vmatprep.subr.mxu0 0.0
    %617 = vmatpush1.msra.mxu0 0.0
    %618 = vmatprep.subr.mxu0 0.0
    %619 = vmatpush1.msra.mxu0 0.0
    %620 = vmatprep.subr.mxu0 0.0
    %621 = vmatpush1.msra.mxu0 0.0
    %622 = vmatprep.subr.mxu0 0.0
    %623 = vmatpush1.msra.mxu0 0.0
    %624 = vmatprep.subr.mxu0 0.0
    %625 = vmatpush1.msra.mxu0 0.0
    %626 = vmatprep.subr.mxu0 0.0
    %627 = vmatpush1.msra.mxu0 0.0
    %628 = vmatprep.subr.mxu0 0.0
    %v629 = vand.u32 %v48, 4294901760
    %v630 = vsub.f32 %v48, %v629
    %v631 = vand.u32 %v630, 4294901760
    %v632 = vsub.f32 %v630, %v631
    %v633 = vand.u32 %v632, 4294901760
    %634 = vmatpush1.msra.mxu0 %v633
    %635 = vmatprep.subr.mxu0 0.0
    %636 = vmatpush2.msra.mxu0 0.0
    %637 = vmatprep.subr.mxu0 0.0
    %638 = vmatpush2.msra.mxu0 0.0
    %639 = vmatprep.subr.mxu0 0.0
    %640 = vmatpush2.msra.mxu0 0.0
    %641 = vmatprep.subr.mxu0 0.0
    %642 = vmatpush2.msra.mxu0 0.0
    %643 = vmatprep.subr.mxu0 0.0
    %644 = vmatpush2.msra.mxu0 0.0
    %645 = vmatprep.subr.mxu0 0.0
    %646 = vmatpush2.msra.mxu0 0.0
    %647 = vmatprep.subr.mxu0 0.0
    %648 = vmatpush2.msra.mxu0 0.0
    %649 = vmatprep.subr.mxu0 0.0
    %650 = vmatpush2.msra.mxu0 0.0
    %651 = vmatprep.subr.mxu0 0.0
    %652 = vmatpush2.msra.mxu0 0.0
    %653 = vmatprep.subr.mxu0 0.0
    %654 = vmatpush2.msra.mxu0 0.0
    %655 = vmatprep.subr.mxu0 0.0
    %656 = vmatpush2.msra.mxu0 0.0
    %657 = vmatprep.subr.mxu0 0.0
    %658 = vmatpush2.msra.mxu0 0.0
    %659 = vmatprep.subr.mxu0 0.0
    %660 = vmatpush2.msra.mxu0 0.0
    %661 = vmatprep.subr.mxu0 0.0
    %662 = vmatpush2.msra.mxu0 0.0
    %663 = vmatprep.subr.mxu0 0.0
    %664 = vmatpush2.msra.mxu0 0.0
    %665 = vmatprep.subr.mxu0 0.0
    %666 = vmatpush2.msra.mxu0 0.0
    %667 = vmatprep.mubr.f32.mxu0 0.0
    %v668 = vand.u32 %v520, 4294901760
    %669 = vmatmul.mubr.f32.gmra.mxu0 %v668
    %v670 = vpop.f32.mrf.mxu0
    %v671 = vadd.f32 %v595, %v670
    %v672 = vpop.f32.mrf.mxu0
    %673 = vdwg.mxu0
    %674 = vmatprep.subr.mxu0 0.0
    %675 = vmatpush1.msra.mxu0 0.0
    %676 = vmatprep.subr.mxu0 0.0
    %677 = vmatpush1.msra.mxu0 0.0
    %678 = vmatprep.subr.mxu0 0.0
    %679 = vmatpush1.msra.mxu0 0.0
    %680 = vmatprep.subr.mxu0 0.0
    %681 = vmatpush1.msra.mxu0 0.0
    %682 = vmatprep.subr.mxu0 0.0
    %683 = vmatpush1.msra.mxu0 0.0
    %684 = vmatprep.subr.mxu0 0.0
    %685 = vmatpush1.msra.mxu0 0.0
    %686 = vmatprep.subr.mxu0 0.0
    %687 = vmatpush1.msra.mxu0 0.0
    %688 = vmatprep.subr.mxu0 0.0
    %689 = vmatpush1.msra.mxu0 0.0
    %690 = vmatprep.subr.mxu0 0.0
    %691 = vmatpush1.msra.mxu0 0.0
    %692 = vmatprep.subr.mxu0 0.0
    %693 = vmatpush1.msra.mxu0 0.0
    %694 = vmatprep.subr.mxu0 0.0
    %695 = vmatpush1.msra.mxu0 0.0
    %696 = vmatprep.subr.mxu0 0.0
    %697 = vmatpush1.msra.mxu0 0.0
    %698 = vmatprep.subr.mxu0 0.0
    %699 = vmatpush1.msra.mxu0 0.0
    %700 = vmatprep.subr.mxu0 0.0
    %701 = vmatpush1.msra.mxu0 0.0
    %702 = vmatprep.subr.mxu0 0.0
    %703 = vmatpush1.msra.mxu0 0.0
    %704 = vmatprep.subr.mxu0 0.0
    %v705 = vand.u32 %v48, 4294901760
    %v706 = vsub.f32 %v48, %v705
    %707 = vmatpush1.msra.mxu0 %v706
    %708 = vmatprep.subr.mxu0 0.0
    %709 = vmatpush2.msra.mxu0 0.0
    %710 = vmatprep.subr.mxu0 0.0
    %711 = vmatpush2.msra.mxu0 0.0
    %712 = vmatprep.subr.mxu0 0.0
    %713 = vmatpush2.msra.mxu0 0.0
    %714 = vmatprep.subr.mxu0 0.0
    %715 = vmatpush2.msra.mxu0 0.0
    %716 = vmatprep.subr.mxu0 0.0
    %717 = vmatpush2.msra.mxu0 0.0
    %718 = vmatprep.subr.mxu0 0.0
    %719 = vmatpush2.msra.mxu0 0.0
    %720 = vmatprep.subr.mxu0 0.0
    %721 = vmatpush2.msra.mxu0 0.0
    %722 = vmatprep.subr.mxu0 0.0
    %723 = vmatpush2.msra.mxu0 0.0
    %724 = vmatprep.subr.mxu0 0.0
    %725 = vmatpush2.msra.mxu0 0.0
    %726 = vmatprep.subr.mxu0 0.0
    %727 = vmatpush2.msra.mxu0 0.0
    %728 = vmatprep.subr.mxu0 0.0
    %729 = vmatpush2.msra.mxu0 0.0
    %730 = vmatprep.subr.mxu0 0.0
    %731 = vmatpush2.msra.mxu0 0.0
    %732 = vmatprep.subr.mxu0 0.0
    %733 = vmatpush2.msra.mxu0 0.0
    %734 = vmatprep.subr.mxu0 0.0
    %735 = vmatpush2.msra.mxu0 0.0
    %736 = vmatprep.subr.mxu0 0.0
    %737 = vmatpush2.msra.mxu0 0.0
    %738 = vmatprep.subr.mxu0 0.0
    %739 = vmatpush2.msra.mxu0 0.0
    %740 = vmatprep.mubr.f32.mxu0 0.0
    %v741 = vand.u32 %v520, 4294901760
    %v742 = vsub.f32 %v520, %v741
    %743 = vmatmul.mubr.f32.gmra.mxu0 %v742
    %v744 = vpop.f32.mrf.mxu0
    %v745 = vadd.f32 %v671, %v744
    %v746 = vpop.f32.mrf.mxu0
    %747 = vdwg.mxu0
    %748 = vmatprep.subr.mxu0 0.0
    %749 = vmatpush1.msra.mxu0 0.0
    %750 = vmatprep.subr.mxu0 0.0
    %751 = vmatpush1.msra.mxu0 0.0
    %752 = vmatprep.subr.mxu0 0.0
    %753 = vmatpush1.msra.mxu0 0.0
    %754 = vmatprep.subr.mxu0 0.0
    %755 = vmatpush1.msra.mxu0 0.0
    %756 = vmatprep.subr.mxu0 0.0
    %757 = vmatpush1.msra.mxu0 0.0
    %758 = vmatprep.subr.mxu0 0.0
    %759 = vmatpush1.msra.mxu0 0.0
    %760 = vmatprep.subr.mxu0 0.0
    %761 = vmatpush1.msra.mxu0 0.0
    %762 = vmatprep.subr.mxu0 0.0
    %763 = vmatpush1.msra.mxu0 0.0
    %764 = vmatprep.subr.mxu0 0.0
    %765 = vmatpush1.msra.mxu0 0.0
    %766 = vmatprep.subr.mxu0 0.0
    %767 = vmatpush1.msra.mxu0 0.0
    %768 = vmatprep.subr.mxu0 0.0
    %769 = vmatpush1.msra.mxu0 0.0
    %770 = vmatprep.subr.mxu0 0.0
    %771 = vmatpush1.msra.mxu0 0.0
    %772 = vmatprep.subr.mxu0 0.0
    %773 = vmatpush1.msra.mxu0 0.0
    %774 = vmatprep.subr.mxu0 0.0
    %775 = vmatpush1.msra.mxu0 0.0
    %776 = vmatprep.subr.mxu0 0.0
    %777 = vmatpush1.msra.mxu0 0.0
    %778 = vmatprep.subr.mxu0 0.0
    %v779 = vand.u32 %v48, 4294901760
    %780 = vmatpush1.msra.mxu0 %v779
    %781 = vmatprep.subr.mxu0 0.0
    %782 = vmatpush2.msra.mxu0 0.0
    %783 = vmatprep.subr.mxu0 0.0
    %784 = vmatpush2.msra.mxu0 0.0
    %785 = vmatprep.subr.mxu0 0.0
    %786 = vmatpush2.msra.mxu0 0.0
    %787 = vmatprep.subr.mxu0 0.0
    %788 = vmatpush2.msra.mxu0 0.0
    %789 = vmatprep.subr.mxu0 0.0
    %790 = vmatpush2.msra.mxu0 0.0
    %791 = vmatprep.subr.mxu0 0.0
    %792 = vmatpush2.msra.mxu0 0.0
    %793 = vmatprep.subr.mxu0 0.0
    %794 = vmatpush2.msra.mxu0 0.0
    %795 = vmatprep.subr.mxu0 0.0
    %796 = vmatpush2.msra.mxu0 0.0
    %797 = vmatprep.subr.mxu0 0.0
    %798 = vmatpush2.msra.mxu0 0.0
    %799 = vmatprep.subr.mxu0 0.0
    %800 = vmatpush2.msra.mxu0 0.0
    %801 = vmatprep.subr.mxu0 0.0
    %802 = vmatpush2.msra.mxu0 0.0
    %803 = vmatprep.subr.mxu0 0.0
    %804 = vmatpush2.msra.mxu0 0.0
    %805 = vmatprep.subr.mxu0 0.0
    %806 = vmatpush2.msra.mxu0 0.0
    %807 = vmatprep.subr.mxu0 0.0
    %808 = vmatpush2.msra.mxu0 0.0
    %809 = vmatprep.subr.mxu0 0.0
    %810 = vmatpush2.msra.mxu0 0.0
    %811 = vmatprep.subr.mxu0 0.0
    %812 = vmatpush2.msra.mxu0 0.0
    %813 = vmatprep.mubr.f32.mxu0 0.0
    %v814 = vand.u32 %v520, 4294901760
    %v815 = vsub.f32 %v520, %v814
    %v816 = vand.u32 %v815, 4294901760
    %817 = vmatmul.mubr.f32.gmra.mxu0 %v816
    %v818 = vpop.f32.mrf.mxu0
    %v819 = vadd.f32 %v745, %v818
    %v820 = vpop.f32.mrf.mxu0
    %821 = vdwg.mxu0
    %822 = vmatprep.subr.mxu0 0.0
    %823 = vmatpush1.msra.mxu0 0.0
    %824 = vmatprep.subr.mxu0 0.0
    %825 = vmatpush1.msra.mxu0 0.0
    %826 = vmatprep.subr.mxu0 0.0
    %827 = vmatpush1.msra.mxu0 0.0
    %828 = vmatprep.subr.mxu0 0.0
    %829 = vmatpush1.msra.mxu0 0.0
    %830 = vmatprep.subr.mxu0 0.0
    %831 = vmatpush1.msra.mxu0 0.0
    %832 = vmatprep.subr.mxu0 0.0
    %833 = vmatpush1.msra.mxu0 0.0
    %834 = vmatprep.subr.mxu0 0.0
    %835 = vmatpush1.msra.mxu0 0.0
    %836 = vmatprep.subr.mxu0 0.0
    %837 = vmatpush1.msra.mxu0 0.0
    %838 = vmatprep.subr.mxu0 0.0
    %839 = vmatpush1.msra.mxu0 0.0
    %840 = vmatprep.subr.mxu0 0.0
    %841 = vmatpush1.msra.mxu0 0.0
    %842 = vmatprep.subr.mxu0 0.0
    %843 = vmatpush1.msra.mxu0 0.0
    %844 = vmatprep.subr.mxu0 0.0
    %845 = vmatpush1.msra.mxu0 0.0
    %846 = vmatprep.subr.mxu0 0.0
    %847 = vmatpush1.msra.mxu0 0.0
    %848 = vmatprep.subr.mxu0 0.0
    %849 = vmatpush1.msra.mxu0 0.0
    %850 = vmatprep.subr.mxu0 0.0
    %851 = vmatpush1.msra.mxu0 0.0
    %852 = vmatprep.subr.mxu0 0.0
    %v853 = vand.u32 %v48, 4294901760
    %v854 = vsub.f32 %v48, %v853
    %v855 = vand.u32 %v854, 4294901760
    %856 = vmatpush1.msra.mxu0 %v855
    %857 = vmatprep.subr.mxu0 0.0
    %858 = vmatpush2.msra.mxu0 0.0
    %859 = vmatprep.subr.mxu0 0.0
    %860 = vmatpush2.msra.mxu0 0.0
    %861 = vmatprep.subr.mxu0 0.0
    %862 = vmatpush2.msra.mxu0 0.0
    %863 = vmatprep.subr.mxu0 0.0
    %864 = vmatpush2.msra.mxu0 0.0
    %865 = vmatprep.subr.mxu0 0.0
    %866 = vmatpush2.msra.mxu0 0.0
    %867 = vmatprep.subr.mxu0 0.0
    %868 = vmatpush2.msra.mxu0 0.0
    %869 = vmatprep.subr.mxu0 0.0
    %870 = vmatpush2.msra.mxu0 0.0
    %871 = vmatprep.subr.mxu0 0.0
    %872 = vmatpush2.msra.mxu0 0.0
    %873 = vmatprep.subr.mxu0 0.0
    %874 = vmatpush2.msra.mxu0 0.0
    %875 = vmatprep.subr.mxu0 0.0
    %876 = vmatpush2.msra.mxu0 0.0
    %877 = vmatprep.subr.mxu0 0.0
    %878 = vmatpush2.msra.mxu0 0.0
    %879 = vmatprep.subr.mxu0 0.0
    %880 = vmatpush2.msra.mxu0 0.0
    %881 = vmatprep.subr.mxu0 0.0
    %882 = vmatpush2.msra.mxu0 0.0
    %883 = vmatprep.subr.mxu0 0.0
    %884 = vmatpush2.msra.mxu0 0.0
    %885 = vmatprep.subr.mxu0 0.0
    %886 = vmatpush2.msra.mxu0 0.0
    %887 = vmatprep.subr.mxu0 0.0
    %888 = vmatpush2.msra.mxu0 0.0
    %889 = vmatprep.mubr.f32.mxu0 0.0
    %v890 = vand.u32 %v520, 4294901760
    %891 = vmatmul.mubr.f32.gmra.mxu0 %v890
    %v892 = vpop.f32.mrf.mxu0
    %v893 = vadd.f32 %v819, %v892
    %v894 = vpop.f32.mrf.mxu0
    %895 = vdwg.mxu0
    %896 = vmatprep.subr.mxu0 0.0
    %897 = vmatpush1.msra.mxu0 0.0
    %898 = vmatprep.subr.mxu0 0.0
    %899 = vmatpush1.msra.mxu0 0.0
    %900 = vmatprep.subr.mxu0 0.0
    %901 = vmatpush1.msra.mxu0 0.0
    %902 = vmatprep.subr.mxu0 0.0
    %903 = vmatpush1.msra.mxu0 0.0
    %904 = vmatprep.subr.mxu0 0.0
    %905 = vmatpush1.msra.mxu0 0.0
    %906 = vmatprep.subr.mxu0 0.0
    %907 = vmatpush1.msra.mxu0 0.0
    %908 = vmatprep.subr.mxu0 0.0
    %909 = vmatpush1.msra.mxu0 0.0
    %910 = vmatprep.subr.mxu0 0.0
    %911 = vmatpush1.msra.mxu0 0.0
    %912 = vmatprep.subr.mxu0 0.0
    %913 = vmatpush1.msra.mxu0 0.0
    %914 = vmatprep.subr.mxu0 0.0
    %915 = vmatpush1.msra.mxu0 0.0
    %916 = vmatprep.subr.mxu0 0.0
    %917 = vmatpush1.msra.mxu0 0.0
    %918 = vmatprep.subr.mxu0 0.0
    %919 = vmatpush1.msra.mxu0 0.0
    %920 = vmatprep.subr.mxu0 0.0
    %921 = vmatpush1.msra.mxu0 0.0
    %922 = vmatprep.subr.mxu0 0.0
    %923 = vmatpush1.msra.mxu0 0.0
    %924 = vmatprep.subr.mxu0 0.0
    %925 = vmatpush1.msra.mxu0 0.0
    %926 = vmatprep.subr.mxu0 0.0
    %v927 = vand.u32 %v48, 4294901760
    %928 = vmatpush1.msra.mxu0 %v927
    %929 = vmatprep.subr.mxu0 0.0
    %930 = vmatpush2.msra.mxu0 0.0
    %931 = vmatprep.subr.mxu0 0.0
    %932 = vmatpush2.msra.mxu0 0.0
    %933 = vmatprep.subr.mxu0 0.0
    %934 = vmatpush2.msra.mxu0 0.0
    %935 = vmatprep.subr.mxu0 0.0
    %936 = vmatpush2.msra.mxu0 0.0
    %937 = vmatprep.subr.mxu0 0.0
    %938 = vmatpush2.msra.mxu0 0.0
    %939 = vmatprep.subr.mxu0 0.0
    %940 = vmatpush2.msra.mxu0 0.0
    %941 = vmatprep.subr.mxu0 0.0
    %942 = vmatpush2.msra.mxu0 0.0
    %943 = vmatprep.subr.mxu0 0.0
    %944 = vmatpush2.msra.mxu0 0.0
    %945 = vmatprep.subr.mxu0 0.0
    %946 = vmatpush2.msra.mxu0 0.0
    %947 = vmatprep.subr.mxu0 0.0
    %948 = vmatpush2.msra.mxu0 0.0
    %949 = vmatprep.subr.mxu0 0.0
    %950 = vmatpush2.msra.mxu0 0.0
    %951 = vmatprep.subr.mxu0 0.0
    %952 = vmatpush2.msra.mxu0 0.0
    %953 = vmatprep.subr.mxu0 0.0
    %954 = vmatpush2.msra.mxu0 0.0
    %955 = vmatprep.subr.mxu0 0.0
    %956 = vmatpush2.msra.mxu0 0.0
    %957 = vmatprep.subr.mxu0 0.0
    %958 = vmatpush2.msra.mxu0 0.0
    %959 = vmatprep.subr.mxu0 0.0
    %960 = vmatpush2.msra.mxu0 0.0
    %961 = vmatprep.mubr.f32.mxu0 0.0
    %v962 = vand.u32 %v520, 4294901760
    %963 = vmatmul.mubr.f32.gmra.mxu0 %v962
    %v964 = vpop.f32.mrf.mxu0
    %v965 = vadd.f32 %v893, %v964
    %v966 = vpop.f32.mrf.mxu0
    %967 = vdwg.mxu0
    %969 = vset.pattern.permute.xlu0 0
    %970 = vperm.xlu0 %969, %v45
    %v971 = vpop.permute.xlu0 %970
    %v973 = vadd.f32 %v965, %v971
    %v975 = vsel %vm69, %v44, 0
    %977 = vmatprep.subr.mxu0 0.0
    %978 = vmatpush1.msra.mxu0 0.0
    %979 = vmatprep.subr.mxu0 0.0
    %980 = vmatpush1.msra.mxu0 0.0
    %981 = vmatprep.subr.mxu0 0.0
    %982 = vmatpush1.msra.mxu0 0.0
    %983 = vmatprep.subr.mxu0 0.0
    %984 = vmatpush1.msra.mxu0 0.0
    %985 = vmatprep.subr.mxu0 0.0
    %986 = vmatpush1.msra.mxu0 0.0
    %987 = vmatprep.subr.mxu0 0.0
    %988 = vmatpush1.msra.mxu0 0.0
    %989 = vmatprep.subr.mxu0 0.0
    %990 = vmatpush1.msra.mxu0 0.0
    %991 = vmatprep.subr.mxu0 0.0
    %992 = vmatpush1.msra.mxu0 0.0
    %993 = vmatprep.subr.mxu0 0.0
    %994 = vmatpush1.msra.mxu0 0.0
    %995 = vmatprep.subr.mxu0 0.0
    %996 = vmatpush1.msra.mxu0 0.0
    %997 = vmatprep.subr.mxu0 0.0
    %998 = vmatpush1.msra.mxu0 0.0
    %999 = vmatprep.subr.mxu0 0.0
    %1000 = vmatpush1.msra.mxu0 0.0
    %1001 = vmatprep.subr.mxu0 0.0
    %1002 = vmatpush1.msra.mxu0 0.0
    %1003 = vmatprep.subr.mxu0 0.0
    %1004 = vmatpush1.msra.mxu0 0.0
    %1005 = vmatprep.subr.mxu0 0.0
    %1006 = vmatpush1.msra.mxu0 0.0
    %1007 = vmatprep.subr.mxu0 0.0
    %v1008 = vand.u32 %v68, 4294901760
    %1009 = vmatpush1.msra.mxu0 %v1008
    %1010 = vmatprep.subr.mxu0 0.0
    %1011 = vmatpush2.msra.mxu0 0.0
    %1012 = vmatprep.subr.mxu0 0.0
    %1013 = vmatpush2.msra.mxu0 0.0
    %1014 = vmatprep.subr.mxu0 0.0
    %1015 = vmatpush2.msra.mxu0 0.0
    %1016 = vmatprep.subr.mxu0 0.0
    %1017 = vmatpush2.msra.mxu0 0.0
    %1018 = vmatprep.subr.mxu0 0.0
    %1019 = vmatpush2.msra.mxu0 0.0
    %1020 = vmatprep.subr.mxu0 0.0
    %1021 = vmatpush2.msra.mxu0 0.0
    %1022 = vmatprep.subr.mxu0 0.0
    %1023 = vmatpush2.msra.mxu0 0.0
    %1024 = vmatprep.subr.mxu0 0.0
    %1025 = vmatpush2.msra.mxu0 0.0
    %1026 = vmatprep.subr.mxu0 0.0
    %1027 = vmatpush2.msra.mxu0 0.0
    %1028 = vmatprep.subr.mxu0 0.0
    %1029 = vmatpush2.msra.mxu0 0.0
    %1030 = vmatprep.subr.mxu0 0.0
    %1031 = vmatpush2.msra.mxu0 0.0
    %1032 = vmatprep.subr.mxu0 0.0
    %1033 = vmatpush2.msra.mxu0 0.0
    %1034 = vmatprep.subr.mxu0 0.0
    %1035 = vmatpush2.msra.mxu0 0.0
    %1036 = vmatprep.subr.mxu0 0.0
    %1037 = vmatpush2.msra.mxu0 0.0
    %1038 = vmatprep.subr.mxu0 0.0
    %1039 = vmatpush2.msra.mxu0 0.0
    %1040 = vmatprep.subr.mxu0 0.0
    %1041 = vmatpush2.msra.mxu0 0.0
    %1042 = vmatprep.mubr.f32.mxu0 0.0
    %v1043 = vand.u32 %v975, 4294901760
    %v1044 = vsub.f32 %v975, %v1043
    %v1045 = vand.u32 %v1044, 4294901760
    %v1046 = vsub.f32 %v1044, %v1045
    %v1047 = vand.u32 %v1046, 4294901760
    %1048 = vmatmul.mubr.f32.gmra.mxu0 %v1047
    %v1049 = vpop.f32.mrf.mxu0
    %v1050 = vadd.f32 0.0, %v1049
    %v1051 = vpop.f32.mrf.mxu0
    %1052 = vdwg.mxu0
    %1053 = vmatprep.subr.mxu0 0.0
    %1054 = vmatpush1.msra.mxu0 0.0
    %1055 = vmatprep.subr.mxu0 0.0
    %1056 = vmatpush1.msra.mxu0 0.0
    %1057 = vmatprep.subr.mxu0 0.0
    %1058 = vmatpush1.msra.mxu0 0.0
    %1059 = vmatprep.subr.mxu0 0.0
    %1060 = vmatpush1.msra.mxu0 0.0
    %1061 = vmatprep.subr.mxu0 0.0
    %1062 = vmatpush1.msra.mxu0 0.0
    %1063 = vmatprep.subr.mxu0 0.0
    %1064 = vmatpush1.msra.mxu0 0.0
    %1065 = vmatprep.subr.mxu0 0.0
    %1066 = vmatpush1.msra.mxu0 0.0
    %1067 = vmatprep.subr.mxu0 0.0
    %1068 = vmatpush1.msra.mxu0 0.0
    %1069 = vmatprep.subr.mxu0 0.0
    %1070 = vmatpush1.msra.mxu0 0.0
    %1071 = vmatprep.subr.mxu0 0.0
    %1072 = vmatpush1.msra.mxu0 0.0
    %1073 = vmatprep.subr.mxu0 0.0
    %1074 = vmatpush1.msra.mxu0 0.0
    %1075 = vmatprep.subr.mxu0 0.0
    %1076 = vmatpush1.msra.mxu0 0.0
    %1077 = vmatprep.subr.mxu0 0.0
    %1078 = vmatpush1.msra.mxu0 0.0
    %1079 = vmatprep.subr.mxu0 0.0
    %1080 = vmatpush1.msra.mxu0 0.0
    %1081 = vmatprep.subr.mxu0 0.0
    %1082 = vmatpush1.msra.mxu0 0.0
    %1083 = vmatprep.subr.mxu0 0.0
    %v1084 = vand.u32 %v68, 4294901760
    %v1085 = vsub.f32 %v68, %v1084
    %v1086 = vand.u32 %v1085, 4294901760
    %v1087 = vsub.f32 %v1085, %v1086
    %v1088 = vand.u32 %v1087, 4294901760
    %1089 = vmatpush1.msra.mxu0 %v1088
    %1090 = vmatprep.subr.mxu0 0.0
    %1091 = vmatpush2.msra.mxu0 0.0
    %1092 = vmatprep.subr.mxu0 0.0
    %1093 = vmatpush2.msra.mxu0 0.0
    %1094 = vmatprep.subr.mxu0 0.0
    %1095 = vmatpush2.msra.mxu0 0.0
    %1096 = vmatprep.subr.mxu0 0.0
    %1097 = vmatpush2.msra.mxu0 0.0
    %1098 = vmatprep.subr.mxu0 0.0
    %1099 = vmatpush2.msra.mxu0 0.0
    %1100 = vmatprep.subr.mxu0 0.0
    %1101 = vmatpush2.msra.mxu0 0.0
    %1102 = vmatprep.subr.mxu0 0.0
    %1103 = vmatpush2.msra.mxu0 0.0
    %1104 = vmatprep.subr.mxu0 0.0
    %1105 = vmatpush2.msra.mxu0 0.0
    %1106 = vmatprep.subr.mxu0 0.0
    %1107 = vmatpush2.msra.mxu0 0.0
    %1108 = vmatprep.subr.mxu0 0.0
    %1109 = vmatpush2.msra.mxu0 0.0
    %1110 = vmatprep.subr.mxu0 0.0
    %1111 = vmatpush2.msra.mxu0 0.0
    %1112 = vmatprep.subr.mxu0 0.0
    %1113 = vmatpush2.msra.mxu0 0.0
    %1114 = vmatprep.subr.mxu0 0.0
    %1115 = vmatpush2.msra.mxu0 0.0
    %1116 = vmatprep.subr.mxu0 0.0
    %1117 = vmatpush2.msra.mxu0 0.0
    %1118 = vmatprep.subr.mxu0 0.0
    %1119 = vmatpush2.msra.mxu0 0.0
    %1120 = vmatprep.subr.mxu0 0.0
    %1121 = vmatpush2.msra.mxu0 0.0
    %1122 = vmatprep.mubr.f32.mxu0 0.0
    %v1123 = vand.u32 %v975, 4294901760
    %1124 = vmatmul.mubr.f32.gmra.mxu0 %v1123
    %v1125 = vpop.f32.mrf.mxu0
    %v1126 = vadd.f32 %v1050, %v1125
    %v1127 = vpop.f32.mrf.mxu0
    %1128 = vdwg.mxu0
    %1129 = vmatprep.subr.mxu0 0.0
    %1130 = vmatpush1.msra.mxu0 0.0
    %1131 = vmatprep.subr.mxu0 0.0
    %1132 = vmatpush1.msra.mxu0 0.0
    %1133 = vmatprep.subr.mxu0 0.0
    %1134 = vmatpush1.msra.mxu0 0.0
    %1135 = vmatprep.subr.mxu0 0.0
    %1136 = vmatpush1.msra.mxu0 0.0
    %1137 = vmatprep.subr.mxu0 0.0
    %1138 = vmatpush1.msra.mxu0 0.0
    %1139 = vmatprep.subr.mxu0 0.0
    %1140 = vmatpush1.msra.mxu0 0.0
    %1141 = vmatprep.subr.mxu0 0.0
    %1142 = vmatpush1.msra.mxu0 0.0
    %1143 = vmatprep.subr.mxu0 0.0
    %1144 = vmatpush1.msra.mxu0 0.0
    %1145 = vmatprep.subr.mxu0 0.0
    %1146 = vmatpush1.msra.mxu0 0.0
    %1147 = vmatprep.subr.mxu0 0.0
    %1148 = vmatpush1.msra.mxu0 0.0
    %1149 = vmatprep.subr.mxu0 0.0
    %1150 = vmatpush1.msra.mxu0 0.0
    %1151 = vmatprep.subr.mxu0 0.0
    %1152 = vmatpush1.msra.mxu0 0.0
    %1153 = vmatprep.subr.mxu0 0.0
    %1154 = vmatpush1.msra.mxu0 0.0
    %1155 = vmatprep.subr.mxu0 0.0
    %1156 = vmatpush1.msra.mxu0 0.0
    %1157 = vmatprep.subr.mxu0 0.0
    %1158 = vmatpush1.msra.mxu0 0.0
    %1159 = vmatprep.subr.mxu0 0.0
    %v1160 = vand.u32 %v68, 4294901760
    %v1161 = vsub.f32 %v68, %v1160
    %1162 = vmatpush1.msra.mxu0 %v1161
    %1163 = vmatprep.subr.mxu0 0.0
    %1164 = vmatpush2.msra.mxu0 0.0
    %1165 = vmatprep.subr.mxu0 0.0
    %1166 = vmatpush2.msra.mxu0 0.0
    %1167 = vmatprep.subr.mxu0 0.0
    %1168 = vmatpush2.msra.mxu0 0.0
    %1169 = vmatprep.subr.mxu0 0.0
    %1170 = vmatpush2.msra.mxu0 0.0
    %1171 = vmatprep.subr.mxu0 0.0
    %1172 = vmatpush2.msra.mxu0 0.0
    %1173 = vmatprep.subr.mxu0 0.0
    %1174 = vmatpush2.msra.mxu0 0.0
    %1175 = vmatprep.subr.mxu0 0.0
    %1176 = vmatpush2.msra.mxu0 0.0
    %1177 = vmatprep.subr.mxu0 0.0
    %1178 = vmatpush2.msra.mxu0 0.0
    %1179 = vmatprep.subr.mxu0 0.0
    %1180 = vmatpush2.msra.mxu0 0.0
    %1181 = vmatprep.subr.mxu0 0.0
    %1182 = vmatpush2.msra.mxu0 0.0
    %1183 = vmatprep.subr.mxu0 0.0
    %1184 = vmatpush2.msra.mxu0 0.0
    %1185 = vmatprep.subr.mxu0 0.0
    %1186 = vmatpush2.msra.mxu0 0.0
    %1187 = vmatprep.subr.mxu0 0.0
    %1188 = vmatpush2.msra.mxu0 0.0
    %1189 = vmatprep.subr.mxu0 0.0
    %1190 = vmatpush2.msra.mxu0 0.0
    %1191 = vmatprep.subr.mxu0 0.0
    %1192 = vmatpush2.msra.mxu0 0.0
    %1193 = vmatprep.subr.mxu0 0.0
    %1194 = vmatpush2.msra.mxu0 0.0
    %1195 = vmatprep.mubr.f32.mxu0 0.0
    %v1196 = vand.u32 %v975, 4294901760
    %v1197 = vsub.f32 %v975, %v1196
    %1198 = vmatmul.mubr.f32.gmra.mxu0 %v1197
    %v1199 = vpop.f32.mrf.mxu0
    %v1200 = vadd.f32 %v1126, %v1199
    %v1201 = vpop.f32.mrf.mxu0
    %1202 = vdwg.mxu0
    %1203 = vmatprep.subr.mxu0 0.0
    %1204 = vmatpush1.msra.mxu0 0.0
    %1205 = vmatprep.subr.mxu0 0.0
    %1206 = vmatpush1.msra.mxu0 0.0
    %1207 = vmatprep.subr.mxu0 0.0
    %1208 = vmatpush1.msra.mxu0 0.0
    %1209 = vmatprep.subr.mxu0 0.0
    %1210 = vmatpush1.msra.mxu0 0.0
    %1211 = vmatprep.subr.mxu0 0.0
    %1212 = vmatpush1.msra.mxu0 0.0
    %1213 = vmatprep.subr.mxu0 0.0
    %1214 = vmatpush1.msra.mxu0 0.0
    %1215 = vmatprep.subr.mxu0 0.0
    %1216 = vmatpush1.msra.mxu0 0.0
    %1217 = vmatprep.subr.mxu0 0.0
    %1218 = vmatpush1.msra.mxu0 0.0
    %1219 = vmatprep.subr.mxu0 0.0
    %1220 = vmatpush1.msra.mxu0 0.0
    %1221 = vmatprep.subr.mxu0 0.0
    %1222 = vmatpush1.msra.mxu0 0.0
    %1223 = vmatprep.subr.mxu0 0.0
    %1224 = vmatpush1.msra.mxu0 0.0
    %1225 = vmatprep.subr.mxu0 0.0
    %1226 = vmatpush1.msra.mxu0 0.0
    %1227 = vmatprep.subr.mxu0 0.0
    %1228 = vmatpush1.msra.mxu0 0.0
    %1229 = vmatprep.subr.mxu0 0.0
    %1230 = vmatpush1.msra.mxu0 0.0
    %1231 = vmatprep.subr.mxu0 0.0
    %1232 = vmatpush1.msra.mxu0 0.0
    %1233 = vmatprep.subr.mxu0 0.0
    %v1234 = vand.u32 %v68, 4294901760
    %1235 = vmatpush1.msra.mxu0 %v1234
    %1236 = vmatprep.subr.mxu0 0.0
    %1237 = vmatpush2.msra.mxu0 0.0
    %1238 = vmatprep.subr.mxu0 0.0
    %1239 = vmatpush2.msra.mxu0 0.0
    %1240 = vmatprep.subr.mxu0 0.0
    %1241 = vmatpush2.msra.mxu0 0.0
    %1242 = vmatprep.subr.mxu0 0.0
    %1243 = vmatpush2.msra.mxu0 0.0
    %1244 = vmatprep.subr.mxu0 0.0
    %1245 = vmatpush2.msra.mxu0 0.0
    %1246 = vmatprep.subr.mxu0 0.0
    %1247 = vmatpush2.msra.mxu0 0.0
    %1248 = vmatprep.subr.mxu0 0.0
    %1249 = vmatpush2.msra.mxu0 0.0
    %1250 = vmatprep.subr.mxu0 0.0
    %1251 = vmatpush2.msra.mxu0 0.0
    %1252 = vmatprep.subr.mxu0 0.0
    %1253 = vmatpush2.msra.mxu0 0.0
    %1254 = vmatprep.subr.mxu0 0.0
    %1255 = vmatpush2.msra.mxu0 0.0
    %1256 = vmatprep.subr.mxu0 0.0
    %1257 = vmatpush2.msra.mxu0 0.0
    %1258 = vmatprep.subr.mxu0 0.0
    %1259 = vmatpush2.msra.mxu0 0.0
    %1260 = vmatprep.subr.mxu0 0.0
    %1261 = vmatpush2.msra.mxu0 0.0
    %1262 = vmatprep.subr.mxu0 0.0
    %1263 = vmatpush2.msra.mxu0 0.0
    %1264 = vmatprep.subr.mxu0 0.0
    %1265 = vmatpush2.msra.mxu0 0.0
    %1266 = vmatprep.subr.mxu0 0.0
    %1267 = vmatpush2.msra.mxu0 0.0
    %1268 = vmatprep.mubr.f32.mxu0 0.0
    %v1269 = vand.u32 %v975, 4294901760
    %v1270 = vsub.f32 %v975, %v1269
    %v1271 = vand.u32 %v1270, 4294901760
    %1272 = vmatmul.mubr.f32.gmra.mxu0 %v1271
    %v1273 = vpop.f32.mrf.mxu0
    %v1274 = vadd.f32 %v1200, %v1273
    %v1275 = vpop.f32.mrf.mxu0
    %1276 = vdwg.mxu0
    %1277 = vmatprep.subr.mxu0 0.0
    %1278 = vmatpush1.msra.mxu0 0.0
    %1279 = vmatprep.subr.mxu0 0.0
    %1280 = vmatpush1.msra.mxu0 0.0
    %1281 = vmatprep.subr.mxu0 0.0
    %1282 = vmatpush1.msra.mxu0 0.0
    %1283 = vmatprep.subr.mxu0 0.0
    %1284 = vmatpush1.msra.mxu0 0.0
    %1285 = vmatprep.subr.mxu0 0.0
    %1286 = vmatpush1.msra.mxu0 0.0
    %1287 = vmatprep.subr.mxu0 0.0
    %1288 = vmatpush1.msra.mxu0 0.0
    %1289 = vmatprep.subr.mxu0 0.0
    %1290 = vmatpush1.msra.mxu0 0.0
    %1291 = vmatprep.subr.mxu0 0.0
    %1292 = vmatpush1.msra.mxu0 0.0
    %1293 = vmatprep.subr.mxu0 0.0
    %1294 = vmatpush1.msra.mxu0 0.0
    %1295 = vmatprep.subr.mxu0 0.0
    %1296 = vmatpush1.msra.mxu0 0.0
    %1297 = vmatprep.subr.mxu0 0.0
    %1298 = vmatpush1.msra.mxu0 0.0
    %1299 = vmatprep.subr.mxu0 0.0
    %1300 = vmatpush1.msra.mxu0 0.0
    %1301 = vmatprep.subr.mxu0 0.0
    %1302 = vmatpush1.msra.mxu0 0.0
    %1303 = vmatprep.subr.mxu0 0.0
    %1304 = vmatpush1.msra.mxu0 0.0
    %1305 = vmatprep.subr.mxu0 0.0
    %1306 = vmatpush1.msra.mxu0 0.0
    %1307 = vmatprep.subr.mxu0 0.0
    %v1308 = vand.u32 %v68, 4294901760
    %v1309 = vsub.f32 %v68, %v1308
    %v1310 = vand.u32 %v1309, 4294901760
    %1311 = vmatpush1.msra.mxu0 %v1310
    %1312 = vmatprep.subr.mxu0 0.0
    %1313 = vmatpush2.msra.mxu0 0.0
    %1314 = vmatprep.subr.mxu0 0.0
    %1315 = vmatpush2.msra.mxu0 0.0
    %1316 = vmatprep.subr.mxu0 0.0
    %1317 = vmatpush2.msra.mxu0 0.0
    %1318 = vmatprep.subr.mxu0 0.0
    %1319 = vmatpush2.msra.mxu0 0.0
    %1320 = vmatprep.subr.mxu0 0.0
    %1321 = vmatpush2.msra.mxu0 0.0
    %1322 = vmatprep.subr.mxu0 0.0
    %1323 = vmatpush2.msra.mxu0 0.0
    %1324 = vmatprep.subr.mxu0 0.0
    %1325 = vmatpush2.msra.mxu0 0.0
    %1326 = vmatprep.subr.mxu0 0.0
    %1327 = vmatpush2.msra.mxu0 0.0
    %1328 = vmatprep.subr.mxu0 0.0
    %1329 = vmatpush2.msra.mxu0 0.0
    %1330 = vmatprep.subr.mxu0 0.0
    %1331 = vmatpush2.msra.mxu0 0.0
    %1332 = vmatprep.subr.mxu0 0.0
    %1333 = vmatpush2.msra.mxu0 0.0
    %1334 = vmatprep.subr.mxu0 0.0
    %1335 = vmatpush2.msra.mxu0 0.0
    %1336 = vmatprep.subr.mxu0 0.0
    %1337 = vmatpush2.msra.mxu0 0.0
    %1338 = vmatprep.subr.mxu0 0.0
    %1339 = vmatpush2.msra.mxu0 0.0
    %1340 = vmatprep.subr.mxu0 0.0
    %1341 = vmatpush2.msra.mxu0 0.0
    %1342 = vmatprep.subr.mxu0 0.0
    %1343 = vmatpush2.msra.mxu0 0.0
    %1344 = vmatprep.mubr.f32.mxu0 0.0
    %v1345 = vand.u32 %v975, 4294901760
    %1346 = vmatmul.mubr.f32.gmra.mxu0 %v1345
    %v1347 = vpop.f32.mrf.mxu0
    %v1348 = vadd.f32 %v1274, %v1347
    %v1349 = vpop.f32.mrf.mxu0
    %1350 = vdwg.mxu0
    %1351 = vmatprep.subr.mxu0 0.0
    %1352 = vmatpush1.msra.mxu0 0.0
    %1353 = vmatprep.subr.mxu0 0.0
    %1354 = vmatpush1.msra.mxu0 0.0
    %1355 = vmatprep.subr.mxu0 0.0
    %1356 = vmatpush1.msra.mxu0 0.0
    %1357 = vmatprep.subr.mxu0 0.0
    %1358 = vmatpush1.msra.mxu0 0.0
    %1359 = vmatprep.subr.mxu0 0.0
    %1360 = vmatpush1.msra.mxu0 0.0
    %1361 = vmatprep.subr.mxu0 0.0
    %1362 = vmatpush1.msra.mxu0 0.0
    %1363 = vmatprep.subr.mxu0 0.0
    %1364 = vmatpush1.msra.mxu0 0.0
    %1365 = vmatprep.subr.mxu0 0.0
    %1366 = vmatpush1.msra.mxu0 0.0
    %1367 = vmatprep.subr.mxu0 0.0
    %1368 = vmatpush1.msra.mxu0 0.0
    %1369 = vmatprep.subr.mxu0 0.0
    %1370 = vmatpush1.msra.mxu0 0.0
    %1371 = vmatprep.subr.mxu0 0.0
    %1372 = vmatpush1.msra.mxu0 0.0
    %1373 = vmatprep.subr.mxu0 0.0
    %1374 = vmatpush1.msra.mxu0 0.0
    %1375 = vmatprep.subr.mxu0 0.0
    %1376 = vmatpush1.msra.mxu0 0.0
    %1377 = vmatprep.subr.mxu0 0.0
    %1378 = vmatpush1.msra.mxu0 0.0
    %1379 = vmatprep.subr.mxu0 0.0
    %1380 = vmatpush1.msra.mxu0 0.0
    %1381 = vmatprep.subr.mxu0 0.0
    %v1382 = vand.u32 %v68, 4294901760
    %1383 = vmatpush1.msra.mxu0 %v1382
    %1384 = vmatprep.subr.mxu0 0.0
    %1385 = vmatpush2.msra.mxu0 0.0
    %1386 = vmatprep.subr.mxu0 0.0
    %1387 = vmatpush2.msra.mxu0 0.0
    %1388 = vmatprep.subr.mxu0 0.0
    %1389 = vmatpush2.msra.mxu0 0.0
    %1390 = vmatprep.subr.mxu0 0.0
    %1391 = vmatpush2.msra.mxu0 0.0
    %1392 = vmatprep.subr.mxu0 0.0
    %1393 = vmatpush2.msra.mxu0 0.0
    %1394 = vmatprep.subr.mxu0 0.0
    %1395 = vmatpush2.msra.mxu0 0.0
    %1396 = vmatprep.subr.mxu0 0.0
    %1397 = vmatpush2.msra.mxu0 0.0
    %1398 = vmatprep.subr.mxu0 0.0
    %1399 = vmatpush2.msra.mxu0 0.0
    %1400 = vmatprep.subr.mxu0 0.0
    %1401 = vmatpush2.msra.mxu0 0.0
    %1402 = vmatprep.subr.mxu0 0.0
    %1403 = vmatpush2.msra.mxu0 0.0
    %1404 = vmatprep.subr.mxu0 0.0
    %1405 = vmatpush2.msra.mxu0 0.0
    %1406 = vmatprep.subr.mxu0 0.0
    %1407 = vmatpush2.msra.mxu0 0.0
    %1408 = vmatprep.subr.mxu0 0.0
    %1409 = vmatpush2.msra.mxu0 0.0
    %1410 = vmatprep.subr.mxu0 0.0
    %1411 = vmatpush2.msra.mxu0 0.0
    %1412 = vmatprep.subr.mxu0 0.0
    %1413 = vmatpush2.msra.mxu0 0.0
    %1414 = vmatprep.subr.mxu0 0.0
    %1415 = vmatpush2.msra.mxu0 0.0
    %1416 = vmatprep.mubr.f32.mxu0 0.0
    %v1417 = vand.u32 %v975, 4294901760
    %1418 = vmatmul.mubr.f32.gmra.mxu0 %v1417
    %v1419 = vpop.f32.mrf.mxu0
    %v1420 = vadd.f32 %v1348, %v1419
    %v1421 = vpop.f32.mrf.mxu0
    %1422 = vdwg.mxu0
    %v1424 = vsel %vm69, %v40, 0
    %1426 = vmatprep.subr.mxu0 0.0
    %1427 = vmatpush1.msra.mxu0 0.0
    %1428 = vmatprep.subr.mxu0 0.0
    %1429 = vmatpush1.msra.mxu0 0.0
    %1430 = vmatprep.subr.mxu0 0.0
    %1431 = vmatpush1.msra.mxu0 0.0
    %1432 = vmatprep.subr.mxu0 0.0
    %1433 = vmatpush1.msra.mxu0 0.0
    %1434 = vmatprep.subr.mxu0 0.0
    %1435 = vmatpush1.msra.mxu0 0.0
    %1436 = vmatprep.subr.mxu0 0.0
    %1437 = vmatpush1.msra.mxu0 0.0
    %1438 = vmatprep.subr.mxu0 0.0
    %1439 = vmatpush1.msra.mxu0 0.0
    %1440 = vmatprep.subr.mxu0 0.0
    %1441 = vmatpush1.msra.mxu0 0.0
    %1442 = vmatprep.subr.mxu0 0.0
    %1443 = vmatpush1.msra.mxu0 0.0
    %1444 = vmatprep.subr.mxu0 0.0
    %1445 = vmatpush1.msra.mxu0 0.0
    %1446 = vmatprep.subr.mxu0 0.0
    %1447 = vmatpush1.msra.mxu0 0.0
    %1448 = vmatprep.subr.mxu0 0.0
    %1449 = vmatpush1.msra.mxu0 0.0
    %1450 = vmatprep.subr.mxu0 0.0
    %1451 = vmatpush1.msra.mxu0 0.0
    %1452 = vmatprep.subr.mxu0 0.0
    %1453 = vmatpush1.msra.mxu0 0.0
    %1454 = vmatprep.subr.mxu0 0.0
    %1455 = vmatpush1.msra.mxu0 0.0
    %1456 = vmatprep.subr.mxu0 0.0
    %v1457 = vand.u32 %v48, 4294901760
    %1458 = vmatpush1.msra.mxu0 %v1457
    %1459 = vmatprep.subr.mxu0 0.0
    %1460 = vmatpush2.msra.mxu0 0.0
    %1461 = vmatprep.subr.mxu0 0.0
    %1462 = vmatpush2.msra.mxu0 0.0
    %1463 = vmatprep.subr.mxu0 0.0
    %1464 = vmatpush2.msra.mxu0 0.0
    %1465 = vmatprep.subr.mxu0 0.0
    %1466 = vmatpush2.msra.mxu0 0.0
    %1467 = vmatprep.subr.mxu0 0.0
    %1468 = vmatpush2.msra.mxu0 0.0
    %1469 = vmatprep.subr.mxu0 0.0
    %1470 = vmatpush2.msra.mxu0 0.0
    %1471 = vmatprep.subr.mxu0 0.0
    %1472 = vmatpush2.msra.mxu0 0.0
    %1473 = vmatprep.subr.mxu0 0.0
    %1474 = vmatpush2.msra.mxu0 0.0
    %1475 = vmatprep.subr.mxu0 0.0
    %1476 = vmatpush2.msra.mxu0 0.0
    %1477 = vmatprep.subr.mxu0 0.0
    %1478 = vmatpush2.msra.mxu0 0.0
    %1479 = vmatprep.subr.mxu0 0.0
    %1480 = vmatpush2.msra.mxu0 0.0
    %1481 = vmatprep.subr.mxu0 0.0
    %1482 = vmatpush2.msra.mxu0 0.0
    %1483 = vmatprep.subr.mxu0 0.0
    %1484 = vmatpush2.msra.mxu0 0.0
    %1485 = vmatprep.subr.mxu0 0.0
    %1486 = vmatpush2.msra.mxu0 0.0
    %1487 = vmatprep.subr.mxu0 0.0
    %1488 = vmatpush2.msra.mxu0 0.0
    %1489 = vmatprep.subr.mxu0 0.0
    %1490 = vmatpush2.msra.mxu0 0.0
    %1491 = vmatprep.mubr.f32.mxu0 0.0
    %v1492 = vand.u32 %v1424, 4294901760
    %v1493 = vsub.f32 %v1424, %v1492
    %v1494 = vand.u32 %v1493, 4294901760
    %v1495 = vsub.f32 %v1493, %v1494
    %v1496 = vand.u32 %v1495, 4294901760
    %1497 = vmatmul.mubr.f32.gmra.mxu0 %v1496
    %v1498 = vpop.f32.mrf.mxu0
    %v1499 = vadd.f32 %v1420, %v1498
    %v1500 = vpop.f32.mrf.mxu0
    %1501 = vdwg.mxu0
    %1502 = vmatprep.subr.mxu0 0.0
    %1503 = vmatpush1.msra.mxu0 0.0
    %1504 = vmatprep.subr.mxu0 0.0
    %1505 = vmatpush1.msra.mxu0 0.0
    %1506 = vmatprep.subr.mxu0 0.0
    %1507 = vmatpush1.msra.mxu0 0.0
    %1508 = vmatprep.subr.mxu0 0.0
    %1509 = vmatpush1.msra.mxu0 0.0
    %1510 = vmatprep.subr.mxu0 0.0
    %1511 = vmatpush1.msra.mxu0 0.0
    %1512 = vmatprep.subr.mxu0 0.0
    %1513 = vmatpush1.msra.mxu0 0.0
    %1514 = vmatprep.subr.mxu0 0.0
    %1515 = vmatpush1.msra.mxu0 0.0
    %1516 = vmatprep.subr.mxu0 0.0
    %1517 = vmatpush1.msra.mxu0 0.0
    %1518 = vmatprep.subr.mxu0 0.0
    %1519 = vmatpush1.msra.mxu0 0.0
    %1520 = vmatprep.subr.mxu0 0.0
    %1521 = vmatpush1.msra.mxu0 0.0
    %1522 = vmatprep.subr.mxu0 0.0
    %1523 = vmatpush1.msra.mxu0 0.0
    %1524 = vmatprep.subr.mxu0 0.0
    %1525 = vmatpush1.msra.mxu0 0.0
    %1526 = vmatprep.subr.mxu0 0.0
    %1527 = vmatpush1.msra.mxu0 0.0
    %1528 = vmatprep.subr.mxu0 0.0
    %1529 = vmatpush1.msra.mxu0 0.0
    %1530 = vmatprep.subr.mxu0 0.0
    %1531 = vmatpush1.msra.mxu0 0.0
    %1532 = vmatprep.subr.mxu0 0.0
    %v1533 = vand.u32 %v48, 4294901760
    %v1534 = vsub.f32 %v48, %v1533
    %v1535 = vand.u32 %v1534, 4294901760
    %v1536 = vsub.f32 %v1534, %v1535
    %v1537 = vand.u32 %v1536, 4294901760
    %1538 = vmatpush1.msra.mxu0 %v1537
    %1539 = vmatprep.subr.mxu0 0.0
    %1540 = vmatpush2.msra.mxu0 0.0
    %1541 = vmatprep.subr.mxu0 0.0
    %1542 = vmatpush2.msra.mxu0 0.0
    %1543 = vmatprep.subr.mxu0 0.0
    %1544 = vmatpush2.msra.mxu0 0.0
    %1545 = vmatprep.subr.mxu0 0.0
    %1546 = vmatpush2.msra.mxu0 0.0
    %1547 = vmatprep.subr.mxu0 0.0
    %1548 = vmatpush2.msra.mxu0 0.0
    %1549 = vmatprep.subr.mxu0 0.0
    %1550 = vmatpush2.msra.mxu0 0.0
    %1551 = vmatprep.subr.mxu0 0.0
    %1552 = vmatpush2.msra.mxu0 0.0
    %1553 = vmatprep.subr.mxu0 0.0
    %1554 = vmatpush2.msra.mxu0 0.0
    %1555 = vmatprep.subr.mxu0 0.0
    %1556 = vmatpush2.msra.mxu0 0.0
    %1557 = vmatprep.subr.mxu0 0.0
    %1558 = vmatpush2.msra.mxu0 0.0
    %1559 = vmatprep.subr.mxu0 0.0
    %1560 = vmatpush2.msra.mxu0 0.0
    %1561 = vmatprep.subr.mxu0 0.0
    %1562 = vmatpush2.msra.mxu0 0.0
    %1563 = vmatprep.subr.mxu0 0.0
    %1564 = vmatpush2.msra.mxu0 0.0
    %1565 = vmatprep.subr.mxu0 0.0
    %1566 = vmatpush2.msra.mxu0 0.0
    %1567 = vmatprep.subr.mxu0 0.0
    %1568 = vmatpush2.msra.mxu0 0.0
    %1569 = vmatprep.subr.mxu0 0.0
    %1570 = vmatpush2.msra.mxu0 0.0
    %1571 = vmatprep.mubr.f32.mxu0 0.0
    %v1572 = vand.u32 %v1424, 4294901760
    %1573 = vmatmul.mubr.f32.gmra.mxu0 %v1572
    %v1574 = vpop.f32.mrf.mxu0
    %v1575 = vadd.f32 %v1499, %v1574
    %v1576 = vpop.f32.mrf.mxu0
    %1577 = vdwg.mxu0
    %1578 = vmatprep.subr.mxu0 0.0
    %1579 = vmatpush1.msra.mxu0 0.0
    %1580 = vmatprep.subr.mxu0 0.0
    %1581 = vmatpush1.msra.mxu0 0.0
    %1582 = vmatprep.subr.mxu0 0.0
    %1583 = vmatpush1.msra.mxu0 0.0
    %1584 = vmatprep.subr.mxu0 0.0
    %1585 = vmatpush1.msra.mxu0 0.0
    %1586 = vmatprep.subr.mxu0 0.0
    %1587 = vmatpush1.msra.mxu0 0.0
    %1588 = vmatprep.subr.mxu0 0.0
    %1589 = vmatpush1.msra.mxu0 0.0
    %1590 = vmatprep.subr.mxu0 0.0
    %1591 = vmatpush1.msra.mxu0 0.0
    %1592 = vmatprep.subr.mxu0 0.0
    %1593 = vmatpush1.msra.mxu0 0.0
    %1594 = vmatprep.subr.mxu0 0.0
    %1595 = vmatpush1.msra.mxu0 0.0
    %1596 = vmatprep.subr.mxu0 0.0
    %1597 = vmatpush1.msra.mxu0 0.0
    %1598 = vmatprep.subr.mxu0 0.0
    %1599 = vmatpush1.msra.mxu0 0.0
    %1600 = vmatprep.subr.mxu0 0.0
    %1601 = vmatpush1.msra.mxu0 0.0
    %1602 = vmatprep.subr.mxu0 0.0
    %1603 = vmatpush1.msra.mxu0 0.0
    %1604 = vmatprep.subr.mxu0 0.0
    %1605 = vmatpush1.msra.mxu0 0.0
    %1606 = vmatprep.subr.mxu0 0.0
    %1607 = vmatpush1.msra.mxu0 0.0
    %1608 = vmatprep.subr.mxu0 0.0
    %v1609 = vand.u32 %v48, 4294901760
    %v1610 = vsub.f32 %v48, %v1609
    %1611 = vmatpush1.msra.mxu0 %v1610
    %1612 = vmatprep.subr.mxu0 0.0
    %1613 = vmatpush2.msra.mxu0 0.0
    %1614 = vmatprep.subr.mxu0 0.0
    %1615 = vmatpush2.msra.mxu0 0.0
    %1616 = vmatprep.subr.mxu0 0.0
    %1617 = vmatpush2.msra.mxu0 0.0
    %1618 = vmatprep.subr.mxu0 0.0
    %1619 = vmatpush2.msra.mxu0 0.0
    %1620 = vmatprep.subr.mxu0 0.0
    %1621 = vmatpush2.msra.mxu0 0.0
    %1622 = vmatprep.subr.mxu0 0.0
    %1623 = vmatpush2.msra.mxu0 0.0
    %1624 = vmatprep.subr.mxu0 0.0
    %1625 = vmatpush2.msra.mxu0 0.0
    %1626 = vmatprep.subr.mxu0 0.0
    %1627 = vmatpush2.msra.mxu0 0.0
    %1628 = vmatprep.subr.mxu0 0.0
    %1629 = vmatpush2.msra.mxu0 0.0
    %1630 = vmatprep.subr.mxu0 0.0
    %1631 = vmatpush2.msra.mxu0 0.0
    %1632 = vmatprep.subr.mxu0 0.0
    %1633 = vmatpush2.msra.mxu0 0.0
    %1634 = vmatprep.subr.mxu0 0.0
    %1635 = vmatpush2.msra.mxu0 0.0
    %1636 = vmatprep.subr.mxu0 0.0
    %1637 = vmatpush2.msra.mxu0 0.0
    %1638 = vmatprep.subr.mxu0 0.0
    %1639 = vmatpush2.msra.mxu0 0.0
    %1640 = vmatprep.subr.mxu0 0.0
    %1641 = vmatpush2.msra.mxu0 0.0
    %1642 = vmatprep.subr.mxu0 0.0
    %1643 = vmatpush2.msra.mxu0 0.0
    %1644 = vmatprep.mubr.f32.mxu0 0.0
    %v1645 = vand.u32 %v1424, 4294901760
    %v1646 = vsub.f32 %v1424, %v1645
    %1647 = vmatmul.mubr.f32.gmra.mxu0 %v1646
    %v1648 = vpop.f32.mrf.mxu0
    %v1649 = vadd.f32 %v1575, %v1648
    %v1650 = vpop.f32.mrf.mxu0
    %1651 = vdwg.mxu0
    %1652 = vmatprep.subr.mxu0 0.0
    %1653 = vmatpush1.msra.mxu0 0.0
    %1654 = vmatprep.subr.mxu0 0.0
    %1655 = vmatpush1.msra.mxu0 0.0
    %1656 = vmatprep.subr.mxu0 0.0
    %1657 = vmatpush1.msra.mxu0 0.0
    %1658 = vmatprep.subr.mxu0 0.0
    %1659 = vmatpush1.msra.mxu0 0.0
    %1660 = vmatprep.subr.mxu0 0.0
    %1661 = vmatpush1.msra.mxu0 0.0
    %1662 = vmatprep.subr.mxu0 0.0
    %1663 = vmatpush1.msra.mxu0 0.0
    %1664 = vmatprep.subr.mxu0 0.0
    %1665 = vmatpush1.msra.mxu0 0.0
    %1666 = vmatprep.subr.mxu0 0.0
    %1667 = vmatpush1.msra.mxu0 0.0
    %1668 = vmatprep.subr.mxu0 0.0
    %1669 = vmatpush1.msra.mxu0 0.0
    %1670 = vmatprep.subr.mxu0 0.0
    %1671 = vmatpush1.msra.mxu0 0.0
    %1672 = vmatprep.subr.mxu0 0.0
    %1673 = vmatpush1.msra.mxu0 0.0
    %1674 = vmatprep.subr.mxu0 0.0
    %1675 = vmatpush1.msra.mxu0 0.0
    %1676 = vmatprep.subr.mxu0 0.0
    %1677 = vmatpush1.msra.mxu0 0.0
    %1678 = vmatprep.subr.mxu0 0.0
    %1679 = vmatpush1.msra.mxu0 0.0
    %1680 = vmatprep.subr.mxu0 0.0
    %1681 = vmatpush1.msra.mxu0 0.0
    %1682 = vmatprep.subr.mxu0 0.0
    %v1683 = vand.u32 %v48, 4294901760
    %1684 = vmatpush1.msra.mxu0 %v1683
    %1685 = vmatprep.subr.mxu0 0.0
    %1686 = vmatpush2.msra.mxu0 0.0
    %1687 = vmatprep.subr.mxu0 0.0
    %1688 = vmatpush2.msra.mxu0 0.0
    %1689 = vmatprep.subr.mxu0 0.0
    %1690 = vmatpush2.msra.mxu0 0.0
    %1691 = vmatprep.subr.mxu0 0.0
    %1692 = vmatpush2.msra.mxu0 0.0
    %1693 = vmatprep.subr.mxu0 0.0
    %1694 = vmatpush2.msra.mxu0 0.0
    %1695 = vmatprep.subr.mxu0 0.0
    %1696 = vmatpush2.msra.mxu0 0.0
    %1697 = vmatprep.subr.mxu0 0.0
    %1698 = vmatpush2.msra.mxu0 0.0
    %1699 = vmatprep.subr.mxu0 0.0
    %1700 = vmatpush2.msra.mxu0 0.0
    %1701 = vmatprep.subr.mxu0 0.0
    %1702 = vmatpush2.msra.mxu0 0.0
    %1703 = vmatprep.subr.mxu0 0.0
    %1704 = vmatpush2.msra.mxu0 0.0
    %1705 = vmatprep.subr.mxu0 0.0
    %1706 = vmatpush2.msra.mxu0 0.0
    %1707 = vmatprep.subr.mxu0 0.0
    %1708 = vmatpush2.msra.mxu0 0.0
    %1709 = vmatprep.subr.mxu0 0.0
    %1710 = vmatpush2.msra.mxu0 0.0
    %1711 = vmatprep.subr.mxu0 0.0
    %1712 = vmatpush2.msra.mxu0 0.0
    %1713 = vmatprep.subr.mxu0 0.0
    %1714 = vmatpush2.msra.mxu0 0.0
    %1715 = vmatprep.subr.mxu0 0.0
    %1716 = vmatpush2.msra.mxu0 0.0
    %1717 = vmatprep.mubr.f32.mxu0 0.0
    %v1718 = vand.u32 %v1424, 4294901760
    %v1719 = vsub.f32 %v1424, %v1718
    %v1720 = vand.u32 %v1719, 4294901760
    %1721 = vmatmul.mubr.f32.gmra.mxu0 %v1720
    %v1722 = vpop.f32.mrf.mxu0
    %v1723 = vadd.f32 %v1649, %v1722
    %v1724 = vpop.f32.mrf.mxu0
    %1725 = vdwg.mxu0
    %1726 = vmatprep.subr.mxu0 0.0
    %1727 = vmatpush1.msra.mxu0 0.0
    %1728 = vmatprep.subr.mxu0 0.0
    %1729 = vmatpush1.msra.mxu0 0.0
    %1730 = vmatprep.subr.mxu0 0.0
    %1731 = vmatpush1.msra.mxu0 0.0
    %1732 = vmatprep.subr.mxu0 0.0
    %1733 = vmatpush1.msra.mxu0 0.0
    %1734 = vmatprep.subr.mxu0 0.0
    %1735 = vmatpush1.msra.mxu0 0.0
    %1736 = vmatprep.subr.mxu0 0.0
    %1737 = vmatpush1.msra.mxu0 0.0
    %1738 = vmatprep.subr.mxu0 0.0
    %1739 = vmatpush1.msra.mxu0 0.0
    %1740 = vmatprep.subr.mxu0 0.0
    %1741 = vmatpush1.msra.mxu0 0.0
    %1742 = vmatprep.subr.mxu0 0.0
    %1743 = vmatpush1.msra.mxu0 0.0
    %1744 = vmatprep.subr.mxu0 0.0
    %1745 = vmatpush1.msra.mxu0 0.0
    %1746 = vmatprep.subr.mxu0 0.0
    %1747 = vmatpush1.msra.mxu0 0.0
    %1748 = vmatprep.subr.mxu0 0.0
    %1749 = vmatpush1.msra.mxu0 0.0
    %1750 = vmatprep.subr.mxu0 0.0
    %1751 = vmatpush1.msra.mxu0 0.0
    %1752 = vmatprep.subr.mxu0 0.0
    %1753 = vmatpush1.msra.mxu0 0.0
    %1754 = vmatprep.subr.mxu0 0.0
    %1755 = vmatpush1.msra.mxu0 0.0
    %1756 = vmatprep.subr.mxu0 0.0
    %v1757 = vand.u32 %v48, 4294901760
    %v1758 = vsub.f32 %v48, %v1757
    %v1759 = vand.u32 %v1758, 4294901760
    %1760 = vmatpush1.msra.mxu0 %v1759
    %1761 = vmatprep.subr.mxu0 0.0
    %1762 = vmatpush2.msra.mxu0 0.0
    %1763 = vmatprep.subr.mxu0 0.0
    %1764 = vmatpush2.msra.mxu0 0.0
    %1765 = vmatprep.subr.mxu0 0.0
    %1766 = vmatpush2.msra.mxu0 0.0
    %1767 = vmatprep.subr.mxu0 0.0
    %1768 = vmatpush2.msra.mxu0 0.0
    %1769 = vmatprep.subr.mxu0 0.0
    %1770 = vmatpush2.msra.mxu0 0.0
    %1771 = vmatprep.subr.mxu0 0.0
    %1772 = vmatpush2.msra.mxu0 0.0
    %1773 = vmatprep.subr.mxu0 0.0
    %1774 = vmatpush2.msra.mxu0 0.0
    %1775 = vmatprep.subr.mxu0 0.0
    %1776 = vmatpush2.msra.mxu0 0.0
    %1777 = vmatprep.subr.mxu0 0.0
    %1778 = vmatpush2.msra.mxu0 0.0
    %1779 = vmatprep.subr.mxu0 0.0
    %1780 = vmatpush2.msra.mxu0 0.0
    %1781 = vmatprep.subr.mxu0 0.0
    %1782 = vmatpush2.msra.mxu0 0.0
    %1783 = vmatprep.subr.mxu0 0.0
    %1784 = vmatpush2.msra.mxu0 0.0
    %1785 = vmatprep.subr.mxu0 0.0
    %1786 = vmatpush2.msra.mxu0 0.0
    %1787 = vmatprep.subr.mxu0 0.0
    %1788 = vmatpush2.msra.mxu0 0.0
    %1789 = vmatprep.subr.mxu0 0.0
    %1790 = vmatpush2.msra.mxu0 0.0
    %1791 = vmatprep.subr.mxu0 0.0
    %1792 = vmatpush2.msra.mxu0 0.0
    %1793 = vmatprep.mubr.f32.mxu0 0.0
    %v1794 = vand.u32 %v1424, 4294901760
    %1795 = vmatmul.mubr.f32.gmra.mxu0 %v1794
    %v1796 = vpop.f32.mrf.mxu0
    %v1797 = vadd.f32 %v1723, %v1796
    %v1798 = vpop.f32.mrf.mxu0
    %1799 = vdwg.mxu0
    %1800 = vmatprep.subr.mxu0 0.0
    %1801 = vmatpush1.msra.mxu0 0.0
    %1802 = vmatprep.subr.mxu0 0.0
    %1803 = vmatpush1.msra.mxu0 0.0
    %1804 = vmatprep.subr.mxu0 0.0
    %1805 = vmatpush1.msra.mxu0 0.0
    %1806 = vmatprep.subr.mxu0 0.0
    %1807 = vmatpush1.msra.mxu0 0.0
    %1808 = vmatprep.subr.mxu0 0.0
    %1809 = vmatpush1.msra.mxu0 0.0
    %1810 = vmatprep.subr.mxu0 0.0
    %1811 = vmatpush1.msra.mxu0 0.0
    %1812 = vmatprep.subr.mxu0 0.0
    %1813 = vmatpush1.msra.mxu0 0.0
    %1814 = vmatprep.subr.mxu0 0.0
    %1815 = vmatpush1.msra.mxu0 0.0
    %1816 = vmatprep.subr.mxu0 0.0
    %1817 = vmatpush1.msra.mxu0 0.0
    %1818 = vmatprep.subr.mxu0 0.0
    %1819 = vmatpush1.msra.mxu0 0.0
    %1820 = vmatprep.subr.mxu0 0.0
    %1821 = vmatpush1.msra.mxu0 0.0
    %1822 = vmatprep.subr.mxu0 0.0
    %1823 = vmatpush1.msra.mxu0 0.0
    %1824 = vmatprep.subr.mxu0 0.0
    %1825 = vmatpush1.msra.mxu0 0.0
    %1826 = vmatprep.subr.mxu0 0.0
    %1827 = vmatpush1.msra.mxu0 0.0
    %1828 = vmatprep.subr.mxu0 0.0
    %1829 = vmatpush1.msra.mxu0 0.0
    %1830 = vmatprep.subr.mxu0 0.0
    %v1831 = vand.u32 %v48, 4294901760
    %1832 = vmatpush1.msra.mxu0 %v1831
    %1833 = vmatprep.subr.mxu0 0.0
    %1834 = vmatpush2.msra.mxu0 0.0
    %1835 = vmatprep.subr.mxu0 0.0
    %1836 = vmatpush2.msra.mxu0 0.0
    %1837 = vmatprep.subr.mxu0 0.0
    %1838 = vmatpush2.msra.mxu0 0.0
    %1839 = vmatprep.subr.mxu0 0.0
    %1840 = vmatpush2.msra.mxu0 0.0
    %1841 = vmatprep.subr.mxu0 0.0
    %1842 = vmatpush2.msra.mxu0 0.0
    %1843 = vmatprep.subr.mxu0 0.0
    %1844 = vmatpush2.msra.mxu0 0.0
    %1845 = vmatprep.subr.mxu0 0.0
    %1846 = vmatpush2.msra.mxu0 0.0
    %1847 = vmatprep.subr.mxu0 0.0
    %1848 = vmatpush2.msra.mxu0 0.0
    %1849 = vmatprep.subr.mxu0 0.0
    %1850 = vmatpush2.msra.mxu0 0.0
    %1851 = vmatprep.subr.mxu0 0.0
    %1852 = vmatpush2.msra.mxu0 0.0
    %1853 = vmatprep.subr.mxu0 0.0
    %1854 = vmatpush2.msra.mxu0 0.0
    %1855 = vmatprep.subr.mxu0 0.0
    %1856 = vmatpush2.msra.mxu0 0.0
    %1857 = vmatprep.subr.mxu0 0.0
    %1858 = vmatpush2.msra.mxu0 0.0
    %1859 = vmatprep.subr.mxu0 0.0
    %1860 = vmatpush2.msra.mxu0 0.0
    %1861 = vmatprep.subr.mxu0 0.0
    %1862 = vmatpush2.msra.mxu0 0.0
    %1863 = vmatprep.subr.mxu0 0.0
    %1864 = vmatpush2.msra.mxu0 0.0
    %1865 = vmatprep.mubr.f32.mxu0 0.0
    %v1866 = vand.u32 %v1424, 4294901760
    %1867 = vmatmul.mubr.f32.gmra.mxu0 %v1866
    %v1868 = vpop.f32.mrf.mxu0
    %v1869 = vadd.f32 %v1797, %v1868
    %v1870 = vpop.f32.mrf.mxu0
    %1871 = vdwg.mxu0
    %v1872 = vadd.f32 %v1869, %v971
    %1873 = vst [vmem:[#allocation5] sm:$0xff] %v973
    %1874 = vst [vmem:[#allocation6] sm:$0xff] %v1872
    %s1875 = scalar_lea.vmem [#allocation2], 8
    %v1876 = vld [vmem:[%s1875] sm:$0xff]
    %s1877 = scalar_lea.vmem %s3, 8
    %v1878 = vld [vmem:[%s1877] sm:$0xff]
    %s1879 = scalar_lea.vmem %s4, 8
    %v1880 = vld [vmem:[%s1879] sm:$0xff]
    %1881 = vrot.lane.b32.xlu0 %v1876, 1
    %v1882 = vpop.permute.xlu0 %1881
    %1884 = vset.pattern.permute.xlu0 0
    %1885 = vperm.xlu0 %1884, %v1878
    %v1886 = vpop.permute.xlu0 %1885
    %v1888 = vsel %vm51, %v1886, %v1882
    %1889 = vrot.lane.b32.xlu0 %v1876, 127
    %v1890 = vpop.permute.xlu0 %1889
    %1892 = vset.pattern.permute.xlu0 0
    %1893 = vperm.xlu0 %1892, %v1880
    %v1894 = vpop.permute.xlu0 %1893
    %v1896 = vsel %vm60, %v1894, %v1890
    %1897 = vmatprep.subr.mxu0 0.0
    %1898 = vmatpush1.msra.mxu0 0.0
    %1899 = vmatprep.subr.mxu0 0.0
    %1900 = vmatpush1.msra.mxu0 0.0
    %1901 = vmatprep.subr.mxu0 0.0
    %1902 = vmatpush1.msra.mxu0 0.0
    %1903 = vmatprep.subr.mxu0 0.0
    %1904 = vmatpush1.msra.mxu0 0.0
    %1905 = vmatprep.subr.mxu0 0.0
    %1906 = vmatpush1.msra.mxu0 0.0
    %1907 = vmatprep.subr.mxu0 0.0
    %1908 = vmatpush1.msra.mxu0 0.0
    %1909 = vmatprep.subr.mxu0 0.0
    %1910 = vmatpush1.msra.mxu0 0.0
    %1911 = vmatprep.subr.mxu0 0.0
    %1912 = vmatpush1.msra.mxu0 0.0
    %1913 = vmatprep.subr.mxu0 0.0
    %1914 = vmatpush1.msra.mxu0 0.0
    %1915 = vmatprep.subr.mxu0 0.0
    %1916 = vmatpush1.msra.mxu0 0.0
    %1917 = vmatprep.subr.mxu0 0.0
    %1918 = vmatpush1.msra.mxu0 0.0
    %1919 = vmatprep.subr.mxu0 0.0
    %1920 = vmatpush1.msra.mxu0 0.0
    %1921 = vmatprep.subr.mxu0 0.0
    %1922 = vmatpush1.msra.mxu0 0.0
    %1923 = vmatprep.subr.mxu0 0.0
    %1924 = vmatpush1.msra.mxu0 0.0
    %1925 = vmatprep.subr.mxu0 0.0
    %1926 = vmatpush1.msra.mxu0 0.0
    %1927 = vmatprep.subr.mxu0 0.0
    %v1928 = vand.u32 %v1888, 4294901760
    %1929 = vmatpush1.msra.mxu0 %v1928
    %1930 = vmatprep.subr.mxu0 0.0
    %1931 = vmatpush2.msra.mxu0 0.0
    %1932 = vmatprep.subr.mxu0 0.0
    %1933 = vmatpush2.msra.mxu0 0.0
    %1934 = vmatprep.subr.mxu0 0.0
    %1935 = vmatpush2.msra.mxu0 0.0
    %1936 = vmatprep.subr.mxu0 0.0
    %1937 = vmatpush2.msra.mxu0 0.0
    %1938 = vmatprep.subr.mxu0 0.0
    %1939 = vmatpush2.msra.mxu0 0.0
    %1940 = vmatprep.subr.mxu0 0.0
    %1941 = vmatpush2.msra.mxu0 0.0
    %1942 = vmatprep.subr.mxu0 0.0
    %1943 = vmatpush2.msra.mxu0 0.0
    %1944 = vmatprep.subr.mxu0 0.0
    %1945 = vmatpush2.msra.mxu0 0.0
    %1946 = vmatprep.subr.mxu0 0.0
    %1947 = vmatpush2.msra.mxu0 0.0
    %1948 = vmatprep.subr.mxu0 0.0
    %1949 = vmatpush2.msra.mxu0 0.0
    %1950 = vmatprep.subr.mxu0 0.0
    %1951 = vmatpush2.msra.mxu0 0.0
    %1952 = vmatprep.subr.mxu0 0.0
    %1953 = vmatpush2.msra.mxu0 0.0
    %1954 = vmatprep.subr.mxu0 0.0
    %1955 = vmatpush2.msra.mxu0 0.0
    %1956 = vmatprep.subr.mxu0 0.0
    %1957 = vmatpush2.msra.mxu0 0.0
    %1958 = vmatprep.subr.mxu0 0.0
    %1959 = vmatpush2.msra.mxu0 0.0
    %1960 = vmatprep.subr.mxu0 0.0
    %1961 = vmatpush2.msra.mxu0 0.0
    %1962 = vmatprep.mubr.f32.mxu0 0.0
    %v1963 = vand.u32 %v71, 4294901760
    %v1964 = vsub.f32 %v71, %v1963
    %v1965 = vand.u32 %v1964, 4294901760
    %v1966 = vsub.f32 %v1964, %v1965
    %v1967 = vand.u32 %v1966, 4294901760
    %1968 = vmatmul.mubr.f32.gmra.mxu0 %v1967
    %v1969 = vpop.f32.mrf.mxu0
    %v1970 = vadd.f32 0.0, %v1969
    %v1971 = vpop.f32.mrf.mxu0
    %1972 = vdwg.mxu0
    %1973 = vmatprep.subr.mxu0 0.0
    %1974 = vmatpush1.msra.mxu0 0.0
    %1975 = vmatprep.subr.mxu0 0.0
    %1976 = vmatpush1.msra.mxu0 0.0
    %1977 = vmatprep.subr.mxu0 0.0
    %1978 = vmatpush1.msra.mxu0 0.0
    %1979 = vmatprep.subr.mxu0 0.0
    %1980 = vmatpush1.msra.mxu0 0.0
    %1981 = vmatprep.subr.mxu0 0.0
    %1982 = vmatpush1.msra.mxu0 0.0
    %1983 = vmatprep.subr.mxu0 0.0
    %1984 = vmatpush1.msra.mxu0 0.0
    %1985 = vmatprep.subr.mxu0 0.0
    %1986 = vmatpush1.msra.mxu0 0.0
    %1987 = vmatprep.subr.mxu0 0.0
    %1988 = vmatpush1.msra.mxu0 0.0
    %1989 = vmatprep.subr.mxu0 0.0
    %1990 = vmatpush1.msra.mxu0 0.0
    %1991 = vmatprep.subr.mxu0 0.0
    %1992 = vmatpush1.msra.mxu0 0.0
    %1993 = vmatprep.subr.mxu0 0.0
    %1994 = vmatpush1.msra.mxu0 0.0
    %1995 = vmatprep.subr.mxu0 0.0
    %1996 = vmatpush1.msra.mxu0 0.0
    %1997 = vmatprep.subr.mxu0 0.0
    %1998 = vmatpush1.msra.mxu0 0.0
    %1999 = vmatprep.subr.mxu0 0.0
    %2000 = vmatpush1.msra.mxu0 0.0
    %2001 = vmatprep.subr.mxu0 0.0
    %2002 = vmatpush1.msra.mxu0 0.0
    %2003 = vmatprep.subr.mxu0 0.0
    %v2004 = vand.u32 %v1888, 4294901760
    %v2005 = vsub.f32 %v1888, %v2004
    %v2006 = vand.u32 %v2005, 4294901760
    %v2007 = vsub.f32 %v2005, %v2006
    %v2008 = vand.u32 %v2007, 4294901760
    %2009 = vmatpush1.msra.mxu0 %v2008
    %2010 = vmatprep.subr.mxu0 0.0
    %2011 = vmatpush2.msra.mxu0 0.0
    %2012 = vmatprep.subr.mxu0 0.0
    %2013 = vmatpush2.msra.mxu0 0.0
    %2014 = vmatprep.subr.mxu0 0.0
    %2015 = vmatpush2.msra.mxu0 0.0
    %2016 = vmatprep.subr.mxu0 0.0
    %2017 = vmatpush2.msra.mxu0 0.0
    %2018 = vmatprep.subr.mxu0 0.0
    %2019 = vmatpush2.msra.mxu0 0.0
    %2020 = vmatprep.subr.mxu0 0.0
    %2021 = vmatpush2.msra.mxu0 0.0
    %2022 = vmatprep.subr.mxu0 0.0
    %2023 = vmatpush2.msra.mxu0 0.0
    %2024 = vmatprep.subr.mxu0 0.0
    %2025 = vmatpush2.msra.mxu0 0.0
    %2026 = vmatprep.subr.mxu0 0.0
    %2027 = vmatpush2.msra.mxu0 0.0
    %2028 = vmatprep.subr.mxu0 0.0
    %2029 = vmatpush2.msra.mxu0 0.0
    %2030 = vmatprep.subr.mxu0 0.0
    %2031 = vmatpush2.msra.mxu0 0.0
    %2032 = vmatprep.subr.mxu0 0.0
    %2033 = vmatpush2.msra.mxu0 0.0
    %2034 = vmatprep.subr.mxu0 0.0
    %2035 = vmatpush2.msra.mxu0 0.0
    %2036 = vmatprep.subr.mxu0 0.0
    %2037 = vmatpush2.msra.mxu0 0.0
    %2038 = vmatprep.subr.mxu0 0.0
    %2039 = vmatpush2.msra.mxu0 0.0
    %2040 = vmatprep.subr.mxu0 0.0
    %2041 = vmatpush2.msra.mxu0 0.0
    %2042 = vmatprep.mubr.f32.mxu0 0.0
    %v2043 = vand.u32 %v71, 4294901760
    %2044 = vmatmul.mubr.f32.gmra.mxu0 %v2043
    %v2045 = vpop.f32.mrf.mxu0
    %v2046 = vadd.f32 %v1970, %v2045
    %v2047 = vpop.f32.mrf.mxu0
    %2048 = vdwg.mxu0
    %2049 = vmatprep.subr.mxu0 0.0
    %2050 = vmatpush1.msra.mxu0 0.0
    %2051 = vmatprep.subr.mxu0 0.0
    %2052 = vmatpush1.msra.mxu0 0.0
    %2053 = vmatprep.subr.mxu0 0.0
    %2054 = vmatpush1.msra.mxu0 0.0
    %2055 = vmatprep.subr.mxu0 0.0
    %2056 = vmatpush1.msra.mxu0 0.0
    %2057 = vmatprep.subr.mxu0 0.0
    %2058 = vmatpush1.msra.mxu0 0.0
    %2059 = vmatprep.subr.mxu0 0.0
    %2060 = vmatpush1.msra.mxu0 0.0
    %2061 = vmatprep.subr.mxu0 0.0
    %2062 = vmatpush1.msra.mxu0 0.0
    %2063 = vmatprep.subr.mxu0 0.0
    %2064 = vmatpush1.msra.mxu0 0.0
    %2065 = vmatprep.subr.mxu0 0.0
    %2066 = vmatpush1.msra.mxu0 0.0
    %2067 = vmatprep.subr.mxu0 0.0
    %2068 = vmatpush1.msra.mxu0 0.0
    %2069 = vmatprep.subr.mxu0 0.0
    %2070 = vmatpush1.msra.mxu0 0.0
    %2071 = vmatprep.subr.mxu0 0.0
    %2072 = vmatpush1.msra.mxu0 0.0
    %2073 = vmatprep.subr.mxu0 0.0
    %2074 = vmatpush1.msra.mxu0 0.0
    %2075 = vmatprep.subr.mxu0 0.0
    %2076 = vmatpush1.msra.mxu0 0.0
    %2077 = vmatprep.subr.mxu0 0.0
    %2078 = vmatpush1.msra.mxu0 0.0
    %2079 = vmatprep.subr.mxu0 0.0
    %v2080 = vand.u32 %v1888, 4294901760
    %v2081 = vsub.f32 %v1888, %v2080
    %2082 = vmatpush1.msra.mxu0 %v2081
    %2083 = vmatprep.subr.mxu0 0.0
    %2084 = vmatpush2.msra.mxu0 0.0
    %2085 = vmatprep.subr.mxu0 0.0
    %2086 = vmatpush2.msra.mxu0 0.0
    %2087 = vmatprep.subr.mxu0 0.0
    %2088 = vmatpush2.msra.mxu0 0.0
    %2089 = vmatprep.subr.mxu0 0.0
    %2090 = vmatpush2.msra.mxu0 0.0
    %2091 = vmatprep.subr.mxu0 0.0
    %2092 = vmatpush2.msra.mxu0 0.0
    %2093 = vmatprep.subr.mxu0 0.0
    %2094 = vmatpush2.msra.mxu0 0.0
    %2095 = vmatprep.subr.mxu0 0.0
    %2096 = vmatpush2.msra.mxu0 0.0
    %2097 = vmatprep.subr.mxu0 0.0
    %2098 = vmatpush2.msra.mxu0 0.0
    %2099 = vmatprep.subr.mxu0 0.0
    %2100 = vmatpush2.msra.mxu0 0.0
    %2101 = vmatprep.subr.mxu0 0.0
    %2102 = vmatpush2.msra.mxu0 0.0
    %2103 = vmatprep.subr.mxu0 0.0
    %2104 = vmatpush2.msra.mxu0 0.0
    %2105 = vmatprep.subr.mxu0 0.0
    %2106 = vmatpush2.msra.mxu0 0.0
    %2107 = vmatprep.subr.mxu0 0.0
    %2108 = vmatpush2.msra.mxu0 0.0
    %2109 = vmatprep.subr.mxu0 0.0
    %2110 = vmatpush2.msra.mxu0 0.0
    %2111 = vmatprep.subr.mxu0 0.0
    %2112 = vmatpush2.msra.mxu0 0.0
    %2113 = vmatprep.subr.mxu0 0.0
    %2114 = vmatpush2.msra.mxu0 0.0
    %2115 = vmatprep.mubr.f32.mxu0 0.0
    %v2116 = vand.u32 %v71, 4294901760
    %v2117 = vsub.f32 %v71, %v2116
    %2118 = vmatmul.mubr.f32.gmra.mxu0 %v2117
    %v2119 = vpop.f32.mrf.mxu0
    %v2120 = vadd.f32 %v2046, %v2119
    %v2121 = vpop.f32.mrf.mxu0
    %2122 = vdwg.mxu0
    %2123 = vmatprep.subr.mxu0 0.0
    %2124 = vmatpush1.msra.mxu0 0.0
    %2125 = vmatprep.subr.mxu0 0.0
    %2126 = vmatpush1.msra.mxu0 0.0
    %2127 = vmatprep.subr.mxu0 0.0
    %2128 = vmatpush1.msra.mxu0 0.0
    %2129 = vmatprep.subr.mxu0 0.0
    %2130 = vmatpush1.msra.mxu0 0.0
    %2131 = vmatprep.subr.mxu0 0.0
    %2132 = vmatpush1.msra.mxu0 0.0
    %2133 = vmatprep.subr.mxu0 0.0
    %2134 = vmatpush1.msra.mxu0 0.0
    %2135 = vmatprep.subr.mxu0 0.0
    %2136 = vmatpush1.msra.mxu0 0.0
    %2137 = vmatprep.subr.mxu0 0.0
    %2138 = vmatpush1.msra.mxu0 0.0
    %2139 = vmatprep.subr.mxu0 0.0
    %2140 = vmatpush1.msra.mxu0 0.0
    %2141 = vmatprep.subr.mxu0 0.0
    %2142 = vmatpush1.msra.mxu0 0.0
    %2143 = vmatprep.subr.mxu0 0.0
    %2144 = vmatpush1.msra.mxu0 0.0
    %2145 = vmatprep.subr.mxu0 0.0
    %2146 = vmatpush1.msra.mxu0 0.0
    %2147 = vmatprep.subr.mxu0 0.0
    %2148 = vmatpush1.msra.mxu0 0.0
    %2149 = vmatprep.subr.mxu0 0.0
    %2150 = vmatpush1.msra.mxu0 0.0
    %2151 = vmatprep.subr.mxu0 0.0
    %2152 = vmatpush1.msra.mxu0 0.0
    %2153 = vmatprep.subr.mxu0 0.0
    %v2154 = vand.u32 %v1888, 4294901760
    %2155 = vmatpush1.msra.mxu0 %v2154
    %2156 = vmatprep.subr.mxu0 0.0
    %2157 = vmatpush2.msra.mxu0 0.0
    %2158 = vmatprep.subr.mxu0 0.0
    %2159 = vmatpush2.msra.mxu0 0.0
    %2160 = vmatprep.subr.mxu0 0.0
    %2161 = vmatpush2.msra.mxu0 0.0
    %2162 = vmatprep.subr.mxu0 0.0
    %2163 = vmatpush2.msra.mxu0 0.0
    %2164 = vmatprep.subr.mxu0 0.0
    %2165 = vmatpush2.msra.mxu0 0.0
    %2166 = vmatprep.subr.mxu0 0.0
    %2167 = vmatpush2.msra.mxu0 0.0
    %2168 = vmatprep.subr.mxu0 0.0
    %2169 = vmatpush2.msra.mxu0 0.0
    %2170 = vmatprep.subr.mxu0 0.0
    %2171 = vmatpush2.msra.mxu0 0.0
    %2172 = vmatprep.subr.mxu0 0.0
    %2173 = vmatpush2.msra.mxu0 0.0
    %2174 = vmatprep.subr.mxu0 0.0
    %2175 = vmatpush2.msra.mxu0 0.0
    %2176 = vmatprep.subr.mxu0 0.0
    %2177 = vmatpush2.msra.mxu0 0.0
    %2178 = vmatprep.subr.mxu0 0.0
    %2179 = vmatpush2.msra.mxu0 0.0
    %2180 = vmatprep.subr.mxu0 0.0
    %2181 = vmatpush2.msra.mxu0 0.0
    %2182 = vmatprep.subr.mxu0 0.0
    %2183 = vmatpush2.msra.mxu0 0.0
    %2184 = vmatprep.subr.mxu0 0.0
    %2185 = vmatpush2.msra.mxu0 0.0
    %2186 = vmatprep.subr.mxu0 0.0
    %2187 = vmatpush2.msra.mxu0 0.0
    %2188 = vmatprep.mubr.f32.mxu0 0.0
    %v2189 = vand.u32 %v71, 4294901760
    %v2190 = vsub.f32 %v71, %v2189
    %v2191 = vand.u32 %v2190, 4294901760
    %2192 = vmatmul.mubr.f32.gmra.mxu0 %v2191
    %v2193 = vpop.f32.mrf.mxu0
    %v2194 = vadd.f32 %v2120, %v2193
    %v2195 = vpop.f32.mrf.mxu0
    %2196 = vdwg.mxu0
    %2197 = vmatprep.subr.mxu0 0.0
    %2198 = vmatpush1.msra.mxu0 0.0
    %2199 = vmatprep.subr.mxu0 0.0
    %2200 = vmatpush1.msra.mxu0 0.0
    %2201 = vmatprep.subr.mxu0 0.0
    %2202 = vmatpush1.msra.mxu0 0.0
    %2203 = vmatprep.subr.mxu0 0.0
    %2204 = vmatpush1.msra.mxu0 0.0
    %2205 = vmatprep.subr.mxu0 0.0
    %2206 = vmatpush1.msra.mxu0 0.0
    %2207 = vmatprep.subr.mxu0 0.0
    %2208 = vmatpush1.msra.mxu0 0.0
    %2209 = vmatprep.subr.mxu0 0.0
    %2210 = vmatpush1.msra.mxu0 0.0
    %2211 = vmatprep.subr.mxu0 0.0
    %2212 = vmatpush1.msra.mxu0 0.0
    %2213 = vmatprep.subr.mxu0 0.0
    %2214 = vmatpush1.msra.mxu0 0.0
    %2215 = vmatprep.subr.mxu0 0.0
    %2216 = vmatpush1.msra.mxu0 0.0
    %2217 = vmatprep.subr.mxu0 0.0
    %2218 = vmatpush1.msra.mxu0 0.0
    %2219 = vmatprep.subr.mxu0 0.0
    %2220 = vmatpush1.msra.mxu0 0.0
    %2221 = vmatprep.subr.mxu0 0.0
    %2222 = vmatpush1.msra.mxu0 0.0
    %2223 = vmatprep.subr.mxu0 0.0
    %2224 = vmatpush1.msra.mxu0 0.0
    %2225 = vmatprep.subr.mxu0 0.0
    %2226 = vmatpush1.msra.mxu0 0.0
    %2227 = vmatprep.subr.mxu0 0.0
    %v2228 = vand.u32 %v1888, 4294901760
    %v2229 = vsub.f32 %v1888, %v2228
    %v2230 = vand.u32 %v2229, 4294901760
    %2231 = vmatpush1.msra.mxu0 %v2230
    %2232 = vmatprep.subr.mxu0 0.0
    %2233 = vmatpush2.msra.mxu0 0.0
    %2234 = vmatprep.subr.mxu0 0.0
    %2235 = vmatpush2.msra.mxu0 0.0
    %2236 = vmatprep.subr.mxu0 0.0
    %2237 = vmatpush2.msra.mxu0 0.0
    %2238 = vmatprep.subr.mxu0 0.0
    %2239 = vmatpush2.msra.mxu0 0.0
    %2240 = vmatprep.subr.mxu0 0.0
    %2241 = vmatpush2.msra.mxu0 0.0
    %2242 = vmatprep.subr.mxu0 0.0
    %2243 = vmatpush2.msra.mxu0 0.0
    %2244 = vmatprep.subr.mxu0 0.0
    %2245 = vmatpush2.msra.mxu0 0.0
    %2246 = vmatprep.subr.mxu0 0.0
    %2247 = vmatpush2.msra.mxu0 0.0
    %2248 = vmatprep.subr.mxu0 0.0
    %2249 = vmatpush2.msra.mxu0 0.0
    %2250 = vmatprep.subr.mxu0 0.0
    %2251 = vmatpush2.msra.mxu0 0.0
    %2252 = vmatprep.subr.mxu0 0.0
    %2253 = vmatpush2.msra.mxu0 0.0
    %2254 = vmatprep.subr.mxu0 0.0
    %2255 = vmatpush2.msra.mxu0 0.0
    %2256 = vmatprep.subr.mxu0 0.0
    %2257 = vmatpush2.msra.mxu0 0.0
    %2258 = vmatprep.subr.mxu0 0.0
    %2259 = vmatpush2.msra.mxu0 0.0
    %2260 = vmatprep.subr.mxu0 0.0
    %2261 = vmatpush2.msra.mxu0 0.0
    %2262 = vmatprep.subr.mxu0 0.0
    %2263 = vmatpush2.msra.mxu0 0.0
    %2264 = vmatprep.mubr.f32.mxu0 0.0
    %v2265 = vand.u32 %v71, 4294901760
    %2266 = vmatmul.mubr.f32.gmra.mxu0 %v2265
    %v2267 = vpop.f32.mrf.mxu0
    %v2268 = vadd.f32 %v2194, %v2267
    %v2269 = vpop.f32.mrf.mxu0
    %2270 = vdwg.mxu0
    %2271 = vmatprep.subr.mxu0 0.0
    %2272 = vmatpush1.msra.mxu0 0.0
    %2273 = vmatprep.subr.mxu0 0.0
    %2274 = vmatpush1.msra.mxu0 0.0
    %2275 = vmatprep.subr.mxu0 0.0
    %2276 = vmatpush1.msra.mxu0 0.0
    %2277 = vmatprep.subr.mxu0 0.0
    %2278 = vmatpush1.msra.mxu0 0.0
    %2279 = vmatprep.subr.mxu0 0.0
    %2280 = vmatpush1.msra.mxu0 0.0
    %2281 = vmatprep.subr.mxu0 0.0
    %2282 = vmatpush1.msra.mxu0 0.0
    %2283 = vmatprep.subr.mxu0 0.0
    %2284 = vmatpush1.msra.mxu0 0.0
    %2285 = vmatprep.subr.mxu0 0.0
    %2286 = vmatpush1.msra.mxu0 0.0
    %2287 = vmatprep.subr.mxu0 0.0
    %2288 = vmatpush1.msra.mxu0 0.0
    %2289 = vmatprep.subr.mxu0 0.0
    %2290 = vmatpush1.msra.mxu0 0.0
    %2291 = vmatprep.subr.mxu0 0.0
    %2292 = vmatpush1.msra.mxu0 0.0
    %2293 = vmatprep.subr.mxu0 0.0
    %2294 = vmatpush1.msra.mxu0 0.0
    %2295 = vmatprep.subr.mxu0 0.0
    %2296 = vmatpush1.msra.mxu0 0.0
    %2297 = vmatprep.subr.mxu0 0.0
    %2298 = vmatpush1.msra.mxu0 0.0
    %2299 = vmatprep.subr.mxu0 0.0
    %2300 = vmatpush1.msra.mxu0 0.0
    %2301 = vmatprep.subr.mxu0 0.0
    %v2302 = vand.u32 %v1888, 4294901760
    %2303 = vmatpush1.msra.mxu0 %v2302
    %2304 = vmatprep.subr.mxu0 0.0
    %2305 = vmatpush2.msra.mxu0 0.0
    %2306 = vmatprep.subr.mxu0 0.0
    %2307 = vmatpush2.msra.mxu0 0.0
    %2308 = vmatprep.subr.mxu0 0.0
    %2309 = vmatpush2.msra.mxu0 0.0
    %2310 = vmatprep.subr.mxu0 0.0
    %2311 = vmatpush2.msra.mxu0 0.0
    %2312 = vmatprep.subr.mxu0 0.0
    %2313 = vmatpush2.msra.mxu0 0.0
    %2314 = vmatprep.subr.mxu0 0.0
    %2315 = vmatpush2.msra.mxu0 0.0
    %2316 = vmatprep.subr.mxu0 0.0
    %2317 = vmatpush2.msra.mxu0 0.0
    %2318 = vmatprep.subr.mxu0 0.0
    %2319 = vmatpush2.msra.mxu0 0.0
    %2320 = vmatprep.subr.mxu0 0.0
    %2321 = vmatpush2.msra.mxu0 0.0
    %2322 = vmatprep.subr.mxu0 0.0
    %2323 = vmatpush2.msra.mxu0 0.0
    %2324 = vmatprep.subr.mxu0 0.0
    %2325 = vmatpush2.msra.mxu0 0.0
    %2326 = vmatprep.subr.mxu0 0.0
    %2327 = vmatpush2.msra.mxu0 0.0
    %2328 = vmatprep.subr.mxu0 0.0
    %2329 = vmatpush2.msra.mxu0 0.0
    %2330 = vmatprep.subr.mxu0 0.0
    %2331 = vmatpush2.msra.mxu0 0.0
    %2332 = vmatprep.subr.mxu0 0.0
    %2333 = vmatpush2.msra.mxu0 0.0
    %2334 = vmatprep.subr.mxu0 0.0
    %2335 = vmatpush2.msra.mxu0 0.0
    %2336 = vmatprep.mubr.f32.mxu0 0.0
    %v2337 = vand.u32 %v71, 4294901760
    %2338 = vmatmul.mubr.f32.gmra.mxu0 %v2337
    %v2339 = vpop.f32.mrf.mxu0
    %v2340 = vadd.f32 %v2268, %v2339
    %v2341 = vpop.f32.mrf.mxu0
    %2342 = vdwg.mxu0
    %2343 = vmatprep.subr.mxu0 0.0
    %2344 = vmatpush1.msra.mxu0 0.0
    %2345 = vmatprep.subr.mxu0 0.0
    %2346 = vmatpush1.msra.mxu0 0.0
    %2347 = vmatprep.subr.mxu0 0.0
    %2348 = vmatpush1.msra.mxu0 0.0
    %2349 = vmatprep.subr.mxu0 0.0
    %2350 = vmatpush1.msra.mxu0 0.0
    %2351 = vmatprep.subr.mxu0 0.0
    %2352 = vmatpush1.msra.mxu0 0.0
    %2353 = vmatprep.subr.mxu0 0.0
    %2354 = vmatpush1.msra.mxu0 0.0
    %2355 = vmatprep.subr.mxu0 0.0
    %2356 = vmatpush1.msra.mxu0 0.0
    %2357 = vmatprep.subr.mxu0 0.0
    %2358 = vmatpush1.msra.mxu0 0.0
    %2359 = vmatprep.subr.mxu0 0.0
    %2360 = vmatpush1.msra.mxu0 0.0
    %2361 = vmatprep.subr.mxu0 0.0
    %2362 = vmatpush1.msra.mxu0 0.0
    %2363 = vmatprep.subr.mxu0 0.0
    %2364 = vmatpush1.msra.mxu0 0.0
    %2365 = vmatprep.subr.mxu0 0.0
    %2366 = vmatpush1.msra.mxu0 0.0
    %2367 = vmatprep.subr.mxu0 0.0
    %2368 = vmatpush1.msra.mxu0 0.0
    %2369 = vmatprep.subr.mxu0 0.0
    %2370 = vmatpush1.msra.mxu0 0.0
    %2371 = vmatprep.subr.mxu0 0.0
    %2372 = vmatpush1.msra.mxu0 0.0
    %2373 = vmatprep.subr.mxu0 0.0
    %v2374 = vand.u32 %v1876, 4294901760
    %2375 = vmatpush1.msra.mxu0 %v2374
    %2376 = vmatprep.subr.mxu0 0.0
    %2377 = vmatpush2.msra.mxu0 0.0
    %2378 = vmatprep.subr.mxu0 0.0
    %2379 = vmatpush2.msra.mxu0 0.0
    %2380 = vmatprep.subr.mxu0 0.0
    %2381 = vmatpush2.msra.mxu0 0.0
    %2382 = vmatprep.subr.mxu0 0.0
    %2383 = vmatpush2.msra.mxu0 0.0
    %2384 = vmatprep.subr.mxu0 0.0
    %2385 = vmatpush2.msra.mxu0 0.0
    %2386 = vmatprep.subr.mxu0 0.0
    %2387 = vmatpush2.msra.mxu0 0.0
    %2388 = vmatprep.subr.mxu0 0.0
    %2389 = vmatpush2.msra.mxu0 0.0
    %2390 = vmatprep.subr.mxu0 0.0
    %2391 = vmatpush2.msra.mxu0 0.0
    %2392 = vmatprep.subr.mxu0 0.0
    %2393 = vmatpush2.msra.mxu0 0.0
    %2394 = vmatprep.subr.mxu0 0.0
    %2395 = vmatpush2.msra.mxu0 0.0
    %2396 = vmatprep.subr.mxu0 0.0
    %2397 = vmatpush2.msra.mxu0 0.0
    %2398 = vmatprep.subr.mxu0 0.0
    %2399 = vmatpush2.msra.mxu0 0.0
    %2400 = vmatprep.subr.mxu0 0.0
    %2401 = vmatpush2.msra.mxu0 0.0
    %2402 = vmatprep.subr.mxu0 0.0
    %2403 = vmatpush2.msra.mxu0 0.0
    %2404 = vmatprep.subr.mxu0 0.0
    %2405 = vmatpush2.msra.mxu0 0.0
    %2406 = vmatprep.subr.mxu0 0.0
    %2407 = vmatpush2.msra.mxu0 0.0
    %2408 = vmatprep.mubr.f32.mxu0 0.0
    %v2409 = vand.u32 %v520, 4294901760
    %v2410 = vsub.f32 %v520, %v2409
    %v2411 = vand.u32 %v2410, 4294901760
    %v2412 = vsub.f32 %v2410, %v2411
    %v2413 = vand.u32 %v2412, 4294901760
    %2414 = vmatmul.mubr.f32.gmra.mxu0 %v2413
    %v2415 = vpop.f32.mrf.mxu0
    %v2416 = vadd.f32 %v2340, %v2415
    %v2417 = vpop.f32.mrf.mxu0
    %2418 = vdwg.mxu0
    %2419 = vmatprep.subr.mxu0 0.0
    %2420 = vmatpush1.msra.mxu0 0.0
    %2421 = vmatprep.subr.mxu0 0.0
    %2422 = vmatpush1.msra.mxu0 0.0
    %2423 = vmatprep.subr.mxu0 0.0
    %2424 = vmatpush1.msra.mxu0 0.0
    %2425 = vmatprep.subr.mxu0 0.0
    %2426 = vmatpush1.msra.mxu0 0.0
    %2427 = vmatprep.subr.mxu0 0.0
    %2428 = vmatpush1.msra.mxu0 0.0
    %2429 = vmatprep.subr.mxu0 0.0
    %2430 = vmatpush1.msra.mxu0 0.0
    %2431 = vmatprep.subr.mxu0 0.0
    %2432 = vmatpush1.msra.mxu0 0.0
    %2433 = vmatprep.subr.mxu0 0.0
    %2434 = vmatpush1.msra.mxu0 0.0
    %2435 = vmatprep.subr.mxu0 0.0
    %2436 = vmatpush1.msra.mxu0 0.0
    %2437 = vmatprep.subr.mxu0 0.0
    %2438 = vmatpush1.msra.mxu0 0.0
    %2439 = vmatprep.subr.mxu0 0.0
    %2440 = vmatpush1.msra.mxu0 0.0
    %2441 = vmatprep.subr.mxu0 0.0
    %2442 = vmatpush1.msra.mxu0 0.0
    %2443 = vmatprep.subr.mxu0 0.0
    %2444 = vmatpush1.msra.mxu0 0.0
    %2445 = vmatprep.subr.mxu0 0.0
    %2446 = vmatpush1.msra.mxu0 0.0
    %2447 = vmatprep.subr.mxu0 0.0
    %2448 = vmatpush1.msra.mxu0 0.0
    %2449 = vmatprep.subr.mxu0 0.0
    %v2450 = vand.u32 %v1876, 4294901760
    %v2451 = vsub.f32 %v1876, %v2450
    %v2452 = vand.u32 %v2451, 4294901760
    %v2453 = vsub.f32 %v2451, %v2452
    %v2454 = vand.u32 %v2453, 4294901760
    %2455 = vmatpush1.msra.mxu0 %v2454
    %2456 = vmatprep.subr.mxu0 0.0
    %2457 = vmatpush2.msra.mxu0 0.0
    %2458 = vmatprep.subr.mxu0 0.0
    %2459 = vmatpush2.msra.mxu0 0.0
    %2460 = vmatprep.subr.mxu0 0.0
    %2461 = vmatpush2.msra.mxu0 0.0
    %2462 = vmatprep.subr.mxu0 0.0
    %2463 = vmatpush2.msra.mxu0 0.0
    %2464 = vmatprep.subr.mxu0 0.0
    %2465 = vmatpush2.msra.mxu0 0.0
    %2466 = vmatprep.subr.mxu0 0.0
    %2467 = vmatpush2.msra.mxu0 0.0
    %2468 = vmatprep.subr.mxu0 0.0
    %2469 = vmatpush2.msra.mxu0 0.0
    %2470 = vmatprep.subr.mxu0 0.0
    %2471 = vmatpush2.msra.mxu0 0.0
    %2472 = vmatprep.subr.mxu0 0.0
    %2473 = vmatpush2.msra.mxu0 0.0
    %2474 = vmatprep.subr.mxu0 0.0
    %2475 = vmatpush2.msra.mxu0 0.0
    %2476 = vmatprep.subr.mxu0 0.0
    %2477 = vmatpush2.msra.mxu0 0.0
    %2478 = vmatprep.subr.mxu0 0.0
    %2479 = vmatpush2.msra.mxu0 0.0
    %2480 = vmatprep.subr.mxu0 0.0
    %2481 = vmatpush2.msra.mxu0 0.0
    %2482 = vmatprep.subr.mxu0 0.0
    %2483 = vmatpush2.msra.mxu0 0.0
    %2484 = vmatprep.subr.mxu0 0.0
    %2485 = vmatpush2.msra.mxu0 0.0
    %2486 = vmatprep.subr.mxu0 0.0
    %2487 = vmatpush2.msra.mxu0 0.0
    %2488 = vmatprep.mubr.f32.mxu0 0.0
    %v2489 = vand.u32 %v520, 4294901760
    %2490 = vmatmul.mubr.f32.gmra.mxu0 %v2489
    %v2491 = vpop.f32.mrf.mxu0
    %v2492 = vadd.f32 %v2416, %v2491
    %v2493 = vpop.f32.mrf.mxu0
    %2494 = vdwg.mxu0
    %2495 = vmatprep.subr.mxu0 0.0
    %2496 = vmatpush1.msra.mxu0 0.0
    %2497 = vmatprep.subr.mxu0 0.0
    %2498 = vmatpush1.msra.mxu0 0.0
    %2499 = vmatprep.subr.mxu0 0.0
    %2500 = vmatpush1.msra.mxu0 0.0
    %2501 = vmatprep.subr.mxu0 0.0
    %2502 = vmatpush1.msra.mxu0 0.0
    %2503 = vmatprep.subr.mxu0 0.0
    %2504 = vmatpush1.msra.mxu0 0.0
    %2505 = vmatprep.subr.mxu0 0.0
    %2506 = vmatpush1.msra.mxu0 0.0
    %2507 = vmatprep.subr.mxu0 0.0
    %2508 = vmatpush1.msra.mxu0 0.0
    %2509 = vmatprep.subr.mxu0 0.0
    %2510 = vmatpush1.msra.mxu0 0.0
    %2511 = vmatprep.subr.mxu0 0.0
    %2512 = vmatpush1.msra.mxu0 0.0
    %2513 = vmatprep.subr.mxu0 0.0
    %2514 = vmatpush1.msra.mxu0 0.0
    %2515 = vmatprep.subr.mxu0 0.0
    %2516 = vmatpush1.msra.mxu0 0.0
    %2517 = vmatprep.subr.mxu0 0.0
    %2518 = vmatpush1.msra.mxu0 0.0
    %2519 = vmatprep.subr.mxu0 0.0
    %2520 = vmatpush1.msra.mxu0 0.0
    %2521 = vmatprep.subr.mxu0 0.0
    %2522 = vmatpush1.msra.mxu0 0.0
    %2523 = vmatprep.subr.mxu0 0.0
    %2524 = vmatpush1.msra.mxu0 0.0
    %2525 = vmatprep.subr.mxu0 0.0
    %v2526 = vand.u32 %v1876, 4294901760
    %v2527 = vsub.f32 %v1876, %v2526
    %2528 = vmatpush1.msra.mxu0 %v2527
    %2529 = vmatprep.subr.mxu0 0.0
    %2530 = vmatpush2.msra.mxu0 0.0
    %2531 = vmatprep.subr.mxu0 0.0
    %2532 = vmatpush2.msra.mxu0 0.0
    %2533 = vmatprep.subr.mxu0 0.0
    %2534 = vmatpush2.msra.mxu0 0.0
    %2535 = vmatprep.subr.mxu0 0.0
    %2536 = vmatpush2.msra.mxu0 0.0
    %2537 = vmatprep.subr.mxu0 0.0
    %2538 = vmatpush2.msra.mxu0 0.0
    %2539 = vmatprep.subr.mxu0 0.0
    %2540 = vmatpush2.msra.mxu0 0.0
    %2541 = vmatprep.subr.mxu0 0.0
    %2542 = vmatpush2.msra.mxu0 0.0
    %2543 = vmatprep.subr.mxu0 0.0
    %2544 = vmatpush2.msra.mxu0 0.0
    %2545 = vmatprep.subr.mxu0 0.0
    %2546 = vmatpush2.msra.mxu0 0.0
    %2547 = vmatprep.subr.mxu0 0.0
    %2548 = vmatpush2.msra.mxu0 0.0
    %2549 = vmatprep.subr.mxu0 0.0
    %2550 = vmatpush2.msra.mxu0 0.0
    %2551 = vmatprep.subr.mxu0 0.0
    %2552 = vmatpush2.msra.mxu0 0.0
    %2553 = vmatprep.subr.mxu0 0.0
    %2554 = vmatpush2.msra.mxu0 0.0
    %2555 = vmatprep.subr.mxu0 0.0
    %2556 = vmatpush2.msra.mxu0 0.0
    %2557 = vmatprep.subr.mxu0 0.0
    %2558 = vmatpush2.msra.mxu0 0.0
    %2559 = vmatprep.subr.mxu0 0.0
    %2560 = vmatpush2.msra.mxu0 0.0
    %2561 = vmatprep.mubr.f32.mxu0 0.0
    %v2562 = vand.u32 %v520, 4294901760
    %v2563 = vsub.f32 %v520, %v2562
    %2564 = vmatmul.mubr.f32.gmra.mxu0 %v2563
    %v2565 = vpop.f32.mrf.mxu0
    %v2566 = vadd.f32 %v2492, %v2565
    %v2567 = vpop.f32.mrf.mxu0
    %2568 = vdwg.mxu0
    %2569 = vmatprep.subr.mxu0 0.0
    %2570 = vmatpush1.msra.mxu0 0.0
    %2571 = vmatprep.subr.mxu0 0.0
    %2572 = vmatpush1.msra.mxu0 0.0
    %2573 = vmatprep.subr.mxu0 0.0
    %2574 = vmatpush1.msra.mxu0 0.0
    %2575 = vmatprep.subr.mxu0 0.0
    %2576 = vmatpush1.msra.mxu0 0.0
    %2577 = vmatprep.subr.mxu0 0.0
    %2578 = vmatpush1.msra.mxu0 0.0
    %2579 = vmatprep.subr.mxu0 0.0
    %2580 = vmatpush1.msra.mxu0 0.0
    %2581 = vmatprep.subr.mxu0 0.0
    %2582 = vmatpush1.msra.mxu0 0.0
    %2583 = vmatprep.subr.mxu0 0.0
    %2584 = vmatpush1.msra.mxu0 0.0
    %2585 = vmatprep.subr.mxu0 0.0
    %2586 = vmatpush1.msra.mxu0 0.0
    %2587 = vmatprep.subr.mxu0 0.0
    %2588 = vmatpush1.msra.mxu0 0.0
    %2589 = vmatprep.subr.mxu0 0.0
    %2590 = vmatpush1.msra.mxu0 0.0
    %2591 = vmatprep.subr.mxu0 0.0
    %2592 = vmatpush1.msra.mxu0 0.0
    %2593 = vmatprep.subr.mxu0 0.0
    %2594 = vmatpush1.msra.mxu0 0.0
    %2595 = vmatprep.subr.mxu0 0.0
    %2596 = vmatpush1.msra.mxu0 0.0
    %2597 = vmatprep.subr.mxu0 0.0
    %2598 = vmatpush1.msra.mxu0 0.0
    %2599 = vmatprep.subr.mxu0 0.0
    %v2600 = vand.u32 %v1876, 4294901760
    %2601 = vmatpush1.msra.mxu0 %v2600
    %2602 = vmatprep.subr.mxu0 0.0
    %2603 = vmatpush2.msra.mxu0 0.0
    %2604 = vmatprep.subr.mxu0 0.0
    %2605 = vmatpush2.msra.mxu0 0.0
    %2606 = vmatprep.subr.mxu0 0.0
    %2607 = vmatpush2.msra.mxu0 0.0
    %2608 = vmatprep.subr.mxu0 0.0
    %2609 = vmatpush2.msra.mxu0 0.0
    %2610 = vmatprep.subr.mxu0 0.0
    %2611 = vmatpush2.msra.mxu0 0.0
    %2612 = vmatprep.subr.mxu0 0.0
    %2613 = vmatpush2.msra.mxu0 0.0
    %2614 = vmatprep.subr.mxu0 0.0
    %2615 = vmatpush2.msra.mxu0 0.0
    %2616 = vmatprep.subr.mxu0 0.0
    %2617 = vmatpush2.msra.mxu0 0.0
    %2618 = vmatprep.subr.mxu0 0.0
    %2619 = vmatpush2.msra.mxu0 0.0
    %2620 = vmatprep.subr.mxu0 0.0
    %2621 = vmatpush2.msra.mxu0 0.0
    %2622 = vmatprep.subr.mxu0 0.0
    %2623 = vmatpush2.msra.mxu0 0.0
    %2624 = vmatprep.subr.mxu0 0.0
    %2625 = vmatpush2.msra.mxu0 0.0
    %2626 = vmatprep.subr.mxu0 0.0
    %2627 = vmatpush2.msra.mxu0 0.0
    %2628 = vmatprep.subr.mxu0 0.0
    %2629 = vmatpush2.msra.mxu0 0.0
    %2630 = vmatprep.subr.mxu0 0.0
    %2631 = vmatpush2.msra.mxu0 0.0
    %2632 = vmatprep.subr.mxu0 0.0
    %2633 = vmatpush2.msra.mxu0 0.0
    %2634 = vmatprep.mubr.f32.mxu0 0.0
    %v2635 = vand.u32 %v520, 4294901760
    %v2636 = vsub.f32 %v520, %v2635
    %v2637 = vand.u32 %v2636, 4294901760
    %2638 = vmatmul.mubr.f32.gmra.mxu0 %v2637
    %v2639 = vpop.f32.mrf.mxu0
    %v2640 = vadd.f32 %v2566, %v2639
    %v2641 = vpop.f32.mrf.mxu0
    %2642 = vdwg.mxu0
    %2643 = vmatprep.subr.mxu0 0.0
    %2644 = vmatpush1.msra.mxu0 0.0
    %2645 = vmatprep.subr.mxu0 0.0
    %2646 = vmatpush1.msra.mxu0 0.0
    %2647 = vmatprep.subr.mxu0 0.0
    %2648 = vmatpush1.msra.mxu0 0.0
    %2649 = vmatprep.subr.mxu0 0.0
    %2650 = vmatpush1.msra.mxu0 0.0
    %2651 = vmatprep.subr.mxu0 0.0
    %2652 = vmatpush1.msra.mxu0 0.0
    %2653 = vmatprep.subr.mxu0 0.0
    %2654 = vmatpush1.msra.mxu0 0.0
    %2655 = vmatprep.subr.mxu0 0.0
    %2656 = vmatpush1.msra.mxu0 0.0
    %2657 = vmatprep.subr.mxu0 0.0
    %2658 = vmatpush1.msra.mxu0 0.0
    %2659 = vmatprep.subr.mxu0 0.0
    %2660 = vmatpush1.msra.mxu0 0.0
    %2661 = vmatprep.subr.mxu0 0.0
    %2662 = vmatpush1.msra.mxu0 0.0
    %2663 = vmatprep.subr.mxu0 0.0
    %2664 = vmatpush1.msra.mxu0 0.0
    %2665 = vmatprep.subr.mxu0 0.0
    %2666 = vmatpush1.msra.mxu0 0.0
    %2667 = vmatprep.subr.mxu0 0.0
    %2668 = vmatpush1.msra.mxu0 0.0
    %2669 = vmatprep.subr.mxu0 0.0
    %2670 = vmatpush1.msra.mxu0 0.0
    %2671 = vmatprep.subr.mxu0 0.0
    %2672 = vmatpush1.msra.mxu0 0.0
    %2673 = vmatprep.subr.mxu0 0.0
    %v2674 = vand.u32 %v1876, 4294901760
    %v2675 = vsub.f32 %v1876, %v2674
    %v2676 = vand.u32 %v2675, 4294901760
    %2677 = vmatpush1.msra.mxu0 %v2676
    %2678 = vmatprep.subr.mxu0 0.0
    %2679 = vmatpush2.msra.mxu0 0.0
    %2680 = vmatprep.subr.mxu0 0.0
    %2681 = vmatpush2.msra.mxu0 0.0
    %2682 = vmatprep.subr.mxu0 0.0
    %2683 = vmatpush2.msra.mxu0 0.0
    %2684 = vmatprep.subr.mxu0 0.0
    %2685 = vmatpush2.msra.mxu0 0.0
    %2686 = vmatprep.subr.mxu0 0.0
    %2687 = vmatpush2.msra.mxu0 0.0
    %2688 = vmatprep.subr.mxu0 0.0
    %2689 = vmatpush2.msra.mxu0 0.0
    %2690 = vmatprep.subr.mxu0 0.0
    %2691 = vmatpush2.msra.mxu0 0.0
    %2692 = vmatprep.subr.mxu0 0.0
    %2693 = vmatpush2.msra.mxu0 0.0
    %2694 = vmatprep.subr.mxu0 0.0
    %2695 = vmatpush2.msra.mxu0 0.0
    %2696 = vmatprep.subr.mxu0 0.0
    %2697 = vmatpush2.msra.mxu0 0.0
    %2698 = vmatprep.subr.mxu0 0.0
    %2699 = vmatpush2.msra.mxu0 0.0
    %2700 = vmatprep.subr.mxu0 0.0
    %2701 = vmatpush2.msra.mxu0 0.0
    %2702 = vmatprep.subr.mxu0 0.0
    %2703 = vmatpush2.msra.mxu0 0.0
    %2704 = vmatprep.subr.mxu0 0.0
    %2705 = vmatpush2.msra.mxu0 0.0
    %2706 = vmatprep.subr.mxu0 0.0
    %2707 = vmatpush2.msra.mxu0 0.0
    %2708 = vmatprep.subr.mxu0 0.0
    %2709 = vmatpush2.msra.mxu0 0.0
    %2710 = vmatprep.mubr.f32.mxu0 0.0
    %v2711 = vand.u32 %v520, 4294901760
    %2712 = vmatmul.mubr.f32.gmra.mxu0 %v2711
    %v2713 = vpop.f32.mrf.mxu0
    %v2714 = vadd.f32 %v2640, %v2713
    %v2715 = vpop.f32.mrf.mxu0
    %2716 = vdwg.mxu0
    %2717 = vmatprep.subr.mxu0 0.0
    %2718 = vmatpush1.msra.mxu0 0.0
    %2719 = vmatprep.subr.mxu0 0.0
    %2720 = vmatpush1.msra.mxu0 0.0
    %2721 = vmatprep.subr.mxu0 0.0
    %2722 = vmatpush1.msra.mxu0 0.0
    %2723 = vmatprep.subr.mxu0 0.0
    %2724 = vmatpush1.msra.mxu0 0.0
    %2725 = vmatprep.subr.mxu0 0.0
    %2726 = vmatpush1.msra.mxu0 0.0
    %2727 = vmatprep.subr.mxu0 0.0
    %2728 = vmatpush1.msra.mxu0 0.0
    %2729 = vmatprep.subr.mxu0 0.0
    %2730 = vmatpush1.msra.mxu0 0.0
    %2731 = vmatprep.subr.mxu0 0.0
    %2732 = vmatpush1.msra.mxu0 0.0
    %2733 = vmatprep.subr.mxu0 0.0
    %2734 = vmatpush1.msra.mxu0 0.0
    %2735 = vmatprep.subr.mxu0 0.0
    %2736 = vmatpush1.msra.mxu0 0.0
    %2737 = vmatprep.subr.mxu0 0.0
    %2738 = vmatpush1.msra.mxu0 0.0
    %2739 = vmatprep.subr.mxu0 0.0
    %2740 = vmatpush1.msra.mxu0 0.0
    %2741 = vmatprep.subr.mxu0 0.0
    %2742 = vmatpush1.msra.mxu0 0.0
    %2743 = vmatprep.subr.mxu0 0.0
    %2744 = vmatpush1.msra.mxu0 0.0
    %2745 = vmatprep.subr.mxu0 0.0
    %2746 = vmatpush1.msra.mxu0 0.0
    %2747 = vmatprep.subr.mxu0 0.0
    %v2748 = vand.u32 %v1876, 4294901760
    %2749 = vmatpush1.msra.mxu0 %v2748
    %2750 = vmatprep.subr.mxu0 0.0
    %2751 = vmatpush2.msra.mxu0 0.0
    %2752 = vmatprep.subr.mxu0 0.0
    %2753 = vmatpush2.msra.mxu0 0.0
    %2754 = vmatprep.subr.mxu0 0.0
    %2755 = vmatpush2.msra.mxu0 0.0
    %2756 = vmatprep.subr.mxu0 0.0
    %2757 = vmatpush2.msra.mxu0 0.0
    %2758 = vmatprep.subr.mxu0 0.0
    %2759 = vmatpush2.msra.mxu0 0.0
    %2760 = vmatprep.subr.mxu0 0.0
    %2761 = vmatpush2.msra.mxu0 0.0
    %2762 = vmatprep.subr.mxu0 0.0
    %2763 = vmatpush2.msra.mxu0 0.0
    %2764 = vmatprep.subr.mxu0 0.0
    %2765 = vmatpush2.msra.mxu0 0.0
    %2766 = vmatprep.subr.mxu0 0.0
    %2767 = vmatpush2.msra.mxu0 0.0
    %2768 = vmatprep.subr.mxu0 0.0
    %2769 = vmatpush2.msra.mxu0 0.0
    %2770 = vmatprep.subr.mxu0 0.0
    %2771 = vmatpush2.msra.mxu0 0.0
    %2772 = vmatprep.subr.mxu0 0.0
    %2773 = vmatpush2.msra.mxu0 0.0
    %2774 = vmatprep.subr.mxu0 0.0
    %2775 = vmatpush2.msra.mxu0 0.0
    %2776 = vmatprep.subr.mxu0 0.0
    %2777 = vmatpush2.msra.mxu0 0.0
    %2778 = vmatprep.subr.mxu0 0.0
    %2779 = vmatpush2.msra.mxu0 0.0
    %2780 = vmatprep.subr.mxu0 0.0
    %2781 = vmatpush2.msra.mxu0 0.0
    %2782 = vmatprep.mubr.f32.mxu0 0.0
    %v2783 = vand.u32 %v520, 4294901760
    %2784 = vmatmul.mubr.f32.gmra.mxu0 %v2783
    %v2785 = vpop.f32.mrf.mxu0
    %v2786 = vadd.f32 %v2714, %v2785
    %v2787 = vpop.f32.mrf.mxu0
    %2788 = vdwg.mxu0
    %v2789 = vadd.f32 %v2786, %v971
    %2790 = vmatprep.subr.mxu0 0.0
    %2791 = vmatpush1.msra.mxu0 0.0
    %2792 = vmatprep.subr.mxu0 0.0
    %2793 = vmatpush1.msra.mxu0 0.0
    %2794 = vmatprep.subr.mxu0 0.0
    %2795 = vmatpush1.msra.mxu0 0.0
    %2796 = vmatprep.subr.mxu0 0.0
    %2797 = vmatpush1.msra.mxu0 0.0
    %2798 = vmatprep.subr.mxu0 0.0
    %2799 = vmatpush1.msra.mxu0 0.0
    %2800 = vmatprep.subr.mxu0 0.0
    %2801 = vmatpush1.msra.mxu0 0.0
    %2802 = vmatprep.subr.mxu0 0.0
    %2803 = vmatpush1.msra.mxu0 0.0
    %2804 = vmatprep.subr.mxu0 0.0
    %2805 = vmatpush1.msra.mxu0 0.0
    %2806 = vmatprep.subr.mxu0 0.0
    %2807 = vmatpush1.msra.mxu0 0.0
    %2808 = vmatprep.subr.mxu0 0.0
    %2809 = vmatpush1.msra.mxu0 0.0
    %2810 = vmatprep.subr.mxu0 0.0
    %2811 = vmatpush1.msra.mxu0 0.0
    %2812 = vmatprep.subr.mxu0 0.0
    %2813 = vmatpush1.msra.mxu0 0.0
    %2814 = vmatprep.subr.mxu0 0.0
    %2815 = vmatpush1.msra.mxu0 0.0
    %2816 = vmatprep.subr.mxu0 0.0
    %2817 = vmatpush1.msra.mxu0 0.0
    %2818 = vmatprep.subr.mxu0 0.0
    %2819 = vmatpush1.msra.mxu0 0.0
    %2820 = vmatprep.subr.mxu0 0.0
    %v2821 = vand.u32 %v1896, 4294901760
    %2822 = vmatpush1.msra.mxu0 %v2821
    %2823 = vmatprep.subr.mxu0 0.0
    %2824 = vmatpush2.msra.mxu0 0.0
    %2825 = vmatprep.subr.mxu0 0.0
    %2826 = vmatpush2.msra.mxu0 0.0
    %2827 = vmatprep.subr.mxu0 0.0
    %2828 = vmatpush2.msra.mxu0 0.0
    %2829 = vmatprep.subr.mxu0 0.0
    %2830 = vmatpush2.msra.mxu0 0.0
    %2831 = vmatprep.subr.mxu0 0.0
    %2832 = vmatpush2.msra.mxu0 0.0
    %2833 = vmatprep.subr.mxu0 0.0
    %2834 = vmatpush2.msra.mxu0 0.0
    %2835 = vmatprep.subr.mxu0 0.0
    %2836 = vmatpush2.msra.mxu0 0.0
    %2837 = vmatprep.subr.mxu0 0.0
    %2838 = vmatpush2.msra.mxu0 0.0
    %2839 = vmatprep.subr.mxu0 0.0
    %2840 = vmatpush2.msra.mxu0 0.0
    %2841 = vmatprep.subr.mxu0 0.0
    %2842 = vmatpush2.msra.mxu0 0.0
    %2843 = vmatprep.subr.mxu0 0.0
    %2844 = vmatpush2.msra.mxu0 0.0
    %2845 = vmatprep.subr.mxu0 0.0
    %2846 = vmatpush2.msra.mxu0 0.0
    %2847 = vmatprep.subr.mxu0 0.0
    %2848 = vmatpush2.msra.mxu0 0.0
    %2849 = vmatprep.subr.mxu0 0.0
    %2850 = vmatpush2.msra.mxu0 0.0
    %2851 = vmatprep.subr.mxu0 0.0
    %2852 = vmatpush2.msra.mxu0 0.0
    %2853 = vmatprep.subr.mxu0 0.0
    %2854 = vmatpush2.msra.mxu0 0.0
    %2855 = vmatprep.mubr.f32.mxu0 0.0
    %v2856 = vand.u32 %v975, 4294901760
    %v2857 = vsub.f32 %v975, %v2856
    %v2858 = vand.u32 %v2857, 4294901760
    %v2859 = vsub.f32 %v2857, %v2858
    %v2860 = vand.u32 %v2859, 4294901760
    %2861 = vmatmul.mubr.f32.gmra.mxu0 %v2860
    %v2862 = vpop.f32.mrf.mxu0
    %v2863 = vadd.f32 0.0, %v2862
    %v2864 = vpop.f32.mrf.mxu0
    %2865 = vdwg.mxu0
    %2866 = vmatprep.subr.mxu0 0.0
    %2867 = vmatpush1.msra.mxu0 0.0
    %2868 = vmatprep.subr.mxu0 0.0
    %2869 = vmatpush1.msra.mxu0 0.0
    %2870 = vmatprep.subr.mxu0 0.0
    %2871 = vmatpush1.msra.mxu0 0.0
    %2872 = vmatprep.subr.mxu0 0.0
    %2873 = vmatpush1.msra.mxu0 0.0
    %2874 = vmatprep.subr.mxu0 0.0
    %2875 = vmatpush1.msra.mxu0 0.0
    %2876 = vmatprep.subr.mxu0 0.0
    %2877 = vmatpush1.msra.mxu0 0.0
    %2878 = vmatprep.subr.mxu0 0.0
    %2879 = vmatpush1.msra.mxu0 0.0
    %2880 = vmatprep.subr.mxu0 0.0
    %2881 = vmatpush1.msra.mxu0 0.0
    %2882 = vmatprep.subr.mxu0 0.0
    %2883 = vmatpush1.msra.mxu0 0.0
    %2884 = vmatprep.subr.mxu0 0.0
    %2885 = vmatpush1.msra.mxu0 0.0
    %2886 = vmatprep.subr.mxu0 0.0
    %2887 = vmatpush1.msra.mxu0 0.0
    %2888 = vmatprep.subr.mxu0 0.0
    %2889 = vmatpush1.msra.mxu0 0.0
    %2890 = vmatprep.subr.mxu0 0.0
    %2891 = vmatpush1.msra.mxu0 0.0
    %2892 = vmatprep.subr.mxu0 0.0
    %2893 = vmatpush1.msra.mxu0 0.0
    %2894 = vmatprep.subr.mxu0 0.0
    %2895 = vmatpush1.msra.mxu0 0.0
    %2896 = vmatprep.subr.mxu0 0.0
    %v2897 = vand.u32 %v1896, 4294901760
    %v2898 = vsub.f32 %v1896, %v2897
    %v2899 = vand.u32 %v2898, 4294901760
    %v2900 = vsub.f32 %v2898, %v2899
    %v2901 = vand.u32 %v2900, 4294901760
    %2902 = vmatpush1.msra.mxu0 %v2901
    %2903 = vmatprep.subr.mxu0 0.0
    %2904 = vmatpush2.msra.mxu0 0.0
    %2905 = vmatprep.subr.mxu0 0.0
    %2906 = vmatpush2.msra.mxu0 0.0
    %2907 = vmatprep.subr.mxu0 0.0
    %2908 = vmatpush2.msra.mxu0 0.0
    %2909 = vmatprep.subr.mxu0 0.0
    %2910 = vmatpush2.msra.mxu0 0.0
    %2911 = vmatprep.subr.mxu0 0.0
    %2912 = vmatpush2.msra.mxu0 0.0
    %2913 = vmatprep.subr.mxu0 0.0
    %2914 = vmatpush2.msra.mxu0 0.0
    %2915 = vmatprep.subr.mxu0 0.0
    %2916 = vmatpush2.msra.mxu0 0.0
    %2917 = vmatprep.subr.mxu0 0.0
    %2918 = vmatpush2.msra.mxu0 0.0
    %2919 = vmatprep.subr.mxu0 0.0
    %2920 = vmatpush2.msra.mxu0 0.0
    %2921 = vmatprep.subr.mxu0 0.0
    %2922 = vmatpush2.msra.mxu0 0.0
    %2923 = vmatprep.subr.mxu0 0.0
    %2924 = vmatpush2.msra.mxu0 0.0
    %2925 = vmatprep.subr.mxu0 0.0
    %2926 = vmatpush2.msra.mxu0 0.0
    %2927 = vmatprep.subr.mxu0 0.0
    %2928 = vmatpush2.msra.mxu0 0.0
    %2929 = vmatprep.subr.mxu0 0.0
    %2930 = vmatpush2.msra.mxu0 0.0
    %2931 = vmatprep.subr.mxu0 0.0
    %2932 = vmatpush2.msra.mxu0 0.0
    %2933 = vmatprep.subr.mxu0 0.0
    %2934 = vmatpush2.msra.mxu0 0.0
    %2935 = vmatprep.mubr.f32.mxu0 0.0
    %v2936 = vand.u32 %v975, 4294901760
    %2937 = vmatmul.mubr.f32.gmra.mxu0 %v2936
    %v2938 = vpop.f32.mrf.mxu0
    %v2939 = vadd.f32 %v2863, %v2938
    %v2940 = vpop.f32.mrf.mxu0
    %2941 = vdwg.mxu0
    %2942 = vmatprep.subr.mxu0 0.0
    %2943 = vmatpush1.msra.mxu0 0.0
    %2944 = vmatprep.subr.mxu0 0.0
    %2945 = vmatpush1.msra.mxu0 0.0
    %2946 = vmatprep.subr.mxu0 0.0
    %2947 = vmatpush1.msra.mxu0 0.0
    %2948 = vmatprep.subr.mxu0 0.0
    %2949 = vmatpush1.msra.mxu0 0.0
    %2950 = vmatprep.subr.mxu0 0.0
    %2951 = vmatpush1.msra.mxu0 0.0
    %2952 = vmatprep.subr.mxu0 0.0
    %2953 = vmatpush1.msra.mxu0 0.0
    %2954 = vmatprep.subr.mxu0 0.0
    %2955 = vmatpush1.msra.mxu0 0.0
    %2956 = vmatprep.subr.mxu0 0.0
    %2957 = vmatpush1.msra.mxu0 0.0
    %2958 = vmatprep.subr.mxu0 0.0
    %2959 = vmatpush1.msra.mxu0 0.0
    %2960 = vmatprep.subr.mxu0 0.0
    %2961 = vmatpush1.msra.mxu0 0.0
    %2962 = vmatprep.subr.mxu0 0.0
    %2963 = vmatpush1.msra.mxu0 0.0
    %2964 = vmatprep.subr.mxu0 0.0
    %2965 = vmatpush1.msra.mxu0 0.0
    %2966 = vmatprep.subr.mxu0 0.0
    %2967 = vmatpush1.msra.mxu0 0.0
    %2968 = vmatprep.subr.mxu0 0.0
    %2969 = vmatpush1.msra.mxu0 0.0
    %2970 = vmatprep.subr.mxu0 0.0
    %2971 = vmatpush1.msra.mxu0 0.0
    %2972 = vmatprep.subr.mxu0 0.0
    %v2973 = vand.u32 %v1896, 4294901760
    %v2974 = vsub.f32 %v1896, %v2973
    %2975 = vmatpush1.msra.mxu0 %v2974
    %2976 = vmatprep.subr.mxu0 0.0
    %2977 = vmatpush2.msra.mxu0 0.0
    %2978 = vmatprep.subr.mxu0 0.0
    %2979 = vmatpush2.msra.mxu0 0.0
    %2980 = vmatprep.subr.mxu0 0.0
    %2981 = vmatpush2.msra.mxu0 0.0
    %2982 = vmatprep.subr.mxu0 0.0
    %2983 = vmatpush2.msra.mxu0 0.0
    %2984 = vmatprep.subr.mxu0 0.0
    %2985 = vmatpush2.msra.mxu0 0.0
    %2986 = vmatprep.subr.mxu0 0.0
    %2987 = vmatpush2.msra.mxu0 0.0
    %2988 = vmatprep.subr.mxu0 0.0
    %2989 = vmatpush2.msra.mxu0 0.0
    %2990 = vmatprep.subr.mxu0 0.0
    %2991 = vmatpush2.msra.mxu0 0.0
    %2992 = vmatprep.subr.mxu0 0.0
    %2993 = vmatpush2.msra.mxu0 0.0
    %2994 = vmatprep.subr.mxu0 0.0
    %2995 = vmatpush2.msra.mxu0 0.0
    %2996 = vmatprep.subr.mxu0 0.0
    %2997 = vmatpush2.msra.mxu0 0.0
    %2998 = vmatprep.subr.mxu0 0.0
    %2999 = vmatpush2.msra.mxu0 0.0
    %3000 = vmatprep.subr.mxu0 0.0
    %3001 = vmatpush2.msra.mxu0 0.0
    %3002 = vmatprep.subr.mxu0 0.0
    %3003 = vmatpush2.msra.mxu0 0.0
    %3004 = vmatprep.subr.mxu0 0.0
    %3005 = vmatpush2.msra.mxu0 0.0
    %3006 = vmatprep.subr.mxu0 0.0
    %3007 = vmatpush2.msra.mxu0 0.0
    %3008 = vmatprep.mubr.f32.mxu0 0.0
    %v3009 = vand.u32 %v975, 4294901760
    %v3010 = vsub.f32 %v975, %v3009
    %3011 = vmatmul.mubr.f32.gmra.mxu0 %v3010
    %v3012 = vpop.f32.mrf.mxu0
    %v3013 = vadd.f32 %v2939, %v3012
    %v3014 = vpop.f32.mrf.mxu0
    %3015 = vdwg.mxu0
    %3016 = vmatprep.subr.mxu0 0.0
    %3017 = vmatpush1.msra.mxu0 0.0
    %3018 = vmatprep.subr.mxu0 0.0
    %3019 = vmatpush1.msra.mxu0 0.0
    %3020 = vmatprep.subr.mxu0 0.0
    %3021 = vmatpush1.msra.mxu0 0.0
    %3022 = vmatprep.subr.mxu0 0.0
    %3023 = vmatpush1.msra.mxu0 0.0
    %3024 = vmatprep.subr.mxu0 0.0
    %3025 = vmatpush1.msra.mxu0 0.0
    %3026 = vmatprep.subr.mxu0 0.0
    %3027 = vmatpush1.msra.mxu0 0.0
    %3028 = vmatprep.subr.mxu0 0.0
    %3029 = vmatpush1.msra.mxu0 0.0
    %3030 = vmatprep.subr.mxu0 0.0
    %3031 = vmatpush1.msra.mxu0 0.0
    %3032 = vmatprep.subr.mxu0 0.0
    %3033 = vmatpush1.msra.mxu0 0.0
    %3034 = vmatprep.subr.mxu0 0.0
    %3035 = vmatpush1.msra.mxu0 0.0
    %3036 = vmatprep.subr.mxu0 0.0
    %3037 = vmatpush1.msra.mxu0 0.0
    %3038 = vmatprep.subr.mxu0 0.0
    %3039 = vmatpush1.msra.mxu0 0.0
    %3040 = vmatprep.subr.mxu0 0.0
    %3041 = vmatpush1.msra.mxu0 0.0
    %3042 = vmatprep.subr.mxu0 0.0
    %3043 = vmatpush1.msra.mxu0 0.0
    %3044 = vmatprep.subr.mxu0 0.0
    %3045 = vmatpush1.msra.mxu0 0.0
    %3046 = vmatprep.subr.mxu0 0.0
    %v3047 = vand.u32 %v1896, 4294901760
    %3048 = vmatpush1.msra.mxu0 %v3047
    %3049 = vmatprep.subr.mxu0 0.0
    %3050 = vmatpush2.msra.mxu0 0.0
    %3051 = vmatprep.subr.mxu0 0.0
    %3052 = vmatpush2.msra.mxu0 0.0
    %3053 = vmatprep.subr.mxu0 0.0
    %3054 = vmatpush2.msra.mxu0 0.0
    %3055 = vmatprep.subr.mxu0 0.0
    %3056 = vmatpush2.msra.mxu0 0.0
    %3057 = vmatprep.subr.mxu0 0.0
    %3058 = vmatpush2.msra.mxu0 0.0
    %3059 = vmatprep.subr.mxu0 0.0
    %3060 = vmatpush2.msra.mxu0 0.0
    %3061 = vmatprep.subr.mxu0 0.0
    %3062 = vmatpush2.msra.mxu0 0.0
    %3063 = vmatprep.subr.mxu0 0.0
    %3064 = vmatpush2.msra.mxu0 0.0
    %3065 = vmatprep.subr.mxu0 0.0
    %3066 = vmatpush2.msra.mxu0 0.0
    %3067 = vmatprep.subr.mxu0 0.0
    %3068 = vmatpush2.msra.mxu0 0.0
    %3069 = vmatprep.subr.mxu0 0.0
    %3070 = vmatpush2.msra.mxu0 0.0
    %3071 = vmatprep.subr.mxu0 0.0
    %3072 = vmatpush2.msra.mxu0 0.0
    %3073 = vmatprep.subr.mxu0 0.0
    %3074 = vmatpush2.msra.mxu0 0.0
    %3075 = vmatprep.subr.mxu0 0.0
    %3076 = vmatpush2.msra.mxu0 0.0
    %3077 = vmatprep.subr.mxu0 0.0
    %3078 = vmatpush2.msra.mxu0 0.0
    %3079 = vmatprep.subr.mxu0 0.0
    %3080 = vmatpush2.msra.mxu0 0.0
    %3081 = vmatprep.mubr.f32.mxu0 0.0
    %v3082 = vand.u32 %v975, 4294901760
    %v3083 = vsub.f32 %v975, %v3082
    %v3084 = vand.u32 %v3083, 4294901760
    %3085 = vmatmul.mubr.f32.gmra.mxu0 %v3084
    %v3086 = vpop.f32.mrf.mxu0
    %v3087 = vadd.f32 %v3013, %v3086
    %v3088 = vpop.f32.mrf.mxu0
    %3089 = vdwg.mxu0
    %3090 = vmatprep.subr.mxu0 0.0
    %3091 = vmatpush1.msra.mxu0 0.0
    %3092 = vmatprep.subr.mxu0 0.0
    %3093 = vmatpush1.msra.mxu0 0.0
    %3094 = vmatprep.subr.mxu0 0.0
    %3095 = vmatpush1.msra.mxu0 0.0
    %3096 = vmatprep.subr.mxu0 0.0
    %3097 = vmatpush1.msra.mxu0 0.0
    %3098 = vmatprep.subr.mxu0 0.0
    %3099 = vmatpush1.msra.mxu0 0.0
    %3100 = vmatprep.subr.mxu0 0.0
    %3101 = vmatpush1.msra.mxu0 0.0
    %3102 = vmatprep.subr.mxu0 0.0
    %3103 = vmatpush1.msra.mxu0 0.0
    %3104 = vmatprep.subr.mxu0 0.0
    %3105 = vmatpush1.msra.mxu0 0.0
    %3106 = vmatprep.subr.mxu0 0.0
    %3107 = vmatpush1.msra.mxu0 0.0
    %3108 = vmatprep.subr.mxu0 0.0
    %3109 = vmatpush1.msra.mxu0 0.0
    %3110 = vmatprep.subr.mxu0 0.0
    %3111 = vmatpush1.msra.mxu0 0.0
    %3112 = vmatprep.subr.mxu0 0.0
    %3113 = vmatpush1.msra.mxu0 0.0
    %3114 = vmatprep.subr.mxu0 0.0
    %3115 = vmatpush1.msra.mxu0 0.0
    %3116 = vmatprep.subr.mxu0 0.0
    %3117 = vmatpush1.msra.mxu0 0.0
    %3118 = vmatprep.subr.mxu0 0.0
    %3119 = vmatpush1.msra.mxu0 0.0
    %3120 = vmatprep.subr.mxu0 0.0
    %v3121 = vand.u32 %v1896, 4294901760
    %v3122 = vsub.f32 %v1896, %v3121
    %v3123 = vand.u32 %v3122, 4294901760
    %3124 = vmatpush1.msra.mxu0 %v3123
    %3125 = vmatprep.subr.mxu0 0.0
    %3126 = vmatpush2.msra.mxu0 0.0
    %3127 = vmatprep.subr.mxu0 0.0
    %3128 = vmatpush2.msra.mxu0 0.0
    %3129 = vmatprep.subr.mxu0 0.0
    %3130 = vmatpush2.msra.mxu0 0.0
    %3131 = vmatprep.subr.mxu0 0.0
    %3132 = vmatpush2.msra.mxu0 0.0
    %3133 = vmatprep.subr.mxu0 0.0
    %3134 = vmatpush2.msra.mxu0 0.0
    %3135 = vmatprep.subr.mxu0 0.0
    %3136 = vmatpush2.msra.mxu0 0.0
    %3137 = vmatprep.subr.mxu0 0.0
    %3138 = vmatpush2.msra.mxu0 0.0
    %3139 = vmatprep.subr.mxu0 0.0
    %3140 = vmatpush2.msra.mxu0 0.0
    %3141 = vmatprep.subr.mxu0 0.0
    %3142 = vmatpush2.msra.mxu0 0.0
    %3143 = vmatprep.subr.mxu0 0.0
    %3144 = vmatpush2.msra.mxu0 0.0
    %3145 = vmatprep.subr.mxu0 0.0
    %3146 = vmatpush2.msra.mxu0 0.0
    %3147 = vmatprep.subr.mxu0 0.0
    %3148 = vmatpush2.msra.mxu0 0.0
    %3149 = vmatprep.subr.mxu0 0.0
    %3150 = vmatpush2.msra.mxu0 0.0
    %3151 = vmatprep.subr.mxu0 0.0
    %3152 = vmatpush2.msra.mxu0 0.0
    %3153 = vmatprep.subr.mxu0 0.0
    %3154 = vmatpush2.msra.mxu0 0.0
    %3155 = vmatprep.subr.mxu0 0.0
    %3156 = vmatpush2.msra.mxu0 0.0
    %3157 = vmatprep.mubr.f32.mxu0 0.0
    %v3158 = vand.u32 %v975, 4294901760
    %3159 = vmatmul.mubr.f32.gmra.mxu0 %v3158
    %v3160 = vpop.f32.mrf.mxu0
    %v3161 = vadd.f32 %v3087, %v3160
    %v3162 = vpop.f32.mrf.mxu0
    %3163 = vdwg.mxu0
    %3164 = vmatprep.subr.mxu0 0.0
    %3165 = vmatpush1.msra.mxu0 0.0
    %3166 = vmatprep.subr.mxu0 0.0
    %3167 = vmatpush1.msra.mxu0 0.0
    %3168 = vmatprep.subr.mxu0 0.0
    %3169 = vmatpush1.msra.mxu0 0.0
    %3170 = vmatprep.subr.mxu0 0.0
    %3171 = vmatpush1.msra.mxu0 0.0
    %3172 = vmatprep.subr.mxu0 0.0
    %3173 = vmatpush1.msra.mxu0 0.0
    %3174 = vmatprep.subr.mxu0 0.0
    %3175 = vmatpush1.msra.mxu0 0.0
    %3176 = vmatprep.subr.mxu0 0.0
    %3177 = vmatpush1.msra.mxu0 0.0
    %3178 = vmatprep.subr.mxu0 0.0
    %3179 = vmatpush1.msra.mxu0 0.0
    %3180 = vmatprep.subr.mxu0 0.0
    %3181 = vmatpush1.msra.mxu0 0.0
    %3182 = vmatprep.subr.mxu0 0.0
    %3183 = vmatpush1.msra.mxu0 0.0
    %3184 = vmatprep.subr.mxu0 0.0
    %3185 = vmatpush1.msra.mxu0 0.0
    %3186 = vmatprep.subr.mxu0 0.0
    %3187 = vmatpush1.msra.mxu0 0.0
    %3188 = vmatprep.subr.mxu0 0.0
    %3189 = vmatpush1.msra.mxu0 0.0
    %3190 = vmatprep.subr.mxu0 0.0
    %3191 = vmatpush1.msra.mxu0 0.0
    %3192 = vmatprep.subr.mxu0 0.0
    %3193 = vmatpush1.msra.mxu0 0.0
    %3194 = vmatprep.subr.mxu0 0.0
    %v3195 = vand.u32 %v1896, 4294901760
    %3196 = vmatpush1.msra.mxu0 %v3195
    %3197 = vmatprep.subr.mxu0 0.0
    %3198 = vmatpush2.msra.mxu0 0.0
    %3199 = vmatprep.subr.mxu0 0.0
    %3200 = vmatpush2.msra.mxu0 0.0
    %3201 = vmatprep.subr.mxu0 0.0
    %3202 = vmatpush2.msra.mxu0 0.0
    %3203 = vmatprep.subr.mxu0 0.0
    %3204 = vmatpush2.msra.mxu0 0.0
    %3205 = vmatprep.subr.mxu0 0.0
    %3206 = vmatpush2.msra.mxu0 0.0
    %3207 = vmatprep.subr.mxu0 0.0
    %3208 = vmatpush2.msra.mxu0 0.0
    %3209 = vmatprep.subr.mxu0 0.0
    %3210 = vmatpush2.msra.mxu0 0.0
    %3211 = vmatprep.subr.mxu0 0.0
    %3212 = vmatpush2.msra.mxu0 0.0
    %3213 = vmatprep.subr.mxu0 0.0
    %3214 = vmatpush2.msra.mxu0 0.0
    %3215 = vmatprep.subr.mxu0 0.0
    %3216 = vmatpush2.msra.mxu0 0.0
    %3217 = vmatprep.subr.mxu0 0.0
    %3218 = vmatpush2.msra.mxu0 0.0
    %3219 = vmatprep.subr.mxu0 0.0
    %3220 = vmatpush2.msra.mxu0 0.0
    %3221 = vmatprep.subr.mxu0 0.0
    %3222 = vmatpush2.msra.mxu0 0.0
    %3223 = vmatprep.subr.mxu0 0.0
    %3224 = vmatpush2.msra.mxu0 0.0
    %3225 = vmatprep.subr.mxu0 0.0
    %3226 = vmatpush2.msra.mxu0 0.0
    %3227 = vmatprep.subr.mxu0 0.0
    %3228 = vmatpush2.msra.mxu0 0.0
    %3229 = vmatprep.mubr.f32.mxu0 0.0
    %v3230 = vand.u32 %v975, 4294901760
    %3231 = vmatmul.mubr.f32.gmra.mxu0 %v3230
    %v3232 = vpop.f32.mrf.mxu0
    %v3233 = vadd.f32 %v3161, %v3232
    %v3234 = vpop.f32.mrf.mxu0
    %3235 = vdwg.mxu0
    %3236 = vmatprep.subr.mxu0 0.0
    %3237 = vmatpush1.msra.mxu0 0.0
    %3238 = vmatprep.subr.mxu0 0.0
    %3239 = vmatpush1.msra.mxu0 0.0
    %3240 = vmatprep.subr.mxu0 0.0
    %3241 = vmatpush1.msra.mxu0 0.0
    %3242 = vmatprep.subr.mxu0 0.0
    %3243 = vmatpush1.msra.mxu0 0.0
    %3244 = vmatprep.subr.mxu0 0.0
    %3245 = vmatpush1.msra.mxu0 0.0
    %3246 = vmatprep.subr.mxu0 0.0
    %3247 = vmatpush1.msra.mxu0 0.0
    %3248 = vmatprep.subr.mxu0 0.0
    %3249 = vmatpush1.msra.mxu0 0.0
    %3250 = vmatprep.subr.mxu0 0.0
    %3251 = vmatpush1.msra.mxu0 0.0
    %3252 = vmatprep.subr.mxu0 0.0
    %3253 = vmatpush1.msra.mxu0 0.0
    %3254 = vmatprep.subr.mxu0 0.0
    %3255 = vmatpush1.msra.mxu0 0.0
    %3256 = vmatprep.subr.mxu0 0.0
    %3257 = vmatpush1.msra.mxu0 0.0
    %3258 = vmatprep.subr.mxu0 0.0
    %3259 = vmatpush1.msra.mxu0 0.0
    %3260 = vmatprep.subr.mxu0 0.0
    %3261 = vmatpush1.msra.mxu0 0.0
    %3262 = vmatprep.subr.mxu0 0.0
    %3263 = vmatpush1.msra.mxu0 0.0
    %3264 = vmatprep.subr.mxu0 0.0
    %3265 = vmatpush1.msra.mxu0 0.0
    %3266 = vmatprep.subr.mxu0 0.0
    %v3267 = vand.u32 %v1876, 4294901760
    %3268 = vmatpush1.msra.mxu0 %v3267
    %3269 = vmatprep.subr.mxu0 0.0
    %3270 = vmatpush2.msra.mxu0 0.0
    %3271 = vmatprep.subr.mxu0 0.0
    %3272 = vmatpush2.msra.mxu0 0.0
    %3273 = vmatprep.subr.mxu0 0.0
    %3274 = vmatpush2.msra.mxu0 0.0
    %3275 = vmatprep.subr.mxu0 0.0
    %3276 = vmatpush2.msra.mxu0 0.0
    %3277 = vmatprep.subr.mxu0 0.0
    %3278 = vmatpush2.msra.mxu0 0.0
    %3279 = vmatprep.subr.mxu0 0.0
    %3280 = vmatpush2.msra.mxu0 0.0
    %3281 = vmatprep.subr.mxu0 0.0
    %3282 = vmatpush2.msra.mxu0 0.0
    %3283 = vmatprep.subr.mxu0 0.0
    %3284 = vmatpush2.msra.mxu0 0.0
    %3285 = vmatprep.subr.mxu0 0.0
    %3286 = vmatpush2.msra.mxu0 0.0
    %3287 = vmatprep.subr.mxu0 0.0
    %3288 = vmatpush2.msra.mxu0 0.0
    %3289 = vmatprep.subr.mxu0 0.0
    %3290 = vmatpush2.msra.mxu0 0.0
    %3291 = vmatprep.subr.mxu0 0.0
    %3292 = vmatpush2.msra.mxu0 0.0
    %3293 = vmatprep.subr.mxu0 0.0
    %3294 = vmatpush2.msra.mxu0 0.0
    %3295 = vmatprep.subr.mxu0 0.0
    %3296 = vmatpush2.msra.mxu0 0.0
    %3297 = vmatprep.subr.mxu0 0.0
    %3298 = vmatpush2.msra.mxu0 0.0
    %3299 = vmatprep.subr.mxu0 0.0
    %3300 = vmatpush2.msra.mxu0 0.0
    %3301 = vmatprep.mubr.f32.mxu0 0.0
    %v3302 = vand.u32 %v1424, 4294901760
    %v3303 = vsub.f32 %v1424, %v3302
    %v3304 = vand.u32 %v3303, 4294901760
    %v3305 = vsub.f32 %v3303, %v3304
    %v3306 = vand.u32 %v3305, 4294901760
    %3307 = vmatmul.mubr.f32.gmra.mxu0 %v3306
    %v3308 = vpop.f32.mrf.mxu0
    %v3309 = vadd.f32 %v3233, %v3308
    %v3310 = vpop.f32.mrf.mxu0
    %3311 = vdwg.mxu0
    %3312 = vmatprep.subr.mxu0 0.0
    %3313 = vmatpush1.msra.mxu0 0.0
    %3314 = vmatprep.subr.mxu0 0.0
    %3315 = vmatpush1.msra.mxu0 0.0
    %3316 = vmatprep.subr.mxu0 0.0
    %3317 = vmatpush1.msra.mxu0 0.0
    %3318 = vmatprep.subr.mxu0 0.0
    %3319 = vmatpush1.msra.mxu0 0.0
    %3320 = vmatprep.subr.mxu0 0.0
    %3321 = vmatpush1.msra.mxu0 0.0
    %3322 = vmatprep.subr.mxu0 0.0
    %3323 = vmatpush1.msra.mxu0 0.0
    %3324 = vmatprep.subr.mxu0 0.0
    %3325 = vmatpush1.msra.mxu0 0.0
    %3326 = vmatprep.subr.mxu0 0.0
    %3327 = vmatpush1.msra.mxu0 0.0
    %3328 = vmatprep.subr.mxu0 0.0
    %3329 = vmatpush1.msra.mxu0 0.0
    %3330 = vmatprep.subr.mxu0 0.0
    %3331 = vmatpush1.msra.mxu0 0.0
    %3332 = vmatprep.subr.mxu0 0.0
    %3333 = vmatpush1.msra.mxu0 0.0
    %3334 = vmatprep.subr.mxu0 0.0
    %3335 = vmatpush1.msra.mxu0 0.0
    %3336 = vmatprep.subr.mxu0 0.0
    %3337 = vmatpush1.msra.mxu0 0.0
    %3338 = vmatprep.subr.mxu0 0.0
    %3339 = vmatpush1.msra.mxu0 0.0
    %3340 = vmatprep.subr.mxu0 0.0
    %3341 = vmatpush1.msra.mxu0 0.0
    %3342 = vmatprep.subr.mxu0 0.0
    %v3343 = vand.u32 %v1876, 4294901760
    %v3344 = vsub.f32 %v1876, %v3343
    %v3345 = vand.u32 %v3344, 4294901760
    %v3346 = vsub.f32 %v3344, %v3345
    %v3347 = vand.u32 %v3346, 4294901760
    %3348 = vmatpush1.msra.mxu0 %v3347
    %3349 = vmatprep.subr.mxu0 0.0
    %3350 = vmatpush2.msra.mxu0 0.0
    %3351 = vmatprep.subr.mxu0 0.0
    %3352 = vmatpush2.msra.mxu0 0.0
    %3353 = vmatprep.subr.mxu0 0.0
    %3354 = vmatpush2.msra.mxu0 0.0
    %3355 = vmatprep.subr.mxu0 0.0
    %3356 = vmatpush2.msra.mxu0 0.0
    %3357 = vmatprep.subr.mxu0 0.0
    %3358 = vmatpush2.msra.mxu0 0.0
    %3359 = vmatprep.subr.mxu0 0.0
    %3360 = vmatpush2.msra.mxu0 0.0
    %3361 = vmatprep.subr.mxu0 0.0
    %3362 = vmatpush2.msra.mxu0 0.0
    %3363 = vmatprep.subr.mxu0 0.0
    %3364 = vmatpush2.msra.mxu0 0.0
    %3365 = vmatprep.subr.mxu0 0.0
    %3366 = vmatpush2.msra.mxu0 0.0
    %3367 = vmatprep.subr.mxu0 0.0
    %3368 = vmatpush2.msra.mxu0 0.0
    %3369 = vmatprep.subr.mxu0 0.0
    %3370 = vmatpush2.msra.mxu0 0.0
    %3371 = vmatprep.subr.mxu0 0.0
    %3372 = vmatpush2.msra.mxu0 0.0
    %3373 = vmatprep.subr.mxu0 0.0
    %3374 = vmatpush2.msra.mxu0 0.0
    %3375 = vmatprep.subr.mxu0 0.0
    %3376 = vmatpush2.msra.mxu0 0.0
    %3377 = vmatprep.subr.mxu0 0.0
    %3378 = vmatpush2.msra.mxu0 0.0
    %3379 = vmatprep.subr.mxu0 0.0
    %3380 = vmatpush2.msra.mxu0 0.0
    %3381 = vmatprep.mubr.f32.mxu0 0.0
    %v3382 = vand.u32 %v1424, 4294901760
    %3383 = vmatmul.mubr.f32.gmra.mxu0 %v3382
    %v3384 = vpop.f32.mrf.mxu0
    %v3385 = vadd.f32 %v3309, %v3384
    %v3386 = vpop.f32.mrf.mxu0
    %3387 = vdwg.mxu0
    %3388 = vmatprep.subr.mxu0 0.0
    %3389 = vmatpush1.msra.mxu0 0.0
    %3390 = vmatprep.subr.mxu0 0.0
    %3391 = vmatpush1.msra.mxu0 0.0
    %3392 = vmatprep.subr.mxu0 0.0
    %3393 = vmatpush1.msra.mxu0 0.0
    %3394 = vmatprep.subr.mxu0 0.0
    %3395 = vmatpush1.msra.mxu0 0.0
    %3396 = vmatprep.subr.mxu0 0.0
    %3397 = vmatpush1.msra.mxu0 0.0
    %3398 = vmatprep.subr.mxu0 0.0
    %3399 = vmatpush1.msra.mxu0 0.0
    %3400 = vmatprep.subr.mxu0 0.0
    %3401 = vmatpush1.msra.mxu0 0.0
    %3402 = vmatprep.subr.mxu0 0.0
    %3403 = vmatpush1.msra.mxu0 0.0
    %3404 = vmatprep.subr.mxu0 0.0
    %3405 = vmatpush1.msra.mxu0 0.0
    %3406 = vmatprep.subr.mxu0 0.0
    %3407 = vmatpush1.msra.mxu0 0.0
    %3408 = vmatprep.subr.mxu0 0.0
    %3409 = vmatpush1.msra.mxu0 0.0
    %3410 = vmatprep.subr.mxu0 0.0
    %3411 = vmatpush1.msra.mxu0 0.0
    %3412 = vmatprep.subr.mxu0 0.0
    %3413 = vmatpush1.msra.mxu0 0.0
    %3414 = vmatprep.subr.mxu0 0.0
    %3415 = vmatpush1.msra.mxu0 0.0
    %3416 = vmatprep.subr.mxu0 0.0
    %3417 = vmatpush1.msra.mxu0 0.0
    %3418 = vmatprep.subr.mxu0 0.0
    %v3419 = vand.u32 %v1876, 4294901760
    %v3420 = vsub.f32 %v1876, %v3419
    %3421 = vmatpush1.msra.mxu0 %v3420
    %3422 = vmatprep.subr.mxu0 0.0
    %3423 = vmatpush2.msra.mxu0 0.0
    %3424 = vmatprep.subr.mxu0 0.0
    %3425 = vmatpush2.msra.mxu0 0.0
    %3426 = vmatprep.subr.mxu0 0.0
    %3427 = vmatpush2.msra.mxu0 0.0
    %3428 = vmatprep.subr.mxu0 0.0
    %3429 = vmatpush2.msra.mxu0 0.0
    %3430 = vmatprep.subr.mxu0 0.0
    %3431 = vmatpush2.msra.mxu0 0.0
    %3432 = vmatprep.subr.mxu0 0.0
    %3433 = vmatpush2.msra.mxu0 0.0
    %3434 = vmatprep.subr.mxu0 0.0
    %3435 = vmatpush2.msra.mxu0 0.0
    %3436 = vmatprep.subr.mxu0 0.0
    %3437 = vmatpush2.msra.mxu0 0.0
    %3438 = vmatprep.subr.mxu0 0.0
    %3439 = vmatpush2.msra.mxu0 0.0
    %3440 = vmatprep.subr.mxu0 0.0
    %3441 = vmatpush2.msra.mxu0 0.0
    %3442 = vmatprep.subr.mxu0 0.0
    %3443 = vmatpush2.msra.mxu0 0.0
    %3444 = vmatprep.subr.mxu0 0.0
    %3445 = vmatpush2.msra.mxu0 0.0
    %3446 = vmatprep.subr.mxu0 0.0
    %3447 = vmatpush2.msra.mxu0 0.0
    %3448 = vmatprep.subr.mxu0 0.0
    %3449 = vmatpush2.msra.mxu0 0.0
    %3450 = vmatprep.subr.mxu0 0.0
    %3451 = vmatpush2.msra.mxu0 0.0
    %3452 = vmatprep.subr.mxu0 0.0
    %3453 = vmatpush2.msra.mxu0 0.0
    %3454 = vmatprep.mubr.f32.mxu0 0.0
    %v3455 = vand.u32 %v1424, 4294901760
    %v3456 = vsub.f32 %v1424, %v3455
    %3457 = vmatmul.mubr.f32.gmra.mxu0 %v3456
    %v3458 = vpop.f32.mrf.mxu0
    %v3459 = vadd.f32 %v3385, %v3458
    %v3460 = vpop.f32.mrf.mxu0
    %3461 = vdwg.mxu0
    %3462 = vmatprep.subr.mxu0 0.0
    %3463 = vmatpush1.msra.mxu0 0.0
    %3464 = vmatprep.subr.mxu0 0.0
    %3465 = vmatpush1.msra.mxu0 0.0
    %3466 = vmatprep.subr.mxu0 0.0
    %3467 = vmatpush1.msra.mxu0 0.0
    %3468 = vmatprep.subr.mxu0 0.0
    %3469 = vmatpush1.msra.mxu0 0.0
    %3470 = vmatprep.subr.mxu0 0.0
    %3471 = vmatpush1.msra.mxu0 0.0
    %3472 = vmatprep.subr.mxu0 0.0
    %3473 = vmatpush1.msra.mxu0 0.0
    %3474 = vmatprep.subr.mxu0 0.0
    %3475 = vmatpush1.msra.mxu0 0.0
    %3476 = vmatprep.subr.mxu0 0.0
    %3477 = vmatpush1.msra.mxu0 0.0
    %3478 = vmatprep.subr.mxu0 0.0
    %3479 = vmatpush1.msra.mxu0 0.0
    %3480 = vmatprep.subr.mxu0 0.0
    %3481 = vmatpush1.msra.mxu0 0.0
    %3482 = vmatprep.subr.mxu0 0.0
    %3483 = vmatpush1.msra.mxu0 0.0
    %3484 = vmatprep.subr.mxu0 0.0
    %3485 = vmatpush1.msra.mxu0 0.0
    %3486 = vmatprep.subr.mxu0 0.0
    %3487 = vmatpush1.msra.mxu0 0.0
    %3488 = vmatprep.subr.mxu0 0.0
    %3489 = vmatpush1.msra.mxu0 0.0
    %3490 = vmatprep.subr.mxu0 0.0
    %3491 = vmatpush1.msra.mxu0 0.0
    %3492 = vmatprep.subr.mxu0 0.0
    %v3493 = vand.u32 %v1876, 4294901760
    %3494 = vmatpush1.msra.mxu0 %v3493
    %3495 = vmatprep.subr.mxu0 0.0
    %3496 = vmatpush2.msra.mxu0 0.0
    %3497 = vmatprep.subr.mxu0 0.0
    %3498 = vmatpush2.msra.mxu0 0.0
    %3499 = vmatprep.subr.mxu0 0.0
    %3500 = vmatpush2.msra.mxu0 0.0
    %3501 = vmatprep.subr.mxu0 0.0
    %3502 = vmatpush2.msra.mxu0 0.0
    %3503 = vmatprep.subr.mxu0 0.0
    %3504 = vmatpush2.msra.mxu0 0.0
    %3505 = vmatprep.subr.mxu0 0.0
    %3506 = vmatpush2.msra.mxu0 0.0
    %3507 = vmatprep.subr.mxu0 0.0
    %3508 = vmatpush2.msra.mxu0 0.0
    %3509 = vmatprep.subr.mxu0 0.0
    %3510 = vmatpush2.msra.mxu0 0.0
    %3511 = vmatprep.subr.mxu0 0.0
    %3512 = vmatpush2.msra.mxu0 0.0
    %3513 = vmatprep.subr.mxu0 0.0
    %3514 = vmatpush2.msra.mxu0 0.0
    %3515 = vmatprep.subr.mxu0 0.0
    %3516 = vmatpush2.msra.mxu0 0.0
    %3517 = vmatprep.subr.mxu0 0.0
    %3518 = vmatpush2.msra.mxu0 0.0
    %3519 = vmatprep.subr.mxu0 0.0
    %3520 = vmatpush2.msra.mxu0 0.0
    %3521 = vmatprep.subr.mxu0 0.0
    %3522 = vmatpush2.msra.mxu0 0.0
    %3523 = vmatprep.subr.mxu0 0.0
    %3524 = vmatpush2.msra.mxu0 0.0
    %3525 = vmatprep.subr.mxu0 0.0
    %3526 = vmatpush2.msra.mxu0 0.0
    %3527 = vmatprep.mubr.f32.mxu0 0.0
    %v3528 = vand.u32 %v1424, 4294901760
    %v3529 = vsub.f32 %v1424, %v3528
    %v3530 = vand.u32 %v3529, 4294901760
    %3531 = vmatmul.mubr.f32.gmra.mxu0 %v3530
    %v3532 = vpop.f32.mrf.mxu0
    %v3533 = vadd.f32 %v3459, %v3532
    %v3534 = vpop.f32.mrf.mxu0
    %3535 = vdwg.mxu0
    %3536 = vmatprep.subr.mxu0 0.0
    %3537 = vmatpush1.msra.mxu0 0.0
    %3538 = vmatprep.subr.mxu0 0.0
    %3539 = vmatpush1.msra.mxu0 0.0
    %3540 = vmatprep.subr.mxu0 0.0
    %3541 = vmatpush1.msra.mxu0 0.0
    %3542 = vmatprep.subr.mxu0 0.0
    %3543 = vmatpush1.msra.mxu0 0.0
    %3544 = vmatprep.subr.mxu0 0.0
    %3545 = vmatpush1.msra.mxu0 0.0
    %3546 = vmatprep.subr.mxu0 0.0
    %3547 = vmatpush1.msra.mxu0 0.0
    %3548 = vmatprep.subr.mxu0 0.0
    %3549 = vmatpush1.msra.mxu0 0.0
    %3550 = vmatprep.subr.mxu0 0.0
    %3551 = vmatpush1.msra.mxu0 0.0
    %3552 = vmatprep.subr.mxu0 0.0
    %3553 = vmatpush1.msra.mxu0 0.0
    %3554 = vmatprep.subr.mxu0 0.0
    %3555 = vmatpush1.msra.mxu0 0.0
    %3556 = vmatprep.subr.mxu0 0.0
    %3557 = vmatpush1.msra.mxu0 0.0
    %3558 = vmatprep.subr.mxu0 0.0
    %3559 = vmatpush1.msra.mxu0 0.0
    %3560 = vmatprep.subr.mxu0 0.0
    %3561 = vmatpush1.msra.mxu0 0.0
    %3562 = vmatprep.subr.mxu0 0.0
    %3563 = vmatpush1.msra.mxu0 0.0
    %3564 = vmatprep.subr.mxu0 0.0
    %3565 = vmatpush1.msra.mxu0 0.0
    %3566 = vmatprep.subr.mxu0 0.0
    %v3567 = vand.u32 %v1876, 4294901760
    %v3568 = vsub.f32 %v1876, %v3567
    %v3569 = vand.u32 %v3568, 4294901760
    %3570 = vmatpush1.msra.mxu0 %v3569
    %3571 = vmatprep.subr.mxu0 0.0
    %3572 = vmatpush2.msra.mxu0 0.0
    %3573 = vmatprep.subr.mxu0 0.0
    %3574 = vmatpush2.msra.mxu0 0.0
    %3575 = vmatprep.subr.mxu0 0.0
    %3576 = vmatpush2.msra.mxu0 0.0
    %3577 = vmatprep.subr.mxu0 0.0
    %3578 = vmatpush2.msra.mxu0 0.0
    %3579 = vmatprep.subr.mxu0 0.0
    %3580 = vmatpush2.msra.mxu0 0.0
    %3581 = vmatprep.subr.mxu0 0.0
    %3582 = vmatpush2.msra.mxu0 0.0
    %3583 = vmatprep.subr.mxu0 0.0
    %3584 = vmatpush2.msra.mxu0 0.0
    %3585 = vmatprep.subr.mxu0 0.0
    %3586 = vmatpush2.msra.mxu0 0.0
    %3587 = vmatprep.subr.mxu0 0.0
    %3588 = vmatpush2.msra.mxu0 0.0
    %3589 = vmatprep.subr.mxu0 0.0
    %3590 = vmatpush2.msra.mxu0 0.0
    %3591 = vmatprep.subr.mxu0 0.0
    %3592 = vmatpush2.msra.mxu0 0.0
    %3593 = vmatprep.subr.mxu0 0.0
    %3594 = vmatpush2.msra.mxu0 0.0
    %3595 = vmatprep.subr.mxu0 0.0
    %3596 = vmatpush2.msra.mxu0 0.0
    %3597 = vmatprep.subr.mxu0 0.0
    %3598 = vmatpush2.msra.mxu0 0.0
    %3599 = vmatprep.subr.mxu0 0.0
    %3600 = vmatpush2.msra.mxu0 0.0
    %3601 = vmatprep.subr.mxu0 0.0
    %3602 = vmatpush2.msra.mxu0 0.0
    %3603 = vmatprep.mubr.f32.mxu0 0.0
    %v3604 = vand.u32 %v1424, 4294901760
    %3605 = vmatmul.mubr.f32.gmra.mxu0 %v3604
    %v3606 = vpop.f32.mrf.mxu0
    %v3607 = vadd.f32 %v3533, %v3606
    %v3608 = vpop.f32.mrf.mxu0
    %3609 = vdwg.mxu0
    %3610 = vmatprep.subr.mxu0 0.0
    %3611 = vmatpush1.msra.mxu0 0.0
    %3612 = vmatprep.subr.mxu0 0.0
    %3613 = vmatpush1.msra.mxu0 0.0
    %3614 = vmatprep.subr.mxu0 0.0
    %3615 = vmatpush1.msra.mxu0 0.0
    %3616 = vmatprep.subr.mxu0 0.0
    %3617 = vmatpush1.msra.mxu0 0.0
    %3618 = vmatprep.subr.mxu0 0.0
    %3619 = vmatpush1.msra.mxu0 0.0
    %3620 = vmatprep.subr.mxu0 0.0
    %3621 = vmatpush1.msra.mxu0 0.0
    %3622 = vmatprep.subr.mxu0 0.0
    %3623 = vmatpush1.msra.mxu0 0.0
    %3624 = vmatprep.subr.mxu0 0.0
    %3625 = vmatpush1.msra.mxu0 0.0
    %3626 = vmatprep.subr.mxu0 0.0
    %3627 = vmatpush1.msra.mxu0 0.0
    %3628 = vmatprep.subr.mxu0 0.0
    %3629 = vmatpush1.msra.mxu0 0.0
    %3630 = vmatprep.subr.mxu0 0.0
    %3631 = vmatpush1.msra.mxu0 0.0
    %3632 = vmatprep.subr.mxu0 0.0
    %3633 = vmatpush1.msra.mxu0 0.0
    %3634 = vmatprep.subr.mxu0 0.0
    %3635 = vmatpush1.msra.mxu0 0.0
    %3636 = vmatprep.subr.mxu0 0.0
    %3637 = vmatpush1.msra.mxu0 0.0
    %3638 = vmatprep.subr.mxu0 0.0
    %3639 = vmatpush1.msra.mxu0 0.0
    %3640 = vmatprep.subr.mxu0 0.0
    %v3641 = vand.u32 %v1876, 4294901760
    %3642 = vmatpush1.msra.mxu0 %v3641
    %3643 = vmatprep.subr.mxu0 0.0
    %3644 = vmatpush2.msra.mxu0 0.0
    %3645 = vmatprep.subr.mxu0 0.0
    %3646 = vmatpush2.msra.mxu0 0.0
    %3647 = vmatprep.subr.mxu0 0.0
    %3648 = vmatpush2.msra.mxu0 0.0
    %3649 = vmatprep.subr.mxu0 0.0
    %3650 = vmatpush2.msra.mxu0 0.0
    %3651 = vmatprep.subr.mxu0 0.0
    %3652 = vmatpush2.msra.mxu0 0.0
    %3653 = vmatprep.subr.mxu0 0.0
    %3654 = vmatpush2.msra.mxu0 0.0
    %3655 = vmatprep.subr.mxu0 0.0
    %3656 = vmatpush2.msra.mxu0 0.0
    %3657 = vmatprep.subr.mxu0 0.0
    %3658 = vmatpush2.msra.mxu0 0.0
    %3659 = vmatprep.subr.mxu0 0.0
    %3660 = vmatpush2.msra.mxu0 0.0
    %3661 = vmatprep.subr.mxu0 0.0
    %3662 = vmatpush2.msra.mxu0 0.0
    %3663 = vmatprep.subr.mxu0 0.0
    %3664 = vmatpush2.msra.mxu0 0.0
    %3665 = vmatprep.subr.mxu0 0.0
    %3666 = vmatpush2.msra.mxu0 0.0
    %3667 = vmatprep.subr.mxu0 0.0
    %3668 = vmatpush2.msra.mxu0 0.0
    %3669 = vmatprep.subr.mxu0 0.0
    %3670 = vmatpush2.msra.mxu0 0.0
    %3671 = vmatprep.subr.mxu0 0.0
    %3672 = vmatpush2.msra.mxu0 0.0
    %3673 = vmatprep.subr.mxu0 0.0
    %3674 = vmatpush2.msra.mxu0 0.0
    %3675 = vmatprep.mubr.f32.mxu0 0.0
    %v3676 = vand.u32 %v1424, 4294901760
    %3677 = vmatmul.mubr.f32.gmra.mxu0 %v3676
    %v3678 = vpop.f32.mrf.mxu0
    %v3679 = vadd.f32 %v3607, %v3678
    %v3680 = vpop.f32.mrf.mxu0
    %3681 = vdwg.mxu0
    %v3682 = vadd.f32 %v3679, %v971
    %s3683 = scalar_lea.vmem [#allocation5], 8
    %3684 = vst [vmem:[%s3683] sm:$0xff] %v2789
    %s3685 = scalar_lea.vmem [#allocation6], 8
    %3686 = vst [vmem:[%s3685] sm:$0xff] %v3682
    // Predicated region
    $region26: #{tpu_custom_call.1} parent=1 // pred_check
      _
    $region27: #{tpu_custom_call.1} parent=1 // pred_check_branch
      %3688 = sbr.rel (0) target = $region29
    $region28: #{tpu_custom_call.1} parent=1 // pred_region
      %s3690 = ssub.s32 256, 256
      %3691 = vsyncadd [#allocation4], %s3690
      %s3692 = sshll.u32 [#allocation5], 4
      %s3693 = int_to_ptr.vmem [resolvable:$true] %s3692
      %3698 = dma.vmem_to_hbm [thread:$0]  %s3693, 256, %s5, [#allocation4], 128, 128, 8
    $region29: #{tpu_custom_call.1} parent=1 // pred_fallthru
      _
    // Predicated region
    $region30: #{tpu_custom_call.1} parent=1 // pred_check
      _
    $region31: #{tpu_custom_call.1} parent=1 // pred_check_branch
      %3700 = sbr.rel (0) target = $region33
    $region32: #{tpu_custom_call.1} parent=1 // pred_region
      %s3702 = ssub.s32 256, 256
      %3703 = vsyncadd [#allocation7], %s3702
      %s3704 = sshll.u32 [#allocation6], 4
      %s3705 = int_to_ptr.vmem [resolvable:$true] %s3704
      %3710 = dma.vmem_to_hbm [thread:$0]  %s3705, 256, %s6, [#allocation7], 128, 128, 8
    $region33: #{tpu_custom_call.1} parent=1 // pred_fallthru
      _
    // Predicated region
    $region34: #{tpu_custom_call.1} parent=1 // pred_check
      _
    $region35: #{tpu_custom_call.1} parent=1 // pred_check_branch
      %3712 = sbr.rel (0) target = $region37
    $region36: #{tpu_custom_call.1} parent=1 // pred_region
      %3713 = dma.done [#allocation4], 256
    $region37: #{tpu_custom_call.1} parent=1 // pred_fallthru
      _
    // Predicated region
    $region38: #{tpu_custom_call.1} parent=1 // pred_check
      _
    $region39: #{tpu_custom_call.1} parent=1 // pred_check_branch
      %3715 = sbr.rel (0) target = $region41
    $region40: #{tpu_custom_call.1} parent=1 // pred_region
      %3716 = dma.done [#allocation7], 256
    $region41: #{tpu_custom_call.1} parent=1 // pred_fallthru
      _
    %3717 = vsyncpa [#allocation3], 1
    %3718 = vsyncpa [#allocation4], 1
    %3719 = vsyncpa [#allocation7], 1

</llo_original>
